<compile_context>
chip_gen: v7x
topology: tpu7x:2x2x1
jax: 0.10.0
libtpu: 0.0.40
codegen_flags: <defaults>
</compile_context>

<pallas_src>
import jax
import jax.numpy as jnp
from jax import lax
from jax.experimental import pallas as pl
from jax.experimental.pallas import tpu as pltpu


def basic_block_kernel(x_ref, w1_ref, w2_ref, s1_ref, b1_ref, s2_ref, b2_ref,
                       o_ref, xs_ref, ms_ref):
    """Fused conv3x3 -> bn -> relu -> conv3x3 -> bn -> +identity -> relu.

    x_ref : (H, W, C)      bf16 input tile (one batch element, unpadded)
    w1_ref: (3, 3*C, C)    bf16 conv1 weights, laid out as [kh, kw*C + c, d]
    w2_ref: (3, 3*C, C)    bf16 conv2 weights, laid out as [kh, kw*C + d, e]
    s*_ref: (1, C)         f32 folded BN scale
    b*_ref: (1, C)         f32 folded BN bias
    o_ref : (H, W, C)      bf16 output tile
    xs_ref: (H+2, W, 3*C)  bf16 scratch: kw-stacked, row-padded input
    ms_ref: (H+2, W, 3*C)  bf16 scratch: kw-stacked, row-padded conv1 act.
    """
    H, W, C = x_ref.shape
    K = 3 * C
    f32 = jnp.float32

    # Row-block size: target an MXU-friendly number of LHS rows per matmul
    # (M = BH*W >= ~256 when possible), bounded so one per-tap LHS tile
    # (M x 3C bf16) stays around <= 96 KiB of vector registers.
    target_m = max(128, min(512, (96 * 1024) // (3 * C * 2)))
    BH = max(1, min(H, -(-target_m // W)))
    nblk = -(-H // BH)                      # ceil(H / BH)

    # Zero only the halo rows (0 and H+1) of both stacked scratches, every grid
    # step (scratch is per-core under megacore partitioning; interior rows are
    # fully rewritten below). Column halos come from the staging stores.
    zrow = jnp.zeros((1, W, K), xs_ref.dtype)
    xs_ref[0:1] = zrow
    xs_ref[H + 1:H + 2] = zrow
    ms_ref[0:1] = zrow
    ms_ref[H + 1:H + 2] = zrow

    s1 = s1_ref[...]
    b1 = b1_ref[...]
    s2 = s2_ref[...]
    b2 = b2_ref[...]

    def block_start(b):
        # Clamp the last block so every block has static size BH; overlapping
        # rows near the end are recomputed idempotently when H % BH != 0.
        return jnp.minimum(b * BH, H - BH)

    def stage_rows(dst_ref, src, row0):
        """dst[1+h, w, kw*C + c] = column-zero-padded(src)[1+h, w + kw, c]."""
        s = src.astype(dst_ref.dtype)                           # (BH, W, C)
        zc = jnp.zeros((BH, 1, C), dst_ref.dtype)
        left = jnp.concatenate([zc, s[:, 0:W - 1, :]], axis=1)  # kw = 0
        right = jnp.concatenate([s[:, 1:W, :], zc], axis=1)     # kw = 2
        rows = pl.ds(row0 + 1, BH)
        if C >= 128:
            # Lane-aligned per-tap stores: no (BH, W, 3C) temp materialized.
            dst_ref[rows, :, 0:C] = left
            dst_ref[rows, :, C:2 * C] = s
            dst_ref[rows, :, 2 * C:3 * C] = right
        else:
            # For C < 128 per-tap stores would be lane-masked; one wide store.
            dst_ref[rows] = jnp.concatenate([left, s, right], axis=-1)

    def conv_rows(src_ref, w_ref, row0):
        """3x3 conv for output rows [row0, row0+BH): 3 matmuls with K = 3*C.

        Each tap's LHS is read directly from the VMEM scratch ref (no fused
        (BH+2, W, 3C) value) to keep vreg pressure low at large BH."""
        z = jnp.dot(src_ref[pl.ds(row0, BH)].reshape(BH * W, K), w_ref[0],
                    preferred_element_type=f32)
        z = z + jnp.dot(src_ref[pl.ds(row0 + 1, BH)].reshape(BH * W, K),
                        w_ref[1], preferred_element_type=f32)
        z = z + jnp.dot(src_ref[pl.ds(row0 + 2, BH)].reshape(BH * W, K),
                        w_ref[2], preferred_element_type=f32)
        return z                                                # (BH*W, C) f32

    # Skewed software pipeline over row blocks: iteration t does
    #   stage(x block t) ; conv1+stage(block t-1) ; conv2+store(block t-2)
    # (conv1 of block b needs only the first row of block b+1 as halo, which is
    # staged earlier in the same iteration; likewise conv2 vs conv1.)
    def pipe_step(t, carry):
        @pl.when(t < nblk)
        def _():
            row0 = block_start(t)
            stage_rows(xs_ref, x_ref[pl.ds(row0, BH)], row0)

        @pl.when(jnp.logical_and(t >= 1, t <= nblk))
        def _():
            row0 = block_start(t - 1)
            z = conv_rows(xs_ref, w1_ref, row0)
            a = jnp.maximum(z * s1 + b1, 0.0)                   # (BH*W, C) f32
            stage_rows(ms_ref, a.reshape(BH, W, C), row0)

        @pl.when(t >= 2)
        def _():
            row0 = block_start(t - 2)
            z = conv_rows(ms_ref, w2_ref, row0)
            identity = x_ref[pl.ds(row0, BH)].astype(f32).reshape(BH * W, C)
            res = jnp.maximum(z * s2 + b2 + identity, 0.0)
            o_ref[pl.ds(row0, BH)] = res.reshape(BH, W, C).astype(o_ref.dtype)

        return carry

    lax.fori_loop(0, nblk + 2, pipe_step, 0)


def basic_block_pallas(x_nchw, w1, w2, s1, b1, s2, b2):
    """x_nchw: (N, C, H, W) f32; w*: (3, 3, C, C) HWIO; s*/b*: (C,) folded BN.

    Returns (N, C, H, W) float32.
    """
    N, C, H, W = x_nchw.shape
    assert w1.shape == (3, 3, C, C) and w2.shape == (3, 3, C, C), (
        "BasicBlock with stride=1 / downsample=None requires planes == inplanes")

    # NCHW -> NHWC (channels-last => channels on the TPU lane axis), bf16.
    x = jnp.transpose(x_nchw, (0, 2, 3, 1)).astype(jnp.bfloat16)

    # Fold the kw tap into the contraction axis: w[kh, kw*C + c, d].
    w1s = w1.reshape(3, 3 * C, C).astype(jnp.bfloat16)
    w2s = w2.reshape(3, 3 * C, C).astype(jnp.bfloat16)

    s1_ = s1.reshape(1, C).astype(jnp.float32)
    b1_ = b1.reshape(1, C).astype(jnp.float32)
    s2_ = s2.reshape(1, C).astype(jnp.float32)
    b2_ = b2.reshape(1, C).astype(jnp.float32)

    # VMEM budget derived from the real footprint (double-buffered I/O and
    # weight blocks + the two kw-stacked scratches), with headroom, clamped so
    # it also fits v7x's 64 MiB physical VMEM.
    def rup(v, m):
        return -(-v // m) * m
    c_pad = rup(C, 128)
    k_pad = rup(3 * C, 128)
    io_bytes = 2 * 2 * (H * W * c_pad * 2)          # x + out blocks, 2 buffers
    w_bytes = 2 * 2 * (3 * (3 * C) * c_pad * 2)     # w1 + w2, 2 buffers each
    scratch_bytes = 2 * ((H + 2) * W * k_pad * 2)   # xs + ms
    footprint = io_bytes + w_bytes + scratch_bytes
    vmem_limit = int(min(max(2 * footprint, 32 * 1024 * 1024), 48 * 1024 * 1024))

    out = pl.pallas_call(
        basic_block_kernel,
        out_shape=jax.ShapeDtypeStruct((N, H, W, C), jnp.bfloat16),
        grid_spec=pltpu.PrefetchScalarGridSpec(
            num_scalar_prefetch=0,
            grid=(N,),
            in_specs=[
                pl.BlockSpec((None, H, W, C), lambda n: (n, 0, 0, 0)),
                pl.BlockSpec((3, 3 * C, C), lambda n: (0, 0, 0)),
                pl.BlockSpec((3, 3 * C, C), lambda n: (0, 0, 0)),
                pl.BlockSpec((1, C), lambda n: (0, 0)),
                pl.BlockSpec((1, C), lambda n: (0, 0)),
                pl.BlockSpec((1, C), lambda n: (0, 0)),
                pl.BlockSpec((1, C), lambda n: (0, 0)),
            ],
            out_specs=pl.BlockSpec((None, H, W, C), lambda n: (n, 0, 0, 0)),
            scratch_shapes=[
                pltpu.VMEM((H + 2, W, 3 * C), jnp.bfloat16),  # kw-stacked input
                pltpu.VMEM((H + 2, W, 3 * C), jnp.bfloat16),  # kw-stacked conv1 act
            ],
        ),
        compiler_params=pltpu.CompilerParams(
            dimension_semantics=("parallel",),
            vmem_limit_bytes=vmem_limit,
        ),
    )(x, w1s, w2s, s1_, b1_, s2_, b2_)

    # bf16 kernel output -> module's f32 NCHW output.
    return jnp.transpose(out, (0, 3, 1, 2)).astype(jnp.float32)


def _reference_basic_block(x_nchw, w1, w2, s1, b1, s2, b2):
    """Pure-JAX f32 reference (NHWC convs via lax.conv_general_dilated)."""
    x = jnp.transpose(x_nchw, (0, 2, 3, 1))
    dn = lax.conv_dimension_numbers(x.shape, w1.shape, ("NHWC", "HWIO", "NHWC"))
    out = lax.conv_general_dilated(x, w1, (1, 1), ((1, 1), (1, 1)),
                                   dimension_numbers=dn)
    out = jnp.maximum(out * s1 + b1, 0.0)
    out = lax.conv_general_dilated(out, w2, (1, 1), ((1, 1), (1, 1)),
                                   dimension_numbers=dn)
    out = jnp.maximum(out * s2 + b2 + x, 0.0)
    return jnp.transpose(out, (0, 3, 1, 2))


if __name__ == "__main__":
    # Small but representative: batch=2, inplanes=planes=64 (first BasicBlock
    # stage of ResNet), spatial 16x16, stride=1.
    N, C, H, W = 2, 64, 16, 16
    planes = C
    eps = 1e-5

    key = jax.random.PRNGKey(0)
    keys = jax.random.split(key, 11)

    x = jax.random.normal(keys[0], (N, C, H, W), jnp.float32)

    # Conv weights (kh, kw, Cin, Cout), bias=False.
    w1 = 0.1 * jax.random.normal(keys[1], (3, 3, C, planes), jnp.float32)
    w2 = 0.1 * jax.random.normal(keys[2], (3, 3, planes, planes), jnp.float32)

    # BatchNorm parameters (inference mode), folded into scale/bias.
    gamma1 = 0.5 + jax.random.uniform(keys[3], (planes,), jnp.float32)
    beta1 = 0.1 * jax.random.normal(keys[4], (planes,), jnp.float32)
    mean1 = 0.1 * jax.random.normal(keys[5], (planes,), jnp.float32)
    var1 = 0.5 + jax.random.uniform(keys[6], (planes,), jnp.float32)
    gamma2 = 0.5 + jax.random.uniform(keys[7], (planes,), jnp.float32)
    beta2 = 0.1 * jax.random.normal(keys[8], (planes,), jnp.float32)
    mean2 = 0.1 * jax.random.normal(keys[9], (planes,), jnp.float32)
    var2 = 0.5 + jax.random.uniform(keys[10], (planes,), jnp.float32)

    s1 = gamma1 / jnp.sqrt(var1 + eps)
    b1 = beta1 - mean1 * s1
    s2 = gamma2 / jnp.sqrt(var2 + eps)
    b2 = beta2 - mean2 * s2

    fwd = jax.jit(basic_block_pallas)
    out = jax.block_until_ready(fwd(x, w1, w2, s1, b1, s2, b2))

    ref = _reference_basic_block(x, w1, w2, s1, b1, s2, b2)
    assert out.shape == (N, C, H, W)
    err = float(jnp.max(jnp.abs(out - ref)))
    scale = float(jnp.max(jnp.abs(ref)))
    # bf16 matmul operands / bf16 output with f32 accumulation -> relative check.
    assert err < 5e-2 * scale + 1e-2, (
        f"mismatch vs pure-JAX reference: max_abs_err={err:.5f}, max_ref={scale:.5f}")

    print("KERNEL_OK")
</pallas_src>

<mosaic_0001>
module attributes {stable_mosaic.version = 11 : i64} {
  func.func @basic_block_kernel(%arg0: i32, %arg1: memref<1x16x16x64xbf16, #tpu.memory_space<vmem>>, %arg2: memref<3x192x64xbf16, #tpu.memory_space<vmem>>, %arg3: memref<3x192x64xbf16, #tpu.memory_space<vmem>>, %arg4: memref<1x64xf32, #tpu.memory_space<vmem>>, %arg5: memref<1x64xf32, #tpu.memory_space<vmem>>, %arg6: memref<1x64xf32, #tpu.memory_space<vmem>>, %arg7: memref<1x64xf32, #tpu.memory_space<vmem>>, %arg8: memref<1x16x16x64xbf16, #tpu.memory_space<vmem>>, %arg9: memref<18x16x192xbf16, #tpu.memory_space<vmem>>, %arg10: memref<18x16x192xbf16, #tpu.memory_space<vmem>>) attributes {dimension_semantics = [#tpu.dimension_semantics<parallel>], iteration_bounds = array<i64: 2>, scalar_prefetch = 0 : i64, scratch_operands = 2 : i64, tpu.core_type = #tpu.core_type<tc>, window_params = [{transform_indices = @transform_0, window_bounds = array<i64: 1, 16, 16, 64>}, {pipeline_mode = #tpu.pipeline_mode<synchronous>, transform_indices = @transform_1, window_bounds = array<i64: 3, 192, 64>}, {pipeline_mode = #tpu.pipeline_mode<synchronous>, transform_indices = @transform_2, window_bounds = array<i64: 3, 192, 64>}, {pipeline_mode = #tpu.pipeline_mode<synchronous>, transform_indices = @transform_3, window_bounds = array<i64: 1, 64>}, {pipeline_mode = #tpu.pipeline_mode<synchronous>, transform_indices = @transform_4, window_bounds = array<i64: 1, 64>}, {pipeline_mode = #tpu.pipeline_mode<synchronous>, transform_indices = @transform_5, window_bounds = array<i64: 1, 64>}, {pipeline_mode = #tpu.pipeline_mode<synchronous>, transform_indices = @transform_6, window_bounds = array<i64: 1, 64>}, {transform_indices = @transform_7, window_bounds = array<i64: 1, 16, 16, 64>}]} {
    %cst = arith.constant 0.000000e+00 : bf16
    %0 = vector.broadcast %cst : bf16 to vector<1x16x192xbf16>
    %c0 = arith.constant 0 : index
    %c0_0 = arith.constant 0 : index
    %c0_1 = arith.constant 0 : index
    %1 = vector.load %arg9[%c0, %c0_0, %c0_1] : memref<18x16x192xbf16, #tpu.memory_space<vmem>>, vector<1x16x192xbf16>
    tpu.vector_store %arg9[%c0, %c0_0, %c0_1], %0 {strides = array<i32>} : memref<18x16x192xbf16, #tpu.memory_space<vmem>>, vector<1x16x192xbf16>,
    %c17 = arith.constant 17 : index
    %c0_2 = arith.constant 0 : index
    %c0_3 = arith.constant 0 : index
    %2 = vector.load %arg9[%c17, %c0_2, %c0_3] : memref<18x16x192xbf16, #tpu.memory_space<vmem>>, vector<1x16x192xbf16>
    tpu.vector_store %arg9[%c17, %c0_2, %c0_3], %0 {strides = array<i32>} : memref<18x16x192xbf16, #tpu.memory_space<vmem>>, vector<1x16x192xbf16>,
    %c0_4 = arith.constant 0 : index
    %c0_5 = arith.constant 0 : index
    %c0_6 = arith.constant 0 : index
    %3 = vector.load %arg10[%c0_4, %c0_5, %c0_6] : memref<18x16x192xbf16, #tpu.memory_space<vmem>>, vector<1x16x192xbf16>
    tpu.vector_store %arg10[%c0_4, %c0_5, %c0_6], %0 {strides = array<i32>} : memref<18x16x192xbf16, #tpu.memory_space<vmem>>, vector<1x16x192xbf16>,
    %c17_7 = arith.constant 17 : index
    %c0_8 = arith.constant 0 : index
    %c0_9 = arith.constant 0 : index
    %4 = vector.load %arg10[%c17_7, %c0_8, %c0_9] : memref<18x16x192xbf16, #tpu.memory_space<vmem>>, vector<1x16x192xbf16>
    tpu.vector_store %arg10[%c17_7, %c0_8, %c0_9], %0 {strides = array<i32>} : memref<18x16x192xbf16, #tpu.memory_space<vmem>>, vector<1x16x192xbf16>,
    %c0_10 = arith.constant 0 : index
    %c0_11 = arith.constant 0 : index
    %5 = vector.load %arg4[%c0_10, %c0_11] : memref<1x64xf32, #tpu.memory_space<vmem>>, vector<1x64xf32>
    %c0_12 = arith.constant 0 : index
    %c0_13 = arith.constant 0 : index
    %6 = vector.load %arg5[%c0_12, %c0_13] : memref<1x64xf32, #tpu.memory_space<vmem>>, vector<1x64xf32>
    %c0_14 = arith.constant 0 : index
    %c0_15 = arith.constant 0 : index
    %7 = vector.load %arg6[%c0_14, %c0_15] : memref<1x64xf32, #tpu.memory_space<vmem>>, vector<1x64xf32>
    %c0_16 = arith.constant 0 : index
    %c0_17 = arith.constant 0 : index
    %8 = vector.load %arg7[%c0_16, %c0_17] : memref<1x64xf32, #tpu.memory_space<vmem>>, vector<1x64xf32>
    %c0_i32 = arith.constant 0 : i32
    %c3_i32 = arith.constant 3 : i32
    %9 = arith.addi %c0_i32, %c3_i32 : i32
    %c1_i32 = arith.constant 1 : i32
    scf.for %arg11 = %c0_i32 to %9 step %c1_i32  : i32 {
      %c1_i32_19 = arith.constant 1 : i32
      %10 = arith.cmpi slt, %arg11, %c1_i32_19 : i32
      %11 = arith.extui %10 : i1 to i32
      %c0_i32_20 = arith.constant 0 : i32
      %12 = arith.cmpi ne, %11, %c0_i32_20 : i32
      scf.if %12 {
        %c16_i32 = arith.constant 16 : i32
        %21 = arith.muli %arg11, %c16_i32 : i32
        %c0_i32_25 = arith.constant 0 : i32
        %22 = arith.minsi %21, %c0_i32_25 : i32
        %c0_26 = arith.constant 0 : index
        %23 = arith.index_cast %22 : i32 to index
        %c0_27 = arith.constant 0 : index
        %c0_28 = arith.constant 0 : index
        %24 = vector.load %arg1[%c0_26, %23, %c0_27, %c0_28] : memref<1x16x16x64xbf16, #tpu.memory_space<vmem>>, vector<1x16x16x64xbf16>
        %25 = vector.shape_cast %24 : vector<1x16x16x64xbf16> to vector<16x16x64xbf16>
        %cst_29 = arith.constant 0.000000e+00 : bf16
        %26 = vector.broadcast %cst_29 : bf16 to vector<16x1x64xbf16>
        %27 = vector.extract_strided_slice %25 {offsets = [0, 0, 0], sizes = [16, 15, 64], strides = [1, 1, 1]} : vector<16x16x64xbf16> to vector<16x15x64xbf16>
        %28 = tpu.concatenate %26, %27 in 1 : vector<16x1x64xbf16>, vector<16x15x64xbf16> -> vector<16x16x64xbf16>
        %29 = vector.extract_strided_slice %25 {offsets = [0, 1, 0], sizes = [16, 15, 64], strides = [1, 1, 1]} : vector<16x16x64xbf16> to vector<16x15x64xbf16>
        %30 = tpu.concatenate %29, %26 in 1 : vector<16x15x64xbf16>, vector<16x1x64xbf16> -> vector<16x16x64xbf16>
        %c1_i32_30 = arith.constant 1 : i32
        %31 = arith.addi %22, %c1_i32_30 : i32
        %32 = tpu.concatenate %28, %25, %30 in 2 : vector<16x16x64xbf16>, vector<16x16x64xbf16>, vector<16x16x64xbf16> -> vector<16x16x192xbf16>
        %33 = arith.index_cast %31 : i32 to index
        %c0_31 = arith.constant 0 : index
        %c0_32 = arith.constant 0 : index
        %34 = vector.load %arg9[%33, %c0_31, %c0_32] : memref<18x16x192xbf16, #tpu.memory_space<vmem>>, vector<16x16x192xbf16>
        tpu.vector_store %arg9[%33, %c0_31, %c0_32], %32 {strides = array<i32>} : memref<18x16x192xbf16, #tpu.memory_space<vmem>>, vector<16x16x192xbf16>,
      } else {
      }
      %c1_i32_21 = arith.constant 1 : i32
      %13 = arith.cmpi sge, %arg11, %c1_i32_21 : i32
      %c1_i32_22 = arith.constant 1 : i32
      %14 = arith.cmpi sle, %arg11, %c1_i32_22 : i32
      %15 = arith.andi %13, %14 : i1
      %16 = arith.extui %15 : i1 to i32
      %c0_i32_23 = arith.constant 0 : i32
      %17 = arith.cmpi ne, %16, %c0_i32_23 : i32
      scf.if %17 {
        %c1_i32_25 = arith.constant 1 : i32
        %21 = arith.subi %arg11, %c1_i32_25 : i32
        %c16_i32 = arith.constant 16 : i32
        %22 = arith.muli %21, %c16_i32 : i32
        %c0_i32_26 = arith.constant 0 : i32
        %23 = arith.minsi %22, %c0_i32_26 : i32
        %24 = arith.index_cast %23 : i32 to index
        %c0_27 = arith.constant 0 : index
        %c0_28 = arith.constant 0 : index
        %25 = vector.load %arg9[%24, %c0_27, %c0_28] : memref<18x16x192xbf16, #tpu.memory_space<vmem>>, vector<16x16x192xbf16>
        %26 = vector.shape_cast %25 : vector<16x16x192xbf16> to vector<256x192xbf16>
        %c0_29 = arith.constant 0 : index
        %c0_30 = arith.constant 0 : index
        %c0_31 = arith.constant 0 : index
        %27 = vector.load %arg2[%c0_29, %c0_30, %c0_31] : memref<3x192x64xbf16, #tpu.memory_space<vmem>>, vector<1x192x64xbf16>
        %28 = vector.shape_cast %27 : vector<1x192x64xbf16> to vector<192x64xbf16>
        %cst_32 = arith.constant dense<0.000000e+00> : vector<256x64xf32>
        %29 = tpu.matmul %26, %28, %cst_32 {dimension_numbers = #tpu.dot_dimension_numbers<[1], [0], [0], [1], [0, 0, 1, 1], [], []>} : vector<256x192xbf16>, vector<192x64xbf16>, vector<256x64xf32> -> vector<256x64xf32>
        %c1_i32_33 = arith.constant 1 : i32
        %30 = arith.addi %23, %c1_i32_33 : i32
        %31 = arith.index_cast %30 : i32 to index
        %c0_34 = arith.constant 0 : index
        %c0_35 = arith.constant 0 : index
        %32 = vector.load %arg9[%31, %c0_34, %c0_35] : memref<18x16x192xbf16, #tpu.memory_space<vmem>>, vector<16x16x192xbf16>
        %33 = vector.shape_cast %32 : vector<16x16x192xbf16> to vector<256x192xbf16>
        %c1 = arith.constant 1 : index
        %c0_36 = arith.constant 0 : index
        %c0_37 = arith.constant 0 : index
        %34 = vector.load %arg2[%c1, %c0_36, %c0_37] : memref<3x192x64xbf16, #tpu.memory_space<vmem>>, vector<1x192x64xbf16>
        %35 = vector.shape_cast %34 : vector<1x192x64xbf16> to vector<192x64xbf16>
        %cst_38 = arith.constant dense<0.000000e+00> : vector<256x64xf32>
        %36 = tpu.matmul %33, %35, %cst_38 {dimension_numbers = #tpu.dot_dimension_numbers<[1], [0], [0], [1], [0, 0, 1, 1], [], []>} : vector<256x192xbf16>, vector<192x64xbf16>, vector<256x64xf32> -> vector<256x64xf32>
        %37 = arith.addf %29, %36 : vector<256x64xf32>
        %c2_i32_39 = arith.constant 2 : i32
        %38 = arith.addi %23, %c2_i32_39 : i32
        %39 = arith.index_cast %38 : i32 to index
        %c0_40 = arith.constant 0 : index
        %c0_41 = arith.constant 0 : index
        %40 = vector.load %arg9[%39, %c0_40, %c0_41] : memref<18x16x192xbf16, #tpu.memory_space<vmem>>, vector<16x16x192xbf16>
        %41 = vector.shape_cast %40 : vector<16x16x192xbf16> to vector<256x192xbf16>
        %c2 = arith.constant 2 : index
        %c0_42 = arith.constant 0 : index
        %c0_43 = arith.constant 0 : index
        %42 = vector.load %arg2[%c2, %c0_42, %c0_43] : memref<3x192x64xbf16, #tpu.memory_space<vmem>>, vector<1x192x64xbf16>
        %43 = vector.shape_cast %42 : vector<1x192x64xbf16> to vector<192x64xbf16>
        %cst_44 = arith.constant dense<0.000000e+00> : vector<256x64xf32>
        %44 = tpu.matmul %41, %43, %cst_44 {dimension_numbers = #tpu.dot_dimension_numbers<[1], [0], [0], [1], [0, 0, 1, 1], [], []>} : vector<256x192xbf16>, vector<192x64xbf16>, vector<256x64xf32> -> vector<256x64xf32>
        %45 = arith.addf %37, %44 : vector<256x64xf32>
        %46 = vector.broadcast %5 : vector<1x64xf32> to vector<256x64xf32>
        %47 = arith.mulf %45, %46 : vector<256x64xf32>
        %48 = vector.broadcast %6 : vector<1x64xf32> to vector<256x64xf32>
        %49 = arith.addf %47, %48 : vector<256x64xf32>
        %cst_45 = arith.constant 0.000000e+00 : f32
        %50 = vector.broadcast %cst_45 : f32 to vector<256x64xf32>
        %51 = arith.maximumf %49, %50 : vector<256x64xf32>
        %52 = vector.shape_cast %51 : vector<256x64xf32> to vector<16x16x64xf32>
        %53 = arith.truncf %52 : vector<16x16x64xf32> to vector<16x16x64xbf16>
        %cst_46 = arith.constant 0.000000e+00 : bf16
        %54 = vector.broadcast %cst_46 : bf16 to vector<16x1x64xbf16>
        %55 = vector.extract_strided_slice %53 {offsets = [0, 0, 0], sizes = [16, 15, 64], strides = [1, 1, 1]} : vector<16x16x64xbf16> to vector<16x15x64xbf16>
        %56 = tpu.concatenate %54, %55 in 1 : vector<16x1x64xbf16>, vector<16x15x64xbf16> -> vector<16x16x64xbf16>
        %57 = vector.extract_strided_slice %53 {offsets = [0, 1, 0], sizes = [16, 15, 64], strides = [1, 1, 1]} : vector<16x16x64xbf16> to vector<16x15x64xbf16>
        %58 = tpu.concatenate %57, %54 in 1 : vector<16x15x64xbf16>, vector<16x1x64xbf16> -> vector<16x16x64xbf16>
        %c1_i32_47 = arith.constant 1 : i32
        %59 = arith.addi %23, %c1_i32_47 : i32
        %60 = tpu.concatenate %56, %53, %58 in 2 : vector<16x16x64xbf16>, vector<16x16x64xbf16>, vector<16x16x64xbf16> -> vector<16x16x192xbf16>
        %61 = arith.index_cast %59 : i32 to index
        %c0_48 = arith.constant 0 : index
        %c0_49 = arith.constant 0 : index
        %62 = vector.load %arg10[%61, %c0_48, %c0_49] : memref<18x16x192xbf16, #tpu.memory_space<vmem>>, vector<16x16x192xbf16>
        tpu.vector_store %arg10[%61, %c0_48, %c0_49], %60 {strides = array<i32>} : memref<18x16x192xbf16, #tpu.memory_space<vmem>>, vector<16x16x192xbf16>,
      } else {
      }
      %c2_i32 = arith.constant 2 : i32
      %18 = arith.cmpi sge, %arg11, %c2_i32 : i32
      %19 = arith.extui %18 : i1 to i32
      %c0_i32_24 = arith.constant 0 : i32
      %20 = arith.cmpi ne, %19, %c0_i32_24 : i32
      scf.if %20 {
        %c2_i32_25 = arith.constant 2 : i32
        %21 = arith.subi %arg11, %c2_i32_25 : i32
        %c16_i32 = arith.constant 16 : i32
        %22 = arith.muli %21, %c16_i32 : i32
        %c0_i32_26 = arith.constant 0 : i32
        %23 = arith.minsi %22, %c0_i32_26 : i32
        %24 = arith.index_cast %23 : i32 to index
        %c0_27 = arith.constant 0 : index
        %c0_28 = arith.constant 0 : index
        %25 = vector.load %arg10[%24, %c0_27, %c0_28] : memref<18x16x192xbf16, #tpu.memory_space<vmem>>, vector<16x16x192xbf16>
        %26 = vector.shape_cast %25 : vector<16x16x192xbf16> to vector<256x192xbf16>
        %c0_29 = arith.constant 0 : index
        %c0_30 = arith.constant 0 : index
        %c0_31 = arith.constant 0 : index
        %27 = vector.load %arg3[%c0_29, %c0_30, %c0_31] : memref<3x192x64xbf16, #tpu.memory_space<vmem>>, vector<1x192x64xbf16>
        %28 = vector.shape_cast %27 : vector<1x192x64xbf16> to vector<192x64xbf16>
        %cst_32 = arith.constant dense<0.000000e+00> : vector<256x64xf32>
        %29 = tpu.matmul %26, %28, %cst_32 {dimension_numbers = #tpu.dot_dimension_numbers<[1], [0], [0], [1], [0, 0, 1, 1], [], []>} : vector<256x192xbf16>, vector<192x64xbf16>, vector<256x64xf32> -> vector<256x64xf32>
        %c1_i32_33 = arith.constant 1 : i32
        %30 = arith.addi %23, %c1_i32_33 : i32
        %31 = arith.index_cast %30 : i32 to index
        %c0_34 = arith.constant 0 : index
        %c0_35 = arith.constant 0 : index
        %32 = vector.load %arg10[%31, %c0_34, %c0_35] : memref<18x16x192xbf16, #tpu.memory_space<vmem>>, vector<16x16x192xbf16>
        %33 = vector.shape_cast %32 : vector<16x16x192xbf16> to vector<256x192xbf16>
        %c1 = arith.constant 1 : index
        %c0_36 = arith.constant 0 : index
        %c0_37 = arith.constant 0 : index
        %34 = vector.load %arg3[%c1, %c0_36, %c0_37] : memref<3x192x64xbf16, #tpu.memory_space<vmem>>, vector<1x192x64xbf16>
        %35 = vector.shape_cast %34 : vector<1x192x64xbf16> to vector<192x64xbf16>
        %cst_38 = arith.constant dense<0.000000e+00> : vector<256x64xf32>
        %36 = tpu.matmul %33, %35, %cst_38 {dimension_numbers = #tpu.dot_dimension_numbers<[1], [0], [0], [1], [0, 0, 1, 1], [], []>} : vector<256x192xbf16>, vector<192x64xbf16>, vector<256x64xf32> -> vector<256x64xf32>
        %37 = arith.addf %29, %36 : vector<256x64xf32>
        %c2_i32_39 = arith.constant 2 : i32
        %38 = arith.addi %23, %c2_i32_39 : i32
        %39 = arith.index_cast %38 : i32 to index
        %c0_40 = arith.constant 0 : index
        %c0_41 = arith.constant 0 : index
        %40 = vector.load %arg10[%39, %c0_40, %c0_41] : memref<18x16x192xbf16, #tpu.memory_space<vmem>>, vector<16x16x192xbf16>
        %41 = vector.shape_cast %40 : vector<16x16x192xbf16> to vector<256x192xbf16>
        %c2 = arith.constant 2 : index
        %c0_42 = arith.constant 0 : index
        %c0_43 = arith.constant 0 : index
        %42 = vector.load %arg3[%c2, %c0_42, %c0_43] : memref<3x192x64xbf16, #tpu.memory_space<vmem>>, vector<1x192x64xbf16>
        %43 = vector.shape_cast %42 : vector<1x192x64xbf16> to vector<192x64xbf16>
        %cst_44 = arith.constant dense<0.000000e+00> : vector<256x64xf32>
        %44 = tpu.matmul %41, %43, %cst_44 {dimension_numbers = #tpu.dot_dimension_numbers<[1], [0], [0], [1], [0, 0, 1, 1], [], []>} : vector<256x192xbf16>, vector<192x64xbf16>, vector<256x64xf32> -> vector<256x64xf32>
        %45 = arith.addf %37, %44 : vector<256x64xf32>
        %c0_45 = arith.constant 0 : index
        %46 = arith.index_cast %23 : i32 to index
        %c0_46 = arith.constant 0 : index
        %c0_47 = arith.constant 0 : index
        %47 = vector.load %arg1[%c0_45, %46, %c0_46, %c0_47] : memref<1x16x16x64xbf16, #tpu.memory_space<vmem>>, vector<1x16x16x64xbf16>
        %48 = vector.shape_cast %47 : vector<1x16x16x64xbf16> to vector<16x16x64xbf16>
        %49 = arith.extf %48 : vector<16x16x64xbf16> to vector<16x16x64xf32>
        %50 = vector.shape_cast %49 : vector<16x16x64xf32> to vector<256x64xf32>
        %51 = vector.broadcast %7 : vector<1x64xf32> to vector<256x64xf32>
        %52 = arith.mulf %45, %51 : vector<256x64xf32>
        %53 = vector.broadcast %8 : vector<1x64xf32> to vector<256x64xf32>
        %54 = arith.addf %52, %53 : vector<256x64xf32>
        %55 = arith.addf %54, %50 : vector<256x64xf32>
        %cst_48 = arith.constant 0.000000e+00 : f32
        %56 = vector.broadcast %cst_48 : f32 to vector<256x64xf32>
        %57 = arith.maximumf %55, %56 : vector<256x64xf32>
        %58 = vector.shape_cast %57 : vector<256x64xf32> to vector<16x16x64xf32>
        %59 = arith.truncf %58 : vector<16x16x64xf32> to vector<16x16x64xbf16>
        %c0_49 = arith.constant 0 : index
        %60 = arith.index_cast %23 : i32 to index
        %c0_50 = arith.constant 0 : index
        %c0_51 = arith.constant 0 : index
        %61 = vector.load %arg8[%c0_49, %60, %c0_50, %c0_51] : memref<1x16x16x64xbf16, #tpu.memory_space<vmem>>, vector<1x16x16x64xbf16>
        %62 = vector.shape_cast %61 : vector<1x16x16x64xbf16> to vector<16x16x64xbf16>
        %63 = vector.shape_cast %59 : vector<16x16x64xbf16> to vector<1x16x16x64xbf16>
        tpu.vector_store %arg8[%c0_49, %60, %c0_50, %c0_51], %63 {strides = array<i32>} : memref<1x16x16x64xbf16, #tpu.memory_space<vmem>>, vector<1x16x16x64xbf16>,
      } else {
      }
    }
    %c3_i32_18 = arith.constant 3 : i32
    return
  }
  func.func @transform_0(%arg0: i32) -> (i32, i32, i32, i32) {
    %c0_i32 = arith.constant 0 : i32
    %c0_i32_0 = arith.constant 0 : i32
    %c0_i32_1 = arith.constant 0 : i32
    %c0_i32_2 = arith.constant 0 : i32
    return %arg0, %c0_i32, %c0_i32_0, %c0_i32_1 : i32, i32, i32, i32
  }
  func.func @transform_1(%arg0: i32) -> (i32, i32, i32) {
    %c0_i32 = arith.constant 0 : i32
    %c0_i32_0 = arith.constant 0 : i32
    %c0_i32_1 = arith.constant 0 : i32
    %c0_i32_2 = arith.constant 0 : i32
    return %c0_i32, %c0_i32_0, %c0_i32_1 : i32, i32, i32
  }
  func.func @transform_2(%arg0: i32) -> (i32, i32, i32) {
    %c0_i32 = arith.constant 0 : i32
    %c0_i32_0 = arith.constant 0 : i32
    %c0_i32_1 = arith.constant 0 : i32
    %c0_i32_2 = arith.constant 0 : i32
    return %c0_i32, %c0_i32_0, %c0_i32_1 : i32, i32, i32
  }
  func.func @transform_3(%arg0: i32) -> (i32, i32) {
    %c0_i32 = arith.constant 0 : i32
    %c0_i32_0 = arith.constant 0 : i32
    %c0_i32_1 = arith.constant 0 : i32
    return %c0_i32, %c0_i32_0 : i32, i32
  }
  func.func @transform_4(%arg0: i32) -> (i32, i32) {
    %c0_i32 = arith.constant 0 : i32
    %c0_i32_0 = arith.constant 0 : i32
    %c0_i32_1 = arith.constant 0 : i32
    return %c0_i32, %c0_i32_0 : i32, i32
  }
  func.func @transform_5(%arg0: i32) -> (i32, i32) {
    %c0_i32 = arith.constant 0 : i32
    %c0_i32_0 = arith.constant 0 : i32
    %c0_i32_1 = arith.constant 0 : i32
    return %c0_i32, %c0_i32_0 : i32, i32
  }
  func.func @transform_6(%arg0: i32) -> (i32, i32) {
    %c0_i32 = arith.constant 0 : i32
    %c0_i32_0 = arith.constant 0 : i32
    %c0_i32_1 = arith.constant 0 : i32
    return %c0_i32, %c0_i32_0 : i32, i32
  }
  func.func @transform_7(%arg0: i32) -> (i32, i32, i32, i32) {
    %c0_i32 = arith.constant 0 : i32
    %c0_i32_0 = arith.constant 0 : i32
    %c0_i32_1 = arith.constant 0 : i32
    %c0_i32_2 = arith.constant 0 : i32
    return %arg0, %c0_i32, %c0_i32_0, %c0_i32_1 : i32, i32, i32, i32
  }
}

</mosaic_0001>

<llo_original>
// kernel: basic_block_pallas.1
$region0: #{basic_block_pallas.1}
  #allocation0 [shape = 'u32[]', space=smem, size = 0x4, offset = 0x4, fixed_abs, tag = 'smem constant byte address 0x4 - core index']
  #allocation1 [shape = 'u32[144,128]{1,0:T(1,128)}', space=vmem, size = 0x12000, scoped, tag = 'internal scratch']
  #allocation2 [shape = 'bf16[18,16,192]{2,1,0:T(16,128)(2,1)}', space=vmem, size = 0x24000, scoped, tag = 'scratch operand']
  #allocation3 [shape = 'bf16[18,16,192]{2,1,0:T(16,128)(2,1)}', space=vmem, size = 0x24000, scoped, tag = 'scratch operand']
  %s0 = inlined_call_operand.vmem [shape: bf16[2,16,16,64], index: 0, kind: input, shape index: {}]
  %s1 = inlined_call_operand.vmem [shape: bf16[3,192,64], index: 1, kind: input, shape index: {}]
  %s2 = inlined_call_operand.vmem [shape: bf16[3,192,64], index: 2, kind: input, shape index: {}]
  %s3 = inlined_call_operand.vmem [shape: f32[1,64], index: 3, kind: input, shape index: {}]
  %s4 = inlined_call_operand.vmem [shape: f32[1,64], index: 4, kind: input, shape index: {}]
  %s5 = inlined_call_operand.vmem [shape: f32[1,64], index: 5, kind: input, shape index: {}]
  %s6 = inlined_call_operand.vmem [shape: f32[1,64], index: 6, kind: input, shape index: {}]
  %s7 = inlined_call_operand.vmem [shape: bf16[2,16,16,64], index: 7, kind: output, shape index: {}]
  %s8 = sld [smem:[#allocation0]]
  $region80: #{basic_block_pallas.1} parent=0
    _
  %s10 = ssub.s32 1, %s8
  %s11 = scalar_select 0, %s10, %s8
  loop: start=0, step=1, limit=4
  $region2: #{basic_block_pallas.1} parent=0 // loop_pre_header
    _
  $region3: #{basic_block_pallas.1} parent=0 // loop_header
    %s13 = sphi 0, %s17
    %p14 = scmp.ge.s32.totalorder %s13, 4
    %s23 = sphi 0, %s25
    %s26 = sphi 0, %s23
    %s27 = sphi 0, %s26
    %s43 = sphi 0, %s27
    %s47 = sphi 0, %s47
    %s49 = sphi 0, %s47
    %s50 = sphi 0, %s49
    %s64 = sphi 0, %s50
    %s68 = sphi 0, %s68
    %s70 = sphi 0, %s68
    %s71 = sphi 0, %s70
    %s85 = sphi 0, %s71
    %s89 = sphi 0, %s89
    %s91 = sphi 0, %s89
    %s92 = sphi 0, %s91
    %s106 = sphi 0, %s92
    %s110 = sphi 0, %s110
    %s112 = sphi 0, %s110
    %s113 = sphi 0, %s112
    %s127 = sphi 0, %s113
    %s131 = sphi 0, %s131
    %s133 = sphi 0, %s131
    %s134 = sphi 0, %s133
    %s148 = sphi 0, %s134
    %s152 = sphi 0, %s152
    %s154 = sphi 0, %s152
    %s155 = sphi 0, %s154
    %s169 = sphi 0, %s155
    %s175 = sphi 0, %s177
    %s178 = sphi 0, %s175
    %s179 = sphi 0, %s178
    %s195 = sphi 0, %s179
  $region4: #{basic_block_pallas.1} parent=0 // loop_header_branch
    %16 = sbr.rel (%p14) target = $region8
  $region5: #{basic_block_pallas.1} parent=0 // loop_body
    %s18 = ssub.s32 %s13, 1
    %s19 = ssub.s32 %s13, 2
    %s20 = sadd.s32 %s13, 1
    %s21 = ssub.s32 %s13, %s20
    %p22 = scmp.eq.s32.totalorder %s21, 0
    %s24 = sadd.s32 %s23, 1
    %s25 = scalar_select %p22, %s23, %s24
    %p28 = pneg %p22
    %p29 = scmp.eq.s32.totalorder %s13, 1
    %p30 = por %p28, %p29
    %p31 = scmp.ne.s32.totalorder %s23, %s26
    %p32 = scmp.eq.s32.totalorder %s13, 0
    %p33 = por %p31, %p32
    %p34 = scmp.ne.s32.totalorder %s23, %s26
    %p35 = scmp.eq.s32.totalorder %s18, 1
    %p36 = por %p34, %p35
    %p37 = scmp.ne.s32.totalorder %s26, %s27
    %p38 = scmp.eq.s32.totalorder %s18, 0
    %p39 = por %p37, %p38
    %p40 = scmp.ne.s32.totalorder %s26, %s27
    %p41 = scmp.eq.s32.totalorder %s19, 1
    %p42 = por %p40, %p41
    %p44 = scmp.ne.s32.totalorder %s27, %s43
    %p45 = scmp.eq.s32.totalorder %s19, 0
    %p46 = por %p44, %p45
    %s48 = sadd.s32 %s47, 1
    %p51 = scmp.eq.s32.totalorder %s13, 1
    %p52 = scmp.ne.s32.totalorder %s47, %s49
    %p53 = scmp.eq.s32.totalorder %s13, 0
    %p54 = por %p52, %p53
    %p55 = scmp.ne.s32.totalorder %s47, %s49
    %p56 = scmp.eq.s32.totalorder %s18, 1
    %p57 = por %p55, %p56
    %p58 = scmp.ne.s32.totalorder %s49, %s50
    %p59 = scmp.eq.s32.totalorder %s18, 0
    %p60 = por %p58, %p59
    %p61 = scmp.ne.s32.totalorder %s49, %s50
    %p62 = scmp.eq.s32.totalorder %s19, 1
    %p63 = por %p61, %p62
    %p65 = scmp.ne.s32.totalorder %s50, %s64
    %p66 = scmp.eq.s32.totalorder %s19, 0
    %p67 = por %p65, %p66
    %s69 = sadd.s32 %s68, 1
    %p72 = scmp.eq.s32.totalorder %s13, 1
    %p73 = scmp.ne.s32.totalorder %s68, %s70
    %p74 = scmp.eq.s32.totalorder %s13, 0
    %p75 = por %p73, %p74
    %p76 = scmp.ne.s32.totalorder %s68, %s70
    %p77 = scmp.eq.s32.totalorder %s18, 1
    %p78 = por %p76, %p77
    %p79 = scmp.ne.s32.totalorder %s70, %s71
    %p80 = scmp.eq.s32.totalorder %s18, 0
    %p81 = por %p79, %p80
    %p82 = scmp.ne.s32.totalorder %s70, %s71
    %p83 = scmp.eq.s32.totalorder %s19, 1
    %p84 = por %p82, %p83
    %p86 = scmp.ne.s32.totalorder %s71, %s85
    %p87 = scmp.eq.s32.totalorder %s19, 0
    %p88 = por %p86, %p87
    %s90 = sadd.s32 %s89, 1
    %p93 = scmp.eq.s32.totalorder %s13, 1
    %p94 = scmp.ne.s32.totalorder %s89, %s91
    %p95 = scmp.eq.s32.totalorder %s13, 0
    %p96 = por %p94, %p95
    %p97 = scmp.ne.s32.totalorder %s89, %s91
    %p98 = scmp.eq.s32.totalorder %s18, 1
    %p99 = por %p97, %p98
    %p100 = scmp.ne.s32.totalorder %s91, %s92
    %p101 = scmp.eq.s32.totalorder %s18, 0
    %p102 = por %p100, %p101
    %p103 = scmp.ne.s32.totalorder %s91, %s92
    %p104 = scmp.eq.s32.totalorder %s19, 1
    %p105 = por %p103, %p104
    %p107 = scmp.ne.s32.totalorder %s92, %s106
    %p108 = scmp.eq.s32.totalorder %s19, 0
    %p109 = por %p107, %p108
    %s111 = sadd.s32 %s110, 1
    %p114 = scmp.eq.s32.totalorder %s13, 1
    %p115 = scmp.ne.s32.totalorder %s110, %s112
    %p116 = scmp.eq.s32.totalorder %s13, 0
    %p117 = por %p115, %p116
    %p118 = scmp.ne.s32.totalorder %s110, %s112
    %p119 = scmp.eq.s32.totalorder %s18, 1
    %p120 = por %p118, %p119
    %p121 = scmp.ne.s32.totalorder %s112, %s113
    %p122 = scmp.eq.s32.totalorder %s18, 0
    %p123 = por %p121, %p122
    %p124 = scmp.ne.s32.totalorder %s112, %s113
    %p125 = scmp.eq.s32.totalorder %s19, 1
    %p126 = por %p124, %p125
    %p128 = scmp.ne.s32.totalorder %s113, %s127
    %p129 = scmp.eq.s32.totalorder %s19, 0
    %p130 = por %p128, %p129
    %s132 = sadd.s32 %s131, 1
    %p135 = scmp.eq.s32.totalorder %s13, 1
    %p136 = scmp.ne.s32.totalorder %s131, %s133
    %p137 = scmp.eq.s32.totalorder %s13, 0
    %p138 = por %p136, %p137
    %p139 = scmp.ne.s32.totalorder %s131, %s133
    %p140 = scmp.eq.s32.totalorder %s18, 1
    %p141 = por %p139, %p140
    %p142 = scmp.ne.s32.totalorder %s133, %s134
    %p143 = scmp.eq.s32.totalorder %s18, 0
    %p144 = por %p142, %p143
    %p145 = scmp.ne.s32.totalorder %s133, %s134
    %p146 = scmp.eq.s32.totalorder %s19, 1
    %p147 = por %p145, %p146
    %p149 = scmp.ne.s32.totalorder %s134, %s148
    %p150 = scmp.eq.s32.totalorder %s19, 0
    %p151 = por %p149, %p150
    %s153 = sadd.s32 %s152, 1
    %p156 = scmp.eq.s32.totalorder %s13, 1
    %p157 = scmp.ne.s32.totalorder %s152, %s154
    %p158 = scmp.eq.s32.totalorder %s13, 0
    %p159 = por %p157, %p158
    %p160 = scmp.ne.s32.totalorder %s152, %s154
    %p161 = scmp.eq.s32.totalorder %s18, 1
    %p162 = por %p160, %p161
    %p163 = scmp.ne.s32.totalorder %s154, %s155
    %p164 = scmp.eq.s32.totalorder %s18, 0
    %p165 = por %p163, %p164
    %p166 = scmp.ne.s32.totalorder %s154, %s155
    %p167 = scmp.eq.s32.totalorder %s19, 1
    %p168 = por %p166, %p167
    %p170 = scmp.ne.s32.totalorder %s155, %s169
    %p171 = scmp.eq.s32.totalorder %s19, 0
    %p172 = por %p170, %p171
    %s173 = ssub.s32 %s13, %s20
    %p174 = scmp.eq.s32.totalorder %s173, 0
    %s176 = sadd.s32 %s175, 1
    %s177 = scalar_select %p174, %s175, %s176
    %p180 = pneg %p174
    %p181 = scmp.eq.s32.totalorder %s13, 1
    %p182 = por %p180, %p181
    %p183 = scmp.ne.s32.totalorder %s175, %s178
    %p184 = scmp.eq.s32.totalorder %s13, 0
    %p185 = por %p183, %p184
    %p186 = scmp.ne.s32.totalorder %s175, %s178
    %p187 = scmp.eq.s32.totalorder %s18, 1
    %p188 = por %p186, %p187
    %p189 = scmp.ne.s32.totalorder %s178, %s179
    %p190 = scmp.eq.s32.totalorder %s18, 0
    %p191 = por %p189, %p190
    %p192 = scmp.ne.s32.totalorder %s178, %s179
    %p193 = scmp.eq.s32.totalorder %s19, 1
    %p194 = por %p192, %p193
    %p196 = scmp.ne.s32.totalorder %s179, %s195
    %p197 = scmp.eq.s32.totalorder %s19, 0
    %p198 = por %p196, %p197
    %p199 = scmp.le.s32.totalorder 1, %s13
    %p200 = scmp.lt.s32.totalorder %s13, 3
    %p201 = pnand %p199, %p200
    %p202 = pneg %p201
    // Predicated region
    $region9: #{basic_block_pallas.1} parent=5 // pred_check
      _
    $region10: #{basic_block_pallas.1} parent=5 // pred_check_branch
      %204 = sbr.rel (%p201) target = $region12
    $region11: #{basic_block_pallas.1} parent=5 // pred_region
      %s205 = ssub.s32 %s13, 1
      // Predicated region
      $region13: #{basic_block_pallas.1} parent=11 // pred_check
        %p206 = pneg %p60
      $region14: #{basic_block_pallas.1} parent=11 // pred_check_branch
        %208 = sbr.rel (%p206) target = $region16
      $region15: #{basic_block_pallas.1} parent=11 // pred_region
        _
      $region16: #{basic_block_pallas.1} parent=11 // pred_fallthru
        _
      // Predicated region
      $region17: #{basic_block_pallas.1} parent=11 // pred_check
        %p209 = pneg %p81
      $region18: #{basic_block_pallas.1} parent=11 // pred_check_branch
        %211 = sbr.rel (%p209) target = $region20
      $region19: #{basic_block_pallas.1} parent=11 // pred_region
        _
      $region20: #{basic_block_pallas.1} parent=11 // pred_fallthru
        _
      // Predicated region
      $region21: #{basic_block_pallas.1} parent=11 // pred_check
        %p212 = pneg %p102
      $region22: #{basic_block_pallas.1} parent=11 // pred_check_branch
        %214 = sbr.rel (%p212) target = $region24
      $region23: #{basic_block_pallas.1} parent=11 // pred_region
        _
      $region24: #{basic_block_pallas.1} parent=11 // pred_fallthru
        _
      // Predicated region
      $region25: #{basic_block_pallas.1} parent=11 // pred_check
        %p215 = pneg %p123
      $region26: #{basic_block_pallas.1} parent=11 // pred_check_branch
        %217 = sbr.rel (%p215) target = $region28
      $region27: #{basic_block_pallas.1} parent=11 // pred_region
        _
      $region28: #{basic_block_pallas.1} parent=11 // pred_fallthru
        _
      // Predicated region
      $region29: #{basic_block_pallas.1} parent=11 // pred_check
        %p218 = pneg %p144
      $region30: #{basic_block_pallas.1} parent=11 // pred_check_branch
        %220 = sbr.rel (%p218) target = $region32
      $region31: #{basic_block_pallas.1} parent=11 // pred_region
        _
      $region32: #{basic_block_pallas.1} parent=11 // pred_fallthru
        _
      // Predicated region
      $region33: #{basic_block_pallas.1} parent=11 // pred_check
        %p221 = pneg %p165
      $region34: #{basic_block_pallas.1} parent=11 // pred_check_branch
        %223 = sbr.rel (%p221) target = $region36
      $region35: #{basic_block_pallas.1} parent=11 // pred_region
        _
      $region36: #{basic_block_pallas.1} parent=11 // pred_fallthru
        _
    $region12: #{basic_block_pallas.1} parent=5 // pred_fallthru
      _
    %p224 = scmp.lt.s32.totalorder %s13, 2
    // Predicated region
    $region37: #{basic_block_pallas.1} parent=5 // pred_check
      %p225 = pneg %p224
    $region38: #{basic_block_pallas.1} parent=5 // pred_check_branch
      %227 = sbr.rel (%p225) target = $region40
    $region39: #{basic_block_pallas.1} parent=5 // pred_region
      // Predicated region
      $region41: #{basic_block_pallas.1} parent=39 // pred_check
        %p228 = pneg %p33
      $region42: #{basic_block_pallas.1} parent=39 // pred_check_branch
        %230 = sbr.rel (%p228) target = $region44
      $region43: #{basic_block_pallas.1} parent=39 // pred_region
        %p231 = scmp.lt.s32.totalorder %s13, 1
        %s232 = scalar_select %p231, %s13, 1
        %s233 = smul.addr %s232, 32
        %s234 = smul.addr %s233, 4
        %s235 = scalar_lea.vmem %s0, %s234
      $region44: #{basic_block_pallas.1} parent=39 // pred_fallthru
        _
    $region40: #{basic_block_pallas.1} parent=5 // pred_fallthru
      _
    %p236 = scmp.le.s32.totalorder 1, %s13
    %p237 = scmp.lt.s32.totalorder %s13, 3
    %p238 = pnand %p236, %p237
    %p239 = pneg %p238
    // Predicated region
    $region45: #{basic_block_pallas.1} parent=5 // pred_check
      _
    $region46: #{basic_block_pallas.1} parent=5 // pred_check_branch
      %241 = sbr.rel (%p238) target = $region48
    $region47: #{basic_block_pallas.1} parent=5 // pred_region
      %s242 = ssub.s32 %s13, 1
      %p243 = scmp.lt.s32.totalorder %s18, 1
      %s244 = scalar_select %p243, %s18, 1
      %s245 = smul.addr %s244, 32
      %s246 = smul.addr %s245, 4
      %s247 = scalar_lea.vmem %s0, %s246
      %p248 = pneg %p39
      %p249 = pneg %p36
      %p250 = pneg %p60
      %p251 = pneg %p57
      %p252 = pneg %p81
      %p253 = pneg %p78
      %p254 = pneg %p102
      %p255 = pneg %p99
      %p256 = pneg %p123
      %p257 = pneg %p120
      %p258 = pneg %p144
      %p259 = pneg %p141
      %p260 = pneg %p165
      %p261 = pneg %p162
      %p262 = pneg %p191
      %p263 = pneg %p188
      %p264 = scmp.lt.s32.totalorder %s18, 1
      %s265 = scalar_select %p264, %s18, 1
      %s266 = smul.addr %s265, 32
      %s267 = smul.addr %s266, 4
      %s268 = scalar_lea.vmem %s7, %s267
      %p269 = scmp.lt.s32.totalorder %s18, 1
      %s270 = scalar_select %p269, %s18, 1
      %s271 = smul.addr %s270, 32
      %s272 = smul.addr %s271, 4
      %s273 = scalar_lea.vmem %s0, %s272
      %p274 = scmp.lt.s32.totalorder %s18, 1
      %s275 = scalar_select %p274, %s18, 1
      %s276 = smul.addr %s275, 32
      %s277 = smul.addr %s276, 4
      %s278 = scalar_lea.vmem %s7, %s277
      %280 = vst [vmem:[#allocation2] sm:$0xff] 0
      %vm281 = vcmask 523264
      %282 = vst.msk [vmem:[#allocation2 + $0x8] sm:$0xff] %vm281, 0
      %s283 = scalar_lea.vmem [#allocation2], 272
      %284 = vst [vmem:[%s283] sm:$0xff] 0
      %285 = vst.msk [vmem:[%s283 + $0x8] sm:$0xff] %vm281, 0
      %286 = vst [vmem:[#allocation3] sm:$0xff] 0
      %287 = vst.msk [vmem:[#allocation3 + $0x8] sm:$0xff] %vm281, 0
      %s288 = scalar_lea.vmem [#allocation3], 272
      %289 = vst [vmem:[%s288] sm:$0xff] 0
      %290 = vst.msk [vmem:[%s288 + $0x8] sm:$0xff] %vm281, 0
      %v291 = vld [vmem:[%s3] sm:$0x1]
      %v292 = vld [vmem:[%s4] sm:$0x1]
      %v293 = vld [vmem:[%s5] sm:$0x1]
      %v294 = vld [vmem:[%s6] sm:$0x1]
      loop: start=0, step=1, limit=3
      $region49: #{basic_block_pallas.1} parent=47 // loop_pre_header
        _
      $region50: #{basic_block_pallas.1} parent=47 // loop_header
        %s296 = sphi 0, %s300
        %p297 = scmp.ge.s32.totalorder %s296, 3
      $region51: #{basic_block_pallas.1} parent=47 // loop_header_branch
        %299 = sbr.rel (%p297) target = $region55
      $region52: #{basic_block_pallas.1} parent=47 // loop_body
        %p301 = scmp.lt.s32.totalorder %s296, 1
        // Predicated region
        $region56: #{basic_block_pallas.1} parent=52 // pred_check
          %p302 = pneg %p301
        $region57: #{basic_block_pallas.1} parent=52 // pred_check_branch
          %304 = sbr.rel (%p302) target = $region59
        $region58: #{basic_block_pallas.1} parent=52 // pred_region
          %s305 = smul.u32 %s296, 16
          %p306 = scmp.lt.s32.totalorder %s305, 0
          %s307 = scalar_select %p306, %s305, 0
          %s308 = smul.u32 %s307, 2
          %s309 = smul.addr %s308, 4
          %s310 = scalar_lea.vmem %s273, %s309
          %v311 = vld [vmem:[%s310] sm:$0xf]
          %v312 = vld [vmem:[%s310 + $0x4] sm:$0xf]
          %v313 = vld [vmem:[%s310 + $0x8] sm:$0xf]
          %v314 = vld [vmem:[%s310 + $0xc] sm:$0xf]
          %v315 = vld [vmem:[%s310 + $0x10] sm:$0xf]
          %v316 = vld [vmem:[%s310 + $0x14] sm:$0xf]
          %v317 = vld [vmem:[%s310 + $0x18] sm:$0xf]
          %v318 = vld [vmem:[%s310 + $0x1c] sm:$0xf]
          %v319 = vld [vmem:[%s310 + $0x20] sm:$0xf]
          %v320 = vld [vmem:[%s310 + $0x24] sm:$0xf]
          %v321 = vld [vmem:[%s310 + $0x28] sm:$0xf]
          %v322 = vld [vmem:[%s310 + $0x2c] sm:$0xf]
          %v323 = vld [vmem:[%s310 + $0x30] sm:$0xf]
          %v324 = vld [vmem:[%s310 + $0x34] sm:$0xf]
          %v325 = vld [vmem:[%s310 + $0x38] sm:$0xf]
          %v326 = vld [vmem:[%s310 + $0x3c] sm:$0xf]
          %v327 = vld [vmem:[%s310 + $0x40] sm:$0xf]
          %v328 = vld [vmem:[%s310 + $0x44] sm:$0xf]
          %v329 = vld [vmem:[%s310 + $0x48] sm:$0xf]
          %v330 = vld [vmem:[%s310 + $0x4c] sm:$0xf]
          %v331 = vld [vmem:[%s310 + $0x50] sm:$0xf]
          %v332 = vld [vmem:[%s310 + $0x54] sm:$0xf]
          %v333 = vld [vmem:[%s310 + $0x58] sm:$0xf]
          %v334 = vld [vmem:[%s310 + $0x5c] sm:$0xf]
          %v335 = vld [vmem:[%s310 + $0x60] sm:$0xf]
          %v336 = vld [vmem:[%s310 + $0x64] sm:$0xf]
          %v337 = vld [vmem:[%s310 + $0x68] sm:$0xf]
          %v338 = vld [vmem:[%s310 + $0x6c] sm:$0xf]
          %v339 = vld [vmem:[%s310 + $0x70] sm:$0xf]
          %v340 = vld [vmem:[%s310 + $0x74] sm:$0xf]
          %v341 = vld [vmem:[%s310 + $0x78] sm:$0xf]
          %v342 = vld [vmem:[%s310 + $0x7c] sm:$0xf]
          %v375 = vunpack.c.l.b16 %v311
          %v376 = vunpack.c.l.b16 %v312
          %v377 = vunpack.c.l.b16 %v313
          %v378 = vunpack.c.l.b16 %v314
          %v379 = vunpack.c.l.b16 %v315
          %v380 = vunpack.c.l.b16 %v316
          %v381 = vunpack.c.l.b16 %v317
          %v382 = vunpack.c.l.b16 %v318
          %v383 = vunpack.c.l.b16 %v319
          %v384 = vunpack.c.l.b16 %v320
          %v385 = vunpack.c.l.b16 %v321
          %v386 = vunpack.c.l.b16 %v322
          %v387 = vunpack.c.l.b16 %v323
          %v388 = vunpack.c.l.b16 %v324
          %v389 = vunpack.c.l.b16 %v325
          %v390 = vunpack.c.l.b16 %v326
          %v391 = vunpack.c.l.b16 %v327
          %v392 = vunpack.c.l.b16 %v328
          %v393 = vunpack.c.l.b16 %v329
          %v394 = vunpack.c.l.b16 %v330
          %v395 = vunpack.c.l.b16 %v331
          %v396 = vunpack.c.l.b16 %v332
          %v397 = vunpack.c.l.b16 %v333
          %v398 = vunpack.c.l.b16 %v334
          %v399 = vunpack.c.l.b16 %v335
          %v400 = vunpack.c.l.b16 %v336
          %v401 = vunpack.c.l.b16 %v337
          %v402 = vunpack.c.l.b16 %v338
          %v403 = vunpack.c.l.b16 %v339
          %v404 = vunpack.c.l.b16 %v340
          %v405 = vunpack.c.l.b16 %v341
          %v406 = vunpack.c.l.b16 %v342
          %v407 = vpack.c.b16 %v376, %v375
          %v408 = vpack.c.b16 %v378, %v377
          %v409 = vpack.c.b16 %v380, %v379
          %v410 = vpack.c.b16 %v382, %v381
          %v411 = vpack.c.b16 %v384, %v383
          %v412 = vpack.c.b16 %v386, %v385
          %v413 = vpack.c.b16 %v388, %v387
          %v414 = vpack.c.b16 %v390, %v389
          %v415 = vpack.c.b16 %v392, %v391
          %v416 = vpack.c.b16 %v394, %v393
          %v417 = vpack.c.b16 %v396, %v395
          %v418 = vpack.c.b16 %v398, %v397
          %v419 = vpack.c.b16 %v400, %v399
          %v420 = vpack.c.b16 %v402, %v401
          %v421 = vpack.c.b16 %v404, %v403
          %v422 = vpack.c.b16 %v406, %v405
          %v424 = vshrl.u32 %v407, 16
          %v426 = vrot.slane %v424, 7
          %v427 = vshll.u32 %v407, 16
          %v429 = vor.u32 %v426, %v427
          %v431 = vshrl.u32 %v408, 16
          %v433 = vrot.slane %v431, 7
          %v434 = vshll.u32 %v408, 16
          %v436 = vor.u32 %v433, %v434
          %v438 = vshrl.u32 %v409, 16
          %v440 = vrot.slane %v438, 7
          %v441 = vshll.u32 %v409, 16
          %v443 = vor.u32 %v440, %v441
          %v445 = vshrl.u32 %v410, 16
          %v447 = vrot.slane %v445, 7
          %v448 = vshll.u32 %v410, 16
          %v450 = vor.u32 %v447, %v448
          %v452 = vshrl.u32 %v411, 16
          %v454 = vrot.slane %v452, 7
          %v455 = vshll.u32 %v411, 16
          %v457 = vor.u32 %v454, %v455
          %v459 = vshrl.u32 %v412, 16
          %v461 = vrot.slane %v459, 7
          %v462 = vshll.u32 %v412, 16
          %v464 = vor.u32 %v461, %v462
          %v466 = vshrl.u32 %v413, 16
          %v468 = vrot.slane %v466, 7
          %v469 = vshll.u32 %v413, 16
          %v471 = vor.u32 %v468, %v469
          %v473 = vshrl.u32 %v414, 16
          %v475 = vrot.slane %v473, 7
          %v476 = vshll.u32 %v414, 16
          %v478 = vor.u32 %v475, %v476
          %v480 = vshrl.u32 %v415, 16
          %v482 = vrot.slane %v480, 7
          %v483 = vshll.u32 %v415, 16
          %v485 = vor.u32 %v482, %v483
          %v487 = vshrl.u32 %v416, 16
          %v489 = vrot.slane %v487, 7
          %v490 = vshll.u32 %v416, 16
          %v492 = vor.u32 %v489, %v490
          %v494 = vshrl.u32 %v417, 16
          %v496 = vrot.slane %v494, 7
          %v497 = vshll.u32 %v417, 16
          %v499 = vor.u32 %v496, %v497
          %v501 = vshrl.u32 %v418, 16
          %v503 = vrot.slane %v501, 7
          %v504 = vshll.u32 %v418, 16
          %v506 = vor.u32 %v503, %v504
          %v508 = vshrl.u32 %v419, 16
          %v510 = vrot.slane %v508, 7
          %v511 = vshll.u32 %v419, 16
          %v513 = vor.u32 %v510, %v511
          %v515 = vshrl.u32 %v420, 16
          %v517 = vrot.slane %v515, 7
          %v518 = vshll.u32 %v420, 16
          %v520 = vor.u32 %v517, %v518
          %v522 = vshrl.u32 %v421, 16
          %v524 = vrot.slane %v522, 7
          %v525 = vshll.u32 %v421, 16
          %v527 = vor.u32 %v524, %v525
          %v529 = vshrl.u32 %v422, 16
          %v531 = vrot.slane %v529, 7
          %v532 = vshll.u32 %v422, 16
          %v534 = vor.u32 %v531, %v532
          %vm551 = vcmask 1040384
          %vm552 = vsmask.f32 256
          %vm553 = vmand %vm551, %vm552
          %v554 = vsel %vm553, 0, %v429
          %v555 = vsel %vm553, 0, %v436
          %v556 = vsel %vm553, 0, %v443
          %v557 = vsel %vm553, 0, %v450
          %v558 = vsel %vm553, 0, %v457
          %v559 = vsel %vm553, 0, %v464
          %v560 = vsel %vm553, 0, %v471
          %v561 = vsel %vm553, 0, %v478
          %v562 = vsel %vm553, 0, %v485
          %v563 = vsel %vm553, 0, %v492
          %v564 = vsel %vm553, 0, %v499
          %v565 = vsel %vm553, 0, %v506
          %v566 = vsel %vm553, 0, %v513
          %v567 = vsel %vm553, 0, %v520
          %v568 = vsel %vm553, 0, %v527
          %v569 = vsel %vm553, 0, %v534
          %v570 = vrot.slane %v427, 1
          %v571 = vor.u32 %v424, %v570
          %v572 = vrot.slane %v434, 1
          %v573 = vor.u32 %v431, %v572
          %v574 = vrot.slane %v441, 1
          %v575 = vor.u32 %v438, %v574
          %v576 = vrot.slane %v448, 1
          %v577 = vor.u32 %v445, %v576
          %v578 = vrot.slane %v455, 1
          %v579 = vor.u32 %v452, %v578
          %v580 = vrot.slane %v462, 1
          %v581 = vor.u32 %v459, %v580
          %v582 = vrot.slane %v469, 1
          %v583 = vor.u32 %v466, %v582
          %v584 = vrot.slane %v476, 1
          %v585 = vor.u32 %v473, %v584
          %v586 = vrot.slane %v483, 1
          %v587 = vor.u32 %v480, %v586
          %v588 = vrot.slane %v490, 1
          %v589 = vor.u32 %v487, %v588
          %v590 = vrot.slane %v497, 1
          %v591 = vor.u32 %v494, %v590
          %v592 = vrot.slane %v504, 1
          %v593 = vor.u32 %v501, %v592
          %v594 = vrot.slane %v511, 1
          %v595 = vor.u32 %v508, %v594
          %v596 = vrot.slane %v518, 1
          %v597 = vor.u32 %v515, %v596
          %v598 = vrot.slane %v525, 1
          %v599 = vor.u32 %v522, %v598
          %v600 = vrot.slane %v532, 1
          %v601 = vor.u32 %v529, %v600
          %vm618 = vcmask 1047552
          %vm619 = vsmask.f32 7424
          %vm620 = vmand %vm618, %vm619
          %v621 = vsel %vm620, %v571, 0
          %v622 = vsel %vm620, %v573, 0
          %v623 = vsel %vm620, %v575, 0
          %v624 = vsel %vm620, %v577, 0
          %v625 = vsel %vm620, %v579, 0
          %v626 = vsel %vm620, %v581, 0
          %v627 = vsel %vm620, %v583, 0
          %v628 = vsel %vm620, %v585, 0
          %v629 = vsel %vm620, %v587, 0
          %v630 = vsel %vm620, %v589, 0
          %v631 = vsel %vm620, %v591, 0
          %v632 = vsel %vm620, %v593, 0
          %v633 = vsel %vm620, %v595, 0
          %v634 = vsel %vm620, %v597, 0
          %v635 = vsel %vm620, %v599, 0
          %v636 = vsel %vm620, %v601, 0
          %s637 = sadd.s32 %s307, 1
          %638 = vrot.lane.b32.xlu0 %v407, 64
          %v639 = vpop.permute.xlu0 %638
          %640 = vrot.lane.b32.xlu0 %v408, 64
          %v641 = vpop.permute.xlu0 %640
          %642 = vrot.lane.b32.xlu0 %v409, 64
          %v643 = vpop.permute.xlu0 %642
          %644 = vrot.lane.b32.xlu0 %v410, 64
          %v645 = vpop.permute.xlu0 %644
          %646 = vrot.lane.b32.xlu0 %v411, 64
          %v647 = vpop.permute.xlu0 %646
          %648 = vrot.lane.b32.xlu0 %v412, 64
          %v649 = vpop.permute.xlu0 %648
          %650 = vrot.lane.b32.xlu0 %v413, 64
          %v651 = vpop.permute.xlu0 %650
          %652 = vrot.lane.b32.xlu0 %v414, 64
          %v653 = vpop.permute.xlu0 %652
          %654 = vrot.lane.b32.xlu0 %v415, 64
          %v655 = vpop.permute.xlu0 %654
          %656 = vrot.lane.b32.xlu0 %v416, 64
          %v657 = vpop.permute.xlu0 %656
          %658 = vrot.lane.b32.xlu0 %v417, 64
          %v659 = vpop.permute.xlu0 %658
          %660 = vrot.lane.b32.xlu0 %v418, 64
          %v661 = vpop.permute.xlu0 %660
          %662 = vrot.lane.b32.xlu0 %v419, 64
          %v663 = vpop.permute.xlu0 %662
          %664 = vrot.lane.b32.xlu0 %v420, 64
          %v665 = vpop.permute.xlu0 %664
          %666 = vrot.lane.b32.xlu0 %v421, 64
          %v667 = vpop.permute.xlu0 %666
          %668 = vrot.lane.b32.xlu0 %v422, 64
          %v669 = vpop.permute.xlu0 %668
          %v672 = vsel %vm281, %v554, %v639
          %v676 = vsel %vm281, %v555, %v641
          %v680 = vsel %vm281, %v556, %v643
          %v684 = vsel %vm281, %v557, %v645
          %v688 = vsel %vm281, %v558, %v647
          %v692 = vsel %vm281, %v559, %v649
          %v696 = vsel %vm281, %v560, %v651
          %v700 = vsel %vm281, %v561, %v653
          %v704 = vsel %vm281, %v562, %v655
          %v708 = vsel %vm281, %v563, %v657
          %v712 = vsel %vm281, %v564, %v659
          %v716 = vsel %vm281, %v565, %v661
          %v720 = vsel %vm281, %v566, %v663
          %v724 = vsel %vm281, %v567, %v665
          %v728 = vsel %vm281, %v568, %v667
          %v732 = vsel %vm281, %v569, %v669
          %s734 = smul.u32 %s637, 2
          %s735 = smul.addr %s734, 8
          %s736 = scalar_lea.vmem [#allocation2], %s735
          %737 = vst [vmem:[%s736] sm:$0xff] %v672
          %738 = vst.msk [vmem:[%s736 + $0x8] sm:$0xff] %vm281, %v621
          %739 = vst [vmem:[%s736 + $0x10] sm:$0xff] %v676
          %740 = vst.msk [vmem:[%s736 + $0x18] sm:$0xff] %vm281, %v622
          %741 = vst [vmem:[%s736 + $0x20] sm:$0xff] %v680
          %742 = vst.msk [vmem:[%s736 + $0x28] sm:$0xff] %vm281, %v623
          %743 = vst [vmem:[%s736 + $0x30] sm:$0xff] %v684
          %744 = vst.msk [vmem:[%s736 + $0x38] sm:$0xff] %vm281, %v624
          %745 = vst [vmem:[%s736 + $0x40] sm:$0xff] %v688
          %746 = vst.msk [vmem:[%s736 + $0x48] sm:$0xff] %vm281, %v625
          %747 = vst [vmem:[%s736 + $0x50] sm:$0xff] %v692
          %748 = vst.msk [vmem:[%s736 + $0x58] sm:$0xff] %vm281, %v626
          %749 = vst [vmem:[%s736 + $0x60] sm:$0xff] %v696
          %750 = vst.msk [vmem:[%s736 + $0x68] sm:$0xff] %vm281, %v627
          %751 = vst [vmem:[%s736 + $0x70] sm:$0xff] %v700
          %752 = vst.msk [vmem:[%s736 + $0x78] sm:$0xff] %vm281, %v628
          %753 = vst [vmem:[%s736 + $0x80] sm:$0xff] %v704
          %754 = vst.msk [vmem:[%s736 + $0x88] sm:$0xff] %vm281, %v629
          %755 = vst [vmem:[%s736 + $0x90] sm:$0xff] %v708
          %756 = vst.msk [vmem:[%s736 + $0x98] sm:$0xff] %vm281, %v630
          %757 = vst [vmem:[%s736 + $0xa0] sm:$0xff] %v712
          %758 = vst.msk [vmem:[%s736 + $0xa8] sm:$0xff] %vm281, %v631
          %759 = vst [vmem:[%s736 + $0xb0] sm:$0xff] %v716
          %760 = vst.msk [vmem:[%s736 + $0xb8] sm:$0xff] %vm281, %v632
          %761 = vst [vmem:[%s736 + $0xc0] sm:$0xff] %v720
          %762 = vst.msk [vmem:[%s736 + $0xc8] sm:$0xff] %vm281, %v633
          %763 = vst [vmem:[%s736 + $0xd0] sm:$0xff] %v724
          %764 = vst.msk [vmem:[%s736 + $0xd8] sm:$0xff] %vm281, %v634
          %765 = vst [vmem:[%s736 + $0xe0] sm:$0xff] %v728
          %766 = vst.msk [vmem:[%s736 + $0xe8] sm:$0xff] %vm281, %v635
          %767 = vst [vmem:[%s736 + $0xf0] sm:$0xff] %v732
          %768 = vst.msk [vmem:[%s736 + $0xf8] sm:$0xff] %vm281, %v636
        $region59: #{basic_block_pallas.1} parent=52 // pred_fallthru
          _
        %p769 = scmp.ge.s32.totalorder %s296, 1
        %p770 = scmp.le.s32.totalorder %s296, 1
        %p771 = pnand %p769, %p770
        %p772 = pneg %p771
        // Predicated region
        $region60: #{basic_block_pallas.1} parent=52 // pred_check
          _
        $region61: #{basic_block_pallas.1} parent=52 // pred_check_branch
          %774 = sbr.rel (%p771) target = $region63
        $region62: #{basic_block_pallas.1} parent=52 // pred_region
          %s775 = ssub.s32 %s296, 1
          %s776 = smul.u32 %s775, 16
          %p777 = scmp.lt.s32.totalorder %s776, 0
          %s778 = scalar_select %p777, %s776, 0
          %s779 = smul.u32 %s778, 2
          %s780 = smul.addr %s779, 8
          %s781 = scalar_lea.vmem [#allocation2], %s780
          %v782 = vld [vmem:[%s781] sm:$0xff]
          %v783 = vld [vmem:[%s781 + $0x8] sm:$0xff]
          %v784 = vld [vmem:[%s781 + $0x10] sm:$0xff]
          %v785 = vld [vmem:[%s781 + $0x18] sm:$0xff]
          %v786 = vld [vmem:[%s781 + $0x20] sm:$0xff]
          %v787 = vld [vmem:[%s781 + $0x28] sm:$0xff]
          %v788 = vld [vmem:[%s781 + $0x30] sm:$0xff]
          %v789 = vld [vmem:[%s781 + $0x38] sm:$0xff]
          %v790 = vld [vmem:[%s781 + $0x40] sm:$0xff]
          %v791 = vld [vmem:[%s781 + $0x48] sm:$0xff]
          %v792 = vld [vmem:[%s781 + $0x50] sm:$0xff]
          %v793 = vld [vmem:[%s781 + $0x58] sm:$0xff]
          %v794 = vld [vmem:[%s781 + $0x60] sm:$0xff]
          %v795 = vld [vmem:[%s781 + $0x68] sm:$0xff]
          %v796 = vld [vmem:[%s781 + $0x70] sm:$0xff]
          %v797 = vld [vmem:[%s781 + $0x78] sm:$0xff]
          %v798 = vld [vmem:[%s781 + $0x80] sm:$0xff]
          %v799 = vld [vmem:[%s781 + $0x88] sm:$0xff]
          %v800 = vld [vmem:[%s781 + $0x90] sm:$0xff]
          %v801 = vld [vmem:[%s781 + $0x98] sm:$0xff]
          %v802 = vld [vmem:[%s781 + $0xa0] sm:$0xff]
          %v803 = vld [vmem:[%s781 + $0xa8] sm:$0xff]
          %v804 = vld [vmem:[%s781 + $0xb0] sm:$0xff]
          %v805 = vld [vmem:[%s781 + $0xb8] sm:$0xff]
          %v806 = vld [vmem:[%s781 + $0xc0] sm:$0xff]
          %v807 = vld [vmem:[%s781 + $0xc8] sm:$0xff]
          %v808 = vld [vmem:[%s781 + $0xd0] sm:$0xff]
          %v809 = vld [vmem:[%s781 + $0xd8] sm:$0xff]
          %v810 = vld [vmem:[%s781 + $0xe0] sm:$0xff]
          %v811 = vld [vmem:[%s781 + $0xe8] sm:$0xff]
          %v812 = vld [vmem:[%s781 + $0xf0] sm:$0xff]
          %v813 = vld [vmem:[%s781 + $0xf8] sm:$0xff]
          %v814 = vld [vmem:[%s1] sm:$0xf]
          %v815 = vld [vmem:[%s1 + $0x4] sm:$0xf]
          %v816 = vld [vmem:[%s1 + $0x8] sm:$0xf]
          %v817 = vld [vmem:[%s1 + $0xc] sm:$0xf]
          %v818 = vld [vmem:[%s1 + $0x10] sm:$0xf]
          %v819 = vld [vmem:[%s1 + $0x14] sm:$0xf]
          %v820 = vld [vmem:[%s1 + $0x18] sm:$0xf]
          %v821 = vld [vmem:[%s1 + $0x1c] sm:$0xf]
          %v822 = vld [vmem:[%s1 + $0x20] sm:$0xf]
          %v823 = vld [vmem:[%s1 + $0x24] sm:$0xf]
          %v824 = vld [vmem:[%s1 + $0x28] sm:$0xf]
          %v825 = vld [vmem:[%s1 + $0x2c] sm:$0xf]
          %v826 = vld [vmem:[%s1 + $0x30] sm:$0xf]
          %v827 = vld [vmem:[%s1 + $0x34] sm:$0xf]
          %v828 = vld [vmem:[%s1 + $0x38] sm:$0xf]
          %v829 = vld [vmem:[%s1 + $0x3c] sm:$0xf]
          %v830 = vld [vmem:[%s1 + $0x40] sm:$0xf]
          %v831 = vld [vmem:[%s1 + $0x44] sm:$0xf]
          %v832 = vld [vmem:[%s1 + $0x48] sm:$0xf]
          %v833 = vld [vmem:[%s1 + $0x4c] sm:$0xf]
          %v834 = vld [vmem:[%s1 + $0x50] sm:$0xf]
          %v835 = vld [vmem:[%s1 + $0x54] sm:$0xf]
          %v836 = vld [vmem:[%s1 + $0x58] sm:$0xf]
          %v837 = vld [vmem:[%s1 + $0x5c] sm:$0xf]
          %s838 = sadd.s32 %s778, 1
          %s839 = smul.u32 %s838, 2
          %s840 = smul.addr %s839, 8
          %s841 = scalar_lea.vmem [#allocation2], %s840
          %v842 = vld [vmem:[%s841] sm:$0xff]
          %v843 = vld [vmem:[%s841 + $0x8] sm:$0xff]
          %v844 = vld [vmem:[%s841 + $0x10] sm:$0xff]
          %v845 = vld [vmem:[%s841 + $0x18] sm:$0xff]
          %v846 = vld [vmem:[%s841 + $0x20] sm:$0xff]
          %v847 = vld [vmem:[%s841 + $0x28] sm:$0xff]
          %v848 = vld [vmem:[%s841 + $0x30] sm:$0xff]
          %v849 = vld [vmem:[%s841 + $0x38] sm:$0xff]
          %v850 = vld [vmem:[%s841 + $0x40] sm:$0xff]
          %v851 = vld [vmem:[%s841 + $0x48] sm:$0xff]
          %v852 = vld [vmem:[%s841 + $0x50] sm:$0xff]
          %v853 = vld [vmem:[%s841 + $0x58] sm:$0xff]
          %v854 = vld [vmem:[%s841 + $0x60] sm:$0xff]
          %v855 = vld [vmem:[%s841 + $0x68] sm:$0xff]
          %v856 = vld [vmem:[%s841 + $0x70] sm:$0xff]
          %v857 = vld [vmem:[%s841 + $0x78] sm:$0xff]
          %v858 = vld [vmem:[%s841 + $0x80] sm:$0xff]
          %v859 = vld [vmem:[%s841 + $0x88] sm:$0xff]
          %v860 = vld [vmem:[%s841 + $0x90] sm:$0xff]
          %v861 = vld [vmem:[%s841 + $0x98] sm:$0xff]
          %v862 = vld [vmem:[%s841 + $0xa0] sm:$0xff]
          %v863 = vld [vmem:[%s841 + $0xa8] sm:$0xff]
          %v864 = vld [vmem:[%s841 + $0xb0] sm:$0xff]
          %v865 = vld [vmem:[%s841 + $0xb8] sm:$0xff]
          %v866 = vld [vmem:[%s841 + $0xc0] sm:$0xff]
          %v867 = vld [vmem:[%s841 + $0xc8] sm:$0xff]
          %v868 = vld [vmem:[%s841 + $0xd0] sm:$0xff]
          %v869 = vld [vmem:[%s841 + $0xd8] sm:$0xff]
          %v870 = vld [vmem:[%s841 + $0xe0] sm:$0xff]
          %v871 = vld [vmem:[%s841 + $0xe8] sm:$0xff]
          %v872 = vld [vmem:[%s841 + $0xf0] sm:$0xff]
          %v873 = vld [vmem:[%s841 + $0xf8] sm:$0xff]
          %s874 = scalar_lea.vmem %s1, 96
          %v875 = vld [vmem:[%s874] sm:$0xf]
          %v876 = vld [vmem:[%s874 + $0x4] sm:$0xf]
          %v877 = vld [vmem:[%s874 + $0x8] sm:$0xf]
          %v878 = vld [vmem:[%s874 + $0xc] sm:$0xf]
          %v879 = vld [vmem:[%s874 + $0x10] sm:$0xf]
          %v880 = vld [vmem:[%s874 + $0x14] sm:$0xf]
          %v881 = vld [vmem:[%s874 + $0x18] sm:$0xf]
          %v882 = vld [vmem:[%s874 + $0x1c] sm:$0xf]
          %v883 = vld [vmem:[%s874 + $0x20] sm:$0xf]
          %v884 = vld [vmem:[%s874 + $0x24] sm:$0xf]
          %v885 = vld [vmem:[%s874 + $0x28] sm:$0xf]
          %v886 = vld [vmem:[%s874 + $0x2c] sm:$0xf]
          %v887 = vld [vmem:[%s874 + $0x30] sm:$0xf]
          %v888 = vld [vmem:[%s874 + $0x34] sm:$0xf]
          %v889 = vld [vmem:[%s874 + $0x38] sm:$0xf]
          %v890 = vld [vmem:[%s874 + $0x3c] sm:$0xf]
          %v891 = vld [vmem:[%s874 + $0x40] sm:$0xf]
          %v892 = vld [vmem:[%s874 + $0x44] sm:$0xf]
          %v893 = vld [vmem:[%s874 + $0x48] sm:$0xf]
          %v894 = vld [vmem:[%s874 + $0x4c] sm:$0xf]
          %v895 = vld [vmem:[%s874 + $0x50] sm:$0xf]
          %v896 = vld [vmem:[%s874 + $0x54] sm:$0xf]
          %v897 = vld [vmem:[%s874 + $0x58] sm:$0xf]
          %v898 = vld [vmem:[%s874 + $0x5c] sm:$0xf]
          %v923 = vunpack.c.l.b16 %v875
          %v924 = vunpack.c.l.b16 %v876
          %v925 = vunpack.c.l.b16 %v877
          %v926 = vunpack.c.l.b16 %v878
          %v927 = vunpack.c.l.b16 %v879
          %v928 = vunpack.c.l.b16 %v880
          %v929 = vunpack.c.l.b16 %v881
          %v930 = vunpack.c.l.b16 %v882
          %v931 = vunpack.c.l.b16 %v883
          %v932 = vunpack.c.l.b16 %v884
          %v933 = vunpack.c.l.b16 %v885
          %v934 = vunpack.c.l.b16 %v886
          %v935 = vunpack.c.l.b16 %v887
          %v936 = vunpack.c.l.b16 %v888
          %v937 = vunpack.c.l.b16 %v889
          %v938 = vunpack.c.l.b16 %v890
          %v939 = vunpack.c.l.b16 %v891
          %v940 = vunpack.c.l.b16 %v892
          %v941 = vunpack.c.l.b16 %v893
          %v942 = vunpack.c.l.b16 %v894
          %v943 = vunpack.c.l.b16 %v895
          %v944 = vunpack.c.l.b16 %v896
          %v945 = vunpack.c.l.b16 %v897
          %v946 = vunpack.c.l.b16 %v898
          %v947 = vpack.c.b16 %v924, %v923
          %v948 = vpack.c.b16 %v926, %v925
          %v949 = vpack.c.b16 %v928, %v927
          %v950 = vpack.c.b16 %v930, %v929
          %v951 = vpack.c.b16 %v932, %v931
          %v952 = vpack.c.b16 %v934, %v933
          %v953 = vpack.c.b16 %v936, %v935
          %v954 = vpack.c.b16 %v938, %v937
          %v955 = vpack.c.b16 %v940, %v939
          %v956 = vpack.c.b16 %v942, %v941
          %v957 = vpack.c.b16 %v944, %v943
          %v958 = vpack.c.b16 %v946, %v945
          %v972 = vsel %vm281, %v843, 0
          %v975 = vsel %vm281, %v845, 0
          %v978 = vsel %vm281, %v847, 0
          %v981 = vsel %vm281, %v849, 0
          %v984 = vsel %vm281, %v851, 0
          %v987 = vsel %vm281, %v853, 0
          %v990 = vsel %vm281, %v855, 0
          %v993 = vsel %vm281, %v857, 0
          %v996 = vsel %vm281, %v859, 0
          %v999 = vsel %vm281, %v861, 0
          %v1002 = vsel %vm281, %v863, 0
          %v1005 = vsel %vm281, %v865, 0
          %v1008 = vsel %vm281, %v867, 0
          %v1011 = vsel %vm281, %v869, 0
          %v1014 = vsel %vm281, %v871, 0
          %v1017 = vsel %vm281, %v873, 0
          %1019 = vmatprep.subr.bf16.mxu0 0
          %1020 = vmatpush1.bf16.msra.mxu0 %v947
          %1021 = vmatprep.subr.bf16.mxu0 0
          %1022 = vmatpush1.bf16.msra.mxu0 %v948
          %1023 = vmatprep.subr.bf16.mxu0 0
          %1024 = vmatpush1.bf16.msra.mxu0 %v949
          %1025 = vmatprep.subr.bf16.mxu0 0
          %1026 = vmatpush1.bf16.msra.mxu0 %v950
          %1027 = vmatprep.subr.bf16.mxu0 0
          %1028 = vmatpush1.bf16.msra.mxu0 %v951
          %1029 = vmatprep.subr.bf16.mxu0 0
          %1030 = vmatpush1.bf16.msra.mxu0 %v952
          %1031 = vmatprep.subr.bf16.mxu0 0
          %1032 = vmatpush1.bf16.msra.mxu0 %v953
          %1033 = vmatprep.subr.bf16.mxu0 0
          %1034 = vmatpush1.bf16.msra.mxu0 %v954
          %1035 = vmatprep.subr.bf16.mxu0 0
          %1036 = vmatpush1.bf16.msra.mxu0 %v955
          %1037 = vmatprep.subr.bf16.mxu0 0
          %1038 = vmatpush1.bf16.msra.mxu0 %v956
          %1039 = vmatprep.subr.bf16.mxu0 0
          %1040 = vmatpush1.bf16.msra.mxu0 %v957
          %1041 = vmatprep.subr.bf16.mxu0 0
          %1042 = vmatpush1.bf16.msra.mxu0 %v958
          %1043 = vmatprep.subr.bf16.mxu0 0
          %1044 = vmatpush1.bf16.msra.mxu0 0
          %1045 = vmatprep.subr.bf16.mxu0 0
          %1046 = vmatpush1.bf16.msra.mxu0 0
          %1047 = vmatprep.subr.bf16.mxu0 0
          %1048 = vmatpush1.bf16.msra.mxu0 0
          %1049 = vmatprep.subr.bf16.mxu0 0
          %1050 = vmatpush1.bf16.msra.mxu0 0
          %1051 = vmatprep.mubr.bf16.mxu0 %v972
          %1052 = vmatmul.mubr.bf16.gmra.mrb[0].mxu0 %v842
          %v1053 = vpop.f32.mrb[0].mxu0
          %v1054 = vadd.f32 0.0, %v1053
          %v1055 = vpop.f32.mrb[0].mxu0
          %v1056 = vpop.f32.mrb[0].mxu0
          %v1057 = vadd.f32 0.0, %v1056
          %v1058 = vpop.f32.mrb[0].mxu0
          %1059 = vmatprep.mubr.bf16.mxu0 %v975
          %1060 = vmatmul.mubr.bf16.gmra.mrb[0].mxu0 %v844
          %v1061 = vpop.f32.mrb[0].mxu0
          %v1062 = vadd.f32 0.0, %v1061
          %v1063 = vpop.f32.mrb[0].mxu0
          %v1064 = vpop.f32.mrb[0].mxu0
          %v1065 = vadd.f32 0.0, %v1064
          %v1066 = vpop.f32.mrb[0].mxu0
          %1067 = vmatprep.mubr.bf16.mxu0 %v978
          %1068 = vmatmul.mubr.bf16.gmra.mrb[0].mxu0 %v846
          %v1069 = vpop.f32.mrb[0].mxu0
          %v1070 = vadd.f32 0.0, %v1069
          %v1071 = vpop.f32.mrb[0].mxu0
          %v1072 = vpop.f32.mrb[0].mxu0
          %v1073 = vadd.f32 0.0, %v1072
          %v1074 = vpop.f32.mrb[0].mxu0
          %1075 = vmatprep.mubr.bf16.mxu0 %v981
          %1076 = vmatmul.mubr.bf16.gmra.mrb[0].mxu0 %v848
          %v1077 = vpop.f32.mrb[0].mxu0
          %v1078 = vadd.f32 0.0, %v1077
          %v1079 = vpop.f32.mrb[0].mxu0
          %v1080 = vpop.f32.mrb[0].mxu0
          %v1081 = vadd.f32 0.0, %v1080
          %v1082 = vpop.f32.mrb[0].mxu0
          %1083 = vmatprep.mubr.bf16.mxu0 %v984
          %1084 = vmatmul.mubr.bf16.gmra.mrb[0].mxu0 %v850
          %v1085 = vpop.f32.mrb[0].mxu0
          %v1086 = vadd.f32 0.0, %v1085
          %v1087 = vpop.f32.mrb[0].mxu0
          %v1088 = vpop.f32.mrb[0].mxu0
          %v1089 = vadd.f32 0.0, %v1088
          %v1090 = vpop.f32.mrb[0].mxu0
          %1091 = vmatprep.mubr.bf16.mxu0 %v987
          %1092 = vmatmul.mubr.bf16.gmra.mrb[0].mxu0 %v852
          %v1093 = vpop.f32.mrb[0].mxu0
          %v1094 = vadd.f32 0.0, %v1093
          %v1095 = vpop.f32.mrb[0].mxu0
          %v1096 = vpop.f32.mrb[0].mxu0
          %v1097 = vadd.f32 0.0, %v1096
          %v1098 = vpop.f32.mrb[0].mxu0
          %1099 = vmatprep.mubr.bf16.mxu0 %v990
          %1100 = vmatmul.mubr.bf16.gmra.mrb[0].mxu0 %v854
          %v1101 = vpop.f32.mrb[0].mxu0
          %v1102 = vadd.f32 0.0, %v1101
          %v1103 = vpop.f32.mrb[0].mxu0
          %v1104 = vpop.f32.mrb[0].mxu0
          %v1105 = vadd.f32 0.0, %v1104
          %v1106 = vpop.f32.mrb[0].mxu0
          %1107 = vmatprep.mubr.bf16.mxu0 %v993
          %1108 = vmatmul.mubr.bf16.gmra.mrb[0].mxu0 %v856
          %v1109 = vpop.f32.mrb[0].mxu0
          %v1110 = vadd.f32 0.0, %v1109
          %v1111 = vpop.f32.mrb[0].mxu0
          %v1112 = vpop.f32.mrb[0].mxu0
          %v1113 = vadd.f32 0.0, %v1112
          %v1114 = vpop.f32.mrb[0].mxu0
          %1115 = vmatprep.mubr.bf16.mxu0 %v996
          %1116 = vmatmul.mubr.bf16.gmra.mrb[0].mxu0 %v858
          %v1117 = vpop.f32.mrb[0].mxu0
          %v1118 = vadd.f32 0.0, %v1117
          %v1119 = vpop.f32.mrb[0].mxu0
          %v1120 = vpop.f32.mrb[0].mxu0
          %v1121 = vadd.f32 0.0, %v1120
          %v1122 = vpop.f32.mrb[0].mxu0
          %1123 = vmatprep.mubr.bf16.mxu0 %v999
          %1124 = vmatmul.mubr.bf16.gmra.mrb[0].mxu0 %v860
          %v1125 = vpop.f32.mrb[0].mxu0
          %v1126 = vadd.f32 0.0, %v1125
          %v1127 = vpop.f32.mrb[0].mxu0
          %v1128 = vpop.f32.mrb[0].mxu0
          %v1129 = vadd.f32 0.0, %v1128
          %v1130 = vpop.f32.mrb[0].mxu0
          %1131 = vmatprep.mubr.bf16.mxu0 %v1002
          %1132 = vmatmul.mubr.bf16.gmra.mrb[0].mxu0 %v862
          %v1133 = vpop.f32.mrb[0].mxu0
          %v1134 = vadd.f32 0.0, %v1133
          %v1135 = vpop.f32.mrb[0].mxu0
          %v1136 = vpop.f32.mrb[0].mxu0
          %v1137 = vadd.f32 0.0, %v1136
          %v1138 = vpop.f32.mrb[0].mxu0
          %1139 = vmatprep.mubr.bf16.mxu0 %v1005
          %1140 = vmatmul.mubr.bf16.gmra.mrb[0].mxu0 %v864
          %v1141 = vpop.f32.mrb[0].mxu0
          %v1142 = vadd.f32 0.0, %v1141
          %v1143 = vpop.f32.mrb[0].mxu0
          %v1144 = vpop.f32.mrb[0].mxu0
          %v1145 = vadd.f32 0.0, %v1144
          %v1146 = vpop.f32.mrb[0].mxu0
          %1147 = vmatprep.mubr.bf16.mxu0 %v1008
          %1148 = vmatmul.mubr.bf16.gmra.mrb[0].mxu0 %v866
          %v1149 = vpop.f32.mrb[0].mxu0
          %v1150 = vadd.f32 0.0, %v1149
          %v1151 = vpop.f32.mrb[0].mxu0
          %v1152 = vpop.f32.mrb[0].mxu0
          %v1153 = vadd.f32 0.0, %v1152
          %v1154 = vpop.f32.mrb[0].mxu0
          %1155 = vmatprep.mubr.bf16.mxu0 %v1011
          %1156 = vmatmul.mubr.bf16.gmra.mrb[0].mxu0 %v868
          %v1157 = vpop.f32.mrb[0].mxu0
          %v1158 = vadd.f32 0.0, %v1157
          %v1159 = vpop.f32.mrb[0].mxu0
          %v1160 = vpop.f32.mrb[0].mxu0
          %v1161 = vadd.f32 0.0, %v1160
          %v1162 = vpop.f32.mrb[0].mxu0
          %1163 = vmatprep.mubr.bf16.mxu0 %v1014
          %1164 = vmatmul.mubr.bf16.gmra.mrb[0].mxu0 %v870
          %v1165 = vpop.f32.mrb[0].mxu0
          %v1166 = vadd.f32 0.0, %v1165
          %v1167 = vpop.f32.mrb[0].mxu0
          %v1168 = vpop.f32.mrb[0].mxu0
          %v1169 = vadd.f32 0.0, %v1168
          %v1170 = vpop.f32.mrb[0].mxu0
          %1171 = vmatprep.mubr.bf16.mxu0 %v1017
          %1172 = vmatmul.mubr.bf16.gmra.mrb[0].mxu0 %v872
          %v1173 = vpop.f32.mrb[0].mxu0
          %v1174 = vadd.f32 0.0, %v1173
          %v1175 = vpop.f32.mrb[0].mxu0
          %v1176 = vpop.f32.mrb[0].mxu0
          %v1177 = vadd.f32 0.0, %v1176
          %v1178 = vpop.f32.mrb[0].mxu0
          %1179 = vdwg.mxu0
          %v1204 = vunpack.c.l.b16 %v814
          %v1205 = vunpack.c.l.b16 %v815
          %v1206 = vunpack.c.l.b16 %v816
          %v1207 = vunpack.c.l.b16 %v817
          %v1208 = vunpack.c.l.b16 %v818
          %v1209 = vunpack.c.l.b16 %v819
          %v1210 = vunpack.c.l.b16 %v820
          %v1211 = vunpack.c.l.b16 %v821
          %v1212 = vunpack.c.l.b16 %v822
          %v1213 = vunpack.c.l.b16 %v823
          %v1214 = vunpack.c.l.b16 %v824
          %v1215 = vunpack.c.l.b16 %v825
          %v1216 = vunpack.c.l.b16 %v826
          %v1217 = vunpack.c.l.b16 %v827
          %v1218 = vunpack.c.l.b16 %v828
          %v1219 = vunpack.c.l.b16 %v829
          %v1220 = vunpack.c.l.b16 %v830
          %v1221 = vunpack.c.l.b16 %v831
          %v1222 = vunpack.c.l.b16 %v832
          %v1223 = vunpack.c.l.b16 %v833
          %v1224 = vunpack.c.l.b16 %v834
          %v1225 = vunpack.c.l.b16 %v835
          %v1226 = vunpack.c.l.b16 %v836
          %v1227 = vunpack.c.l.b16 %v837
          %v1228 = vpack.c.b16 %v1205, %v1204
          %v1229 = vpack.c.b16 %v1207, %v1206
          %v1230 = vpack.c.b16 %v1209, %v1208
          %v1231 = vpack.c.b16 %v1211, %v1210
          %v1232 = vpack.c.b16 %v1213, %v1212
          %v1233 = vpack.c.b16 %v1215, %v1214
          %v1234 = vpack.c.b16 %v1217, %v1216
          %v1235 = vpack.c.b16 %v1219, %v1218
          %v1236 = vpack.c.b16 %v1221, %v1220
          %v1237 = vpack.c.b16 %v1223, %v1222
          %v1238 = vpack.c.b16 %v1225, %v1224
          %v1239 = vpack.c.b16 %v1227, %v1226
          %v1253 = vsel %vm281, %v783, 0
          %v1256 = vsel %vm281, %v785, 0
          %v1259 = vsel %vm281, %v787, 0
          %v1262 = vsel %vm281, %v789, 0
          %v1265 = vsel %vm281, %v791, 0
          %v1268 = vsel %vm281, %v793, 0
          %v1271 = vsel %vm281, %v795, 0
          %v1274 = vsel %vm281, %v797, 0
          %v1277 = vsel %vm281, %v799, 0
          %v1280 = vsel %vm281, %v801, 0
          %v1283 = vsel %vm281, %v803, 0
          %v1286 = vsel %vm281, %v805, 0
          %v1289 = vsel %vm281, %v807, 0
          %v1292 = vsel %vm281, %v809, 0
          %v1295 = vsel %vm281, %v811, 0
          %v1298 = vsel %vm281, %v813, 0
          %1300 = vmatprep.subr.bf16.mxu0 0
          %1301 = vmatpush1.bf16.msra.mxu0 %v1228
          %1302 = vmatprep.subr.bf16.mxu0 0
          %1303 = vmatpush1.bf16.msra.mxu0 %v1229
          %1304 = vmatprep.subr.bf16.mxu0 0
          %1305 = vmatpush1.bf16.msra.mxu0 %v1230
          %1306 = vmatprep.subr.bf16.mxu0 0
          %1307 = vmatpush1.bf16.msra.mxu0 %v1231
          %1308 = vmatprep.subr.bf16.mxu0 0
          %1309 = vmatpush1.bf16.msra.mxu0 %v1232
          %1310 = vmatprep.subr.bf16.mxu0 0
          %1311 = vmatpush1.bf16.msra.mxu0 %v1233
          %1312 = vmatprep.subr.bf16.mxu0 0
          %1313 = vmatpush1.bf16.msra.mxu0 %v1234
          %1314 = vmatprep.subr.bf16.mxu0 0
          %1315 = vmatpush1.bf16.msra.mxu0 %v1235
          %1316 = vmatprep.subr.bf16.mxu0 0
          %1317 = vmatpush1.bf16.msra.mxu0 %v1236
          %1318 = vmatprep.subr.bf16.mxu0 0
          %1319 = vmatpush1.bf16.msra.mxu0 %v1237
          %1320 = vmatprep.subr.bf16.mxu0 0
          %1321 = vmatpush1.bf16.msra.mxu0 %v1238
          %1322 = vmatprep.subr.bf16.mxu0 0
          %1323 = vmatpush1.bf16.msra.mxu0 %v1239
          %1324 = vmatprep.subr.bf16.mxu0 0
          %1325 = vmatpush1.bf16.msra.mxu0 0
          %1326 = vmatprep.subr.bf16.mxu0 0
          %1327 = vmatpush1.bf16.msra.mxu0 0
          %1328 = vmatprep.subr.bf16.mxu0 0
          %1329 = vmatpush1.bf16.msra.mxu0 0
          %1330 = vmatprep.subr.bf16.mxu0 0
          %1331 = vmatpush1.bf16.msra.mxu0 0
          %1332 = vmatprep.mubr.bf16.mxu0 %v1253
          %1333 = vmatmul.mubr.bf16.gmra.mrb[0].mxu0 %v782
          %v1334 = vpop.f32.mrb[0].mxu0
          %v1335 = vadd.f32 %v1054, %v1334
          %v1336 = vpop.f32.mrb[0].mxu0
          %v1337 = vpop.f32.mrb[0].mxu0
          %v1338 = vadd.f32 %v1057, %v1337
          %v1339 = vpop.f32.mrb[0].mxu0
          %1340 = vmatprep.mubr.bf16.mxu0 %v1256
          %1341 = vmatmul.mubr.bf16.gmra.mrb[0].mxu0 %v784
          %v1342 = vpop.f32.mrb[0].mxu0
          %v1343 = vadd.f32 %v1062, %v1342
          %v1344 = vpop.f32.mrb[0].mxu0
          %v1345 = vpop.f32.mrb[0].mxu0
          %v1346 = vadd.f32 %v1065, %v1345
          %v1347 = vpop.f32.mrb[0].mxu0
          %1348 = vmatprep.mubr.bf16.mxu0 %v1259
          %1349 = vmatmul.mubr.bf16.gmra.mrb[0].mxu0 %v786
          %v1350 = vpop.f32.mrb[0].mxu0
          %v1351 = vadd.f32 %v1070, %v1350
          %v1352 = vpop.f32.mrb[0].mxu0
          %v1353 = vpop.f32.mrb[0].mxu0
          %v1354 = vadd.f32 %v1073, %v1353
          %v1355 = vpop.f32.mrb[0].mxu0
          %1356 = vmatprep.mubr.bf16.mxu0 %v1262
          %1357 = vmatmul.mubr.bf16.gmra.mrb[0].mxu0 %v788
          %v1358 = vpop.f32.mrb[0].mxu0
          %v1359 = vadd.f32 %v1078, %v1358
          %v1360 = vpop.f32.mrb[0].mxu0
          %v1361 = vpop.f32.mrb[0].mxu0
          %v1362 = vadd.f32 %v1081, %v1361
          %v1363 = vpop.f32.mrb[0].mxu0
          %1364 = vmatprep.mubr.bf16.mxu0 %v1265
          %1365 = vmatmul.mubr.bf16.gmra.mrb[0].mxu0 %v790
          %v1366 = vpop.f32.mrb[0].mxu0
          %v1367 = vadd.f32 %v1086, %v1366
          %v1368 = vpop.f32.mrb[0].mxu0
          %v1369 = vpop.f32.mrb[0].mxu0
          %v1370 = vadd.f32 %v1089, %v1369
          %v1371 = vpop.f32.mrb[0].mxu0
          %1372 = vmatprep.mubr.bf16.mxu0 %v1268
          %1373 = vmatmul.mubr.bf16.gmra.mrb[0].mxu0 %v792
          %v1374 = vpop.f32.mrb[0].mxu0
          %v1375 = vadd.f32 %v1094, %v1374
          %v1376 = vpop.f32.mrb[0].mxu0
          %v1377 = vpop.f32.mrb[0].mxu0
          %v1378 = vadd.f32 %v1097, %v1377
          %v1379 = vpop.f32.mrb[0].mxu0
          %1380 = vmatprep.mubr.bf16.mxu0 %v1271
          %1381 = vmatmul.mubr.bf16.gmra.mrb[0].mxu0 %v794
          %v1382 = vpop.f32.mrb[0].mxu0
          %v1383 = vadd.f32 %v1102, %v1382
          %v1384 = vpop.f32.mrb[0].mxu0
          %v1385 = vpop.f32.mrb[0].mxu0
          %v1386 = vadd.f32 %v1105, %v1385
          %v1387 = vpop.f32.mrb[0].mxu0
          %1388 = vmatprep.mubr.bf16.mxu0 %v1274
          %1389 = vmatmul.mubr.bf16.gmra.mrb[0].mxu0 %v796
          %v1390 = vpop.f32.mrb[0].mxu0
          %v1391 = vadd.f32 %v1110, %v1390
          %v1392 = vpop.f32.mrb[0].mxu0
          %v1393 = vpop.f32.mrb[0].mxu0
          %v1394 = vadd.f32 %v1113, %v1393
          %v1395 = vpop.f32.mrb[0].mxu0
          %1396 = vmatprep.mubr.bf16.mxu0 %v1277
          %1397 = vmatmul.mubr.bf16.gmra.mrb[0].mxu0 %v798
          %v1398 = vpop.f32.mrb[0].mxu0
          %v1399 = vadd.f32 %v1118, %v1398
          %v1400 = vpop.f32.mrb[0].mxu0
          %v1401 = vpop.f32.mrb[0].mxu0
          %v1402 = vadd.f32 %v1121, %v1401
          %v1403 = vpop.f32.mrb[0].mxu0
          %1404 = vmatprep.mubr.bf16.mxu0 %v1280
          %1405 = vmatmul.mubr.bf16.gmra.mrb[0].mxu0 %v800
          %v1406 = vpop.f32.mrb[0].mxu0
          %v1407 = vadd.f32 %v1126, %v1406
          %v1408 = vpop.f32.mrb[0].mxu0
          %v1409 = vpop.f32.mrb[0].mxu0
          %v1410 = vadd.f32 %v1129, %v1409
          %v1411 = vpop.f32.mrb[0].mxu0
          %1412 = vmatprep.mubr.bf16.mxu0 %v1283
          %1413 = vmatmul.mubr.bf16.gmra.mrb[0].mxu0 %v802
          %v1414 = vpop.f32.mrb[0].mxu0
          %v1415 = vadd.f32 %v1134, %v1414
          %v1416 = vpop.f32.mrb[0].mxu0
          %v1417 = vpop.f32.mrb[0].mxu0
          %v1418 = vadd.f32 %v1137, %v1417
          %v1419 = vpop.f32.mrb[0].mxu0
          %1420 = vmatprep.mubr.bf16.mxu0 %v1286
          %1421 = vmatmul.mubr.bf16.gmra.mrb[0].mxu0 %v804
          %v1422 = vpop.f32.mrb[0].mxu0
          %v1423 = vadd.f32 %v1142, %v1422
          %v1424 = vpop.f32.mrb[0].mxu0
          %v1425 = vpop.f32.mrb[0].mxu0
          %v1426 = vadd.f32 %v1145, %v1425
          %v1427 = vpop.f32.mrb[0].mxu0
          %1428 = vmatprep.mubr.bf16.mxu0 %v1289
          %1429 = vmatmul.mubr.bf16.gmra.mrb[0].mxu0 %v806
          %v1430 = vpop.f32.mrb[0].mxu0
          %v1431 = vadd.f32 %v1150, %v1430
          %v1432 = vpop.f32.mrb[0].mxu0
          %v1433 = vpop.f32.mrb[0].mxu0
          %v1434 = vadd.f32 %v1153, %v1433
          %v1435 = vpop.f32.mrb[0].mxu0
          %1436 = vmatprep.mubr.bf16.mxu0 %v1292
          %1437 = vmatmul.mubr.bf16.gmra.mrb[0].mxu0 %v808
          %v1438 = vpop.f32.mrb[0].mxu0
          %v1439 = vadd.f32 %v1158, %v1438
          %v1440 = vpop.f32.mrb[0].mxu0
          %v1441 = vpop.f32.mrb[0].mxu0
          %v1442 = vadd.f32 %v1161, %v1441
          %v1443 = vpop.f32.mrb[0].mxu0
          %1444 = vmatprep.mubr.bf16.mxu0 %v1295
          %1445 = vmatmul.mubr.bf16.gmra.mrb[0].mxu0 %v810
          %v1446 = vpop.f32.mrb[0].mxu0
          %v1447 = vadd.f32 %v1166, %v1446
          %v1448 = vpop.f32.mrb[0].mxu0
          %v1449 = vpop.f32.mrb[0].mxu0
          %v1450 = vadd.f32 %v1169, %v1449
          %v1451 = vpop.f32.mrb[0].mxu0
          %1452 = vmatprep.mubr.bf16.mxu0 %v1298
          %1453 = vmatmul.mubr.bf16.gmra.mrb[0].mxu0 %v812
          %v1454 = vpop.f32.mrb[0].mxu0
          %v1455 = vadd.f32 %v1174, %v1454
          %v1456 = vpop.f32.mrb[0].mxu0
          %v1457 = vpop.f32.mrb[0].mxu0
          %v1458 = vadd.f32 %v1177, %v1457
          %v1459 = vpop.f32.mrb[0].mxu0
          %1460 = vdwg.mxu0
          %s1461 = sadd.s32 %s778, 2
          %s1462 = smul.u32 %s1461, 2
          %s1463 = smul.addr %s1462, 8
          %s1464 = scalar_lea.vmem [#allocation2], %s1463
          %v1465 = vld [vmem:[%s1464] sm:$0xff]
          %v1466 = vld [vmem:[%s1464 + $0x8] sm:$0xff]
          %v1467 = vld [vmem:[%s1464 + $0x10] sm:$0xff]
          %v1468 = vld [vmem:[%s1464 + $0x18] sm:$0xff]
          %v1469 = vld [vmem:[%s1464 + $0x20] sm:$0xff]
          %v1470 = vld [vmem:[%s1464 + $0x28] sm:$0xff]
          %v1471 = vld [vmem:[%s1464 + $0x30] sm:$0xff]
          %v1472 = vld [vmem:[%s1464 + $0x38] sm:$0xff]
          %v1473 = vld [vmem:[%s1464 + $0x40] sm:$0xff]
          %v1474 = vld [vmem:[%s1464 + $0x48] sm:$0xff]
          %v1475 = vld [vmem:[%s1464 + $0x50] sm:$0xff]
          %v1476 = vld [vmem:[%s1464 + $0x58] sm:$0xff]
          %v1477 = vld [vmem:[%s1464 + $0x60] sm:$0xff]
          %v1478 = vld [vmem:[%s1464 + $0x68] sm:$0xff]
          %v1479 = vld [vmem:[%s1464 + $0x70] sm:$0xff]
          %v1480 = vld [vmem:[%s1464 + $0x78] sm:$0xff]
          %v1481 = vld [vmem:[%s1464 + $0x80] sm:$0xff]
          %v1482 = vld [vmem:[%s1464 + $0x88] sm:$0xff]
          %v1483 = vld [vmem:[%s1464 + $0x90] sm:$0xff]
          %v1484 = vld [vmem:[%s1464 + $0x98] sm:$0xff]
          %v1485 = vld [vmem:[%s1464 + $0xa0] sm:$0xff]
          %v1486 = vld [vmem:[%s1464 + $0xa8] sm:$0xff]
          %v1487 = vld [vmem:[%s1464 + $0xb0] sm:$0xff]
          %v1488 = vld [vmem:[%s1464 + $0xb8] sm:$0xff]
          %v1489 = vld [vmem:[%s1464 + $0xc0] sm:$0xff]
          %v1490 = vld [vmem:[%s1464 + $0xc8] sm:$0xff]
          %v1491 = vld [vmem:[%s1464 + $0xd0] sm:$0xff]
          %v1492 = vld [vmem:[%s1464 + $0xd8] sm:$0xff]
          %v1493 = vld [vmem:[%s1464 + $0xe0] sm:$0xff]
          %v1494 = vld [vmem:[%s1464 + $0xe8] sm:$0xff]
          %v1495 = vld [vmem:[%s1464 + $0xf0] sm:$0xff]
          %v1496 = vld [vmem:[%s1464 + $0xf8] sm:$0xff]
          %s1497 = scalar_lea.vmem %s1, 192
          %v1498 = vld [vmem:[%s1497] sm:$0xf]
          %v1499 = vld [vmem:[%s1497 + $0x4] sm:$0xf]
          %v1500 = vld [vmem:[%s1497 + $0x8] sm:$0xf]
          %v1501 = vld [vmem:[%s1497 + $0xc] sm:$0xf]
          %v1502 = vld [vmem:[%s1497 + $0x10] sm:$0xf]
          %v1503 = vld [vmem:[%s1497 + $0x14] sm:$0xf]
          %v1504 = vld [vmem:[%s1497 + $0x18] sm:$0xf]
          %v1505 = vld [vmem:[%s1497 + $0x1c] sm:$0xf]
          %v1506 = vld [vmem:[%s1497 + $0x20] sm:$0xf]
          %v1507 = vld [vmem:[%s1497 + $0x24] sm:$0xf]
          %v1508 = vld [vmem:[%s1497 + $0x28] sm:$0xf]
          %v1509 = vld [vmem:[%s1497 + $0x2c] sm:$0xf]
          %v1510 = vld [vmem:[%s1497 + $0x30] sm:$0xf]
          %v1511 = vld [vmem:[%s1497 + $0x34] sm:$0xf]
          %v1512 = vld [vmem:[%s1497 + $0x38] sm:$0xf]
          %v1513 = vld [vmem:[%s1497 + $0x3c] sm:$0xf]
          %v1514 = vld [vmem:[%s1497 + $0x40] sm:$0xf]
          %v1515 = vld [vmem:[%s1497 + $0x44] sm:$0xf]
          %v1516 = vld [vmem:[%s1497 + $0x48] sm:$0xf]
          %v1517 = vld [vmem:[%s1497 + $0x4c] sm:$0xf]
          %v1518 = vld [vmem:[%s1497 + $0x50] sm:$0xf]
          %v1519 = vld [vmem:[%s1497 + $0x54] sm:$0xf]
          %v1520 = vld [vmem:[%s1497 + $0x58] sm:$0xf]
          %v1521 = vld [vmem:[%s1497 + $0x5c] sm:$0xf]
          %v1546 = vunpack.c.l.b16 %v1498
          %v1547 = vunpack.c.l.b16 %v1499
          %v1548 = vunpack.c.l.b16 %v1500
          %v1549 = vunpack.c.l.b16 %v1501
          %v1550 = vunpack.c.l.b16 %v1502
          %v1551 = vunpack.c.l.b16 %v1503
          %v1552 = vunpack.c.l.b16 %v1504
          %v1553 = vunpack.c.l.b16 %v1505
          %v1554 = vunpack.c.l.b16 %v1506
          %v1555 = vunpack.c.l.b16 %v1507
          %v1556 = vunpack.c.l.b16 %v1508
          %v1557 = vunpack.c.l.b16 %v1509
          %v1558 = vunpack.c.l.b16 %v1510
          %v1559 = vunpack.c.l.b16 %v1511
          %v1560 = vunpack.c.l.b16 %v1512
          %v1561 = vunpack.c.l.b16 %v1513
          %v1562 = vunpack.c.l.b16 %v1514
          %v1563 = vunpack.c.l.b16 %v1515
          %v1564 = vunpack.c.l.b16 %v1516
          %v1565 = vunpack.c.l.b16 %v1517
          %v1566 = vunpack.c.l.b16 %v1518
          %v1567 = vunpack.c.l.b16 %v1519
          %v1568 = vunpack.c.l.b16 %v1520
          %v1569 = vunpack.c.l.b16 %v1521
          %v1570 = vpack.c.b16 %v1547, %v1546
          %v1571 = vpack.c.b16 %v1549, %v1548
          %v1572 = vpack.c.b16 %v1551, %v1550
          %v1573 = vpack.c.b16 %v1553, %v1552
          %v1574 = vpack.c.b16 %v1555, %v1554
          %v1575 = vpack.c.b16 %v1557, %v1556
          %v1576 = vpack.c.b16 %v1559, %v1558
          %v1577 = vpack.c.b16 %v1561, %v1560
          %v1578 = vpack.c.b16 %v1563, %v1562
          %v1579 = vpack.c.b16 %v1565, %v1564
          %v1580 = vpack.c.b16 %v1567, %v1566
          %v1581 = vpack.c.b16 %v1569, %v1568
          %v1595 = vsel %vm281, %v1466, 0
          %v1598 = vsel %vm281, %v1468, 0
          %v1601 = vsel %vm281, %v1470, 0
          %v1604 = vsel %vm281, %v1472, 0
          %v1607 = vsel %vm281, %v1474, 0
          %v1610 = vsel %vm281, %v1476, 0
          %v1613 = vsel %vm281, %v1478, 0
          %v1616 = vsel %vm281, %v1480, 0
          %v1619 = vsel %vm281, %v1482, 0
          %v1622 = vsel %vm281, %v1484, 0
          %v1625 = vsel %vm281, %v1486, 0
          %v1628 = vsel %vm281, %v1488, 0
          %v1631 = vsel %vm281, %v1490, 0
          %v1634 = vsel %vm281, %v1492, 0
          %v1637 = vsel %vm281, %v1494, 0
          %v1640 = vsel %vm281, %v1496, 0
          %1642 = vmatprep.subr.bf16.mxu0 0
          %1643 = vmatpush1.bf16.msra.mxu0 %v1570
          %1644 = vmatprep.subr.bf16.mxu0 0
          %1645 = vmatpush1.bf16.msra.mxu0 %v1571
          %1646 = vmatprep.subr.bf16.mxu0 0
          %1647 = vmatpush1.bf16.msra.mxu0 %v1572
          %1648 = vmatprep.subr.bf16.mxu0 0
          %1649 = vmatpush1.bf16.msra.mxu0 %v1573
          %1650 = vmatprep.subr.bf16.mxu0 0
          %1651 = vmatpush1.bf16.msra.mxu0 %v1574
          %1652 = vmatprep.subr.bf16.mxu0 0
          %1653 = vmatpush1.bf16.msra.mxu0 %v1575
          %1654 = vmatprep.subr.bf16.mxu0 0
          %1655 = vmatpush1.bf16.msra.mxu0 %v1576
          %1656 = vmatprep.subr.bf16.mxu0 0
          %1657 = vmatpush1.bf16.msra.mxu0 %v1577
          %1658 = vmatprep.subr.bf16.mxu0 0
          %1659 = vmatpush1.bf16.msra.mxu0 %v1578
          %1660 = vmatprep.subr.bf16.mxu0 0
          %1661 = vmatpush1.bf16.msra.mxu0 %v1579
          %1662 = vmatprep.subr.bf16.mxu0 0
          %1663 = vmatpush1.bf16.msra.mxu0 %v1580
          %1664 = vmatprep.subr.bf16.mxu0 0
          %1665 = vmatpush1.bf16.msra.mxu0 %v1581
          %1666 = vmatprep.subr.bf16.mxu0 0
          %1667 = vmatpush1.bf16.msra.mxu0 0
          %1668 = vmatprep.subr.bf16.mxu0 0
          %1669 = vmatpush1.bf16.msra.mxu0 0
          %1670 = vmatprep.subr.bf16.mxu0 0
          %1671 = vmatpush1.bf16.msra.mxu0 0
          %1672 = vmatprep.subr.bf16.mxu0 0
          %1673 = vmatpush1.bf16.msra.mxu0 0
          %1674 = vmatprep.mubr.bf16.mxu0 %v1595
          %1675 = vmatmul.mubr.bf16.gmra.mrb[0].mxu0 %v1465
          %v1676 = vpop.f32.mrb[0].mxu0
          %v1677 = vadd.f32 0.0, %v1676
          %v1678 = vpop.f32.mrb[0].mxu0
          %v1679 = vpop.f32.mrb[0].mxu0
          %v1680 = vadd.f32 0.0, %v1679
          %v1681 = vpop.f32.mrb[0].mxu0
          %1682 = vmatprep.mubr.bf16.mxu0 %v1598
          %1683 = vmatmul.mubr.bf16.gmra.mrb[0].mxu0 %v1467
          %v1684 = vpop.f32.mrb[0].mxu0
          %v1685 = vadd.f32 0.0, %v1684
          %v1686 = vpop.f32.mrb[0].mxu0
          %v1687 = vpop.f32.mrb[0].mxu0
          %v1688 = vadd.f32 0.0, %v1687
          %v1689 = vpop.f32.mrb[0].mxu0
          %1690 = vmatprep.mubr.bf16.mxu0 %v1601
          %1691 = vmatmul.mubr.bf16.gmra.mrb[0].mxu0 %v1469
          %v1692 = vpop.f32.mrb[0].mxu0
          %v1693 = vadd.f32 0.0, %v1692
          %v1694 = vpop.f32.mrb[0].mxu0
          %v1695 = vpop.f32.mrb[0].mxu0
          %v1696 = vadd.f32 0.0, %v1695
          %v1697 = vpop.f32.mrb[0].mxu0
          %1698 = vmatprep.mubr.bf16.mxu0 %v1604
          %1699 = vmatmul.mubr.bf16.gmra.mrb[0].mxu0 %v1471
          %v1700 = vpop.f32.mrb[0].mxu0
          %v1701 = vadd.f32 0.0, %v1700
          %v1702 = vpop.f32.mrb[0].mxu0
          %v1703 = vpop.f32.mrb[0].mxu0
          %v1704 = vadd.f32 0.0, %v1703
          %v1705 = vpop.f32.mrb[0].mxu0
          %1706 = vmatprep.mubr.bf16.mxu0 %v1607
          %1707 = vmatmul.mubr.bf16.gmra.mrb[0].mxu0 %v1473
          %v1708 = vpop.f32.mrb[0].mxu0
          %v1709 = vadd.f32 0.0, %v1708
          %v1710 = vpop.f32.mrb[0].mxu0
          %v1711 = vpop.f32.mrb[0].mxu0
          %v1712 = vadd.f32 0.0, %v1711
          %v1713 = vpop.f32.mrb[0].mxu0
          %1714 = vmatprep.mubr.bf16.mxu0 %v1610
          %1715 = vmatmul.mubr.bf16.gmra.mrb[0].mxu0 %v1475
          %v1716 = vpop.f32.mrb[0].mxu0
          %v1717 = vadd.f32 0.0, %v1716
          %v1718 = vpop.f32.mrb[0].mxu0
          %v1719 = vpop.f32.mrb[0].mxu0
          %v1720 = vadd.f32 0.0, %v1719
          %v1721 = vpop.f32.mrb[0].mxu0
          %1722 = vmatprep.mubr.bf16.mxu0 %v1613
          %1723 = vmatmul.mubr.bf16.gmra.mrb[0].mxu0 %v1477
          %v1724 = vpop.f32.mrb[0].mxu0
          %v1725 = vadd.f32 0.0, %v1724
          %v1726 = vpop.f32.mrb[0].mxu0
          %v1727 = vpop.f32.mrb[0].mxu0
          %v1728 = vadd.f32 0.0, %v1727
          %v1729 = vpop.f32.mrb[0].mxu0
          %1730 = vmatprep.mubr.bf16.mxu0 %v1616
          %1731 = vmatmul.mubr.bf16.gmra.mrb[0].mxu0 %v1479
          %v1732 = vpop.f32.mrb[0].mxu0
          %v1733 = vadd.f32 0.0, %v1732
          %v1734 = vpop.f32.mrb[0].mxu0
          %v1735 = vpop.f32.mrb[0].mxu0
          %v1736 = vadd.f32 0.0, %v1735
          %v1737 = vpop.f32.mrb[0].mxu0
          %1738 = vmatprep.mubr.bf16.mxu0 %v1619
          %1739 = vmatmul.mubr.bf16.gmra.mrb[0].mxu0 %v1481
          %v1740 = vpop.f32.mrb[0].mxu0
          %v1741 = vadd.f32 0.0, %v1740
          %v1742 = vpop.f32.mrb[0].mxu0
          %v1743 = vpop.f32.mrb[0].mxu0
          %v1744 = vadd.f32 0.0, %v1743
          %v1745 = vpop.f32.mrb[0].mxu0
          %1746 = vmatprep.mubr.bf16.mxu0 %v1622
          %1747 = vmatmul.mubr.bf16.gmra.mrb[0].mxu0 %v1483
          %v1748 = vpop.f32.mrb[0].mxu0
          %v1749 = vadd.f32 0.0, %v1748
          %v1750 = vpop.f32.mrb[0].mxu0
          %v1751 = vpop.f32.mrb[0].mxu0
          %v1752 = vadd.f32 0.0, %v1751
          %v1753 = vpop.f32.mrb[0].mxu0
          %1754 = vmatprep.mubr.bf16.mxu0 %v1625
          %1755 = vmatmul.mubr.bf16.gmra.mrb[0].mxu0 %v1485
          %v1756 = vpop.f32.mrb[0].mxu0
          %v1757 = vadd.f32 0.0, %v1756
          %v1758 = vpop.f32.mrb[0].mxu0
          %v1759 = vpop.f32.mrb[0].mxu0
          %v1760 = vadd.f32 0.0, %v1759
          %v1761 = vpop.f32.mrb[0].mxu0
          %1762 = vmatprep.mubr.bf16.mxu0 %v1628
          %1763 = vmatmul.mubr.bf16.gmra.mrb[0].mxu0 %v1487
          %v1764 = vpop.f32.mrb[0].mxu0
          %v1765 = vadd.f32 0.0, %v1764
          %v1766 = vpop.f32.mrb[0].mxu0
          %v1767 = vpop.f32.mrb[0].mxu0
          %v1768 = vadd.f32 0.0, %v1767
          %v1769 = vpop.f32.mrb[0].mxu0
          %1770 = vmatprep.mubr.bf16.mxu0 %v1631
          %1771 = vmatmul.mubr.bf16.gmra.mrb[0].mxu0 %v1489
          %v1772 = vpop.f32.mrb[0].mxu0
          %v1773 = vadd.f32 0.0, %v1772
          %v1774 = vpop.f32.mrb[0].mxu0
          %v1775 = vpop.f32.mrb[0].mxu0
          %v1776 = vadd.f32 0.0, %v1775
          %v1777 = vpop.f32.mrb[0].mxu0
          %1778 = vmatprep.mubr.bf16.mxu0 %v1634
          %1779 = vmatmul.mubr.bf16.gmra.mrb[0].mxu0 %v1491
          %v1780 = vpop.f32.mrb[0].mxu0
          %v1781 = vadd.f32 0.0, %v1780
          %v1782 = vpop.f32.mrb[0].mxu0
          %v1783 = vpop.f32.mrb[0].mxu0
          %v1784 = vadd.f32 0.0, %v1783
          %v1785 = vpop.f32.mrb[0].mxu0
          %1786 = vmatprep.mubr.bf16.mxu0 %v1637
          %1787 = vmatmul.mubr.bf16.gmra.mrb[0].mxu0 %v1493
          %v1788 = vpop.f32.mrb[0].mxu0
          %v1789 = vadd.f32 0.0, %v1788
          %v1790 = vpop.f32.mrb[0].mxu0
          %v1791 = vpop.f32.mrb[0].mxu0
          %v1792 = vadd.f32 0.0, %v1791
          %v1793 = vpop.f32.mrb[0].mxu0
          %1794 = vmatprep.mubr.bf16.mxu0 %v1640
          %1795 = vmatmul.mubr.bf16.gmra.mrb[0].mxu0 %v1495
          %v1796 = vpop.f32.mrb[0].mxu0
          %v1797 = vadd.f32 0.0, %v1796
          %v1798 = vpop.f32.mrb[0].mxu0
          %v1799 = vpop.f32.mrb[0].mxu0
          %v1800 = vadd.f32 0.0, %v1799
          %v1801 = vpop.f32.mrb[0].mxu0
          %1802 = vdwg.mxu0
          %v1803 = vadd.f32 %v1335, %v1677
          %v1804 = vadd.f32 %v1338, %v1680
          %v1805 = vadd.f32 %v1343, %v1685
          %v1806 = vadd.f32 %v1346, %v1688
          %v1807 = vadd.f32 %v1351, %v1693
          %v1808 = vadd.f32 %v1354, %v1696
          %v1809 = vadd.f32 %v1359, %v1701
          %v1810 = vadd.f32 %v1362, %v1704
          %v1811 = vadd.f32 %v1367, %v1709
          %v1812 = vadd.f32 %v1370, %v1712
          %v1813 = vadd.f32 %v1375, %v1717
          %v1814 = vadd.f32 %v1378, %v1720
          %v1815 = vadd.f32 %v1383, %v1725
          %v1816 = vadd.f32 %v1386, %v1728
          %v1817 = vadd.f32 %v1391, %v1733
          %v1818 = vadd.f32 %v1394, %v1736
          %v1819 = vadd.f32 %v1399, %v1741
          %v1820 = vadd.f32 %v1402, %v1744
          %v1821 = vadd.f32 %v1407, %v1749
          %v1822 = vadd.f32 %v1410, %v1752
          %v1823 = vadd.f32 %v1415, %v1757
          %v1824 = vadd.f32 %v1418, %v1760
          %v1825 = vadd.f32 %v1423, %v1765
          %v1826 = vadd.f32 %v1426, %v1768
          %v1827 = vadd.f32 %v1431, %v1773
          %v1828 = vadd.f32 %v1434, %v1776
          %v1829 = vadd.f32 %v1439, %v1781
          %v1830 = vadd.f32 %v1442, %v1784
          %v1831 = vadd.f32 %v1447, %v1789
          %v1832 = vadd.f32 %v1450, %v1792
          %v1833 = vadd.f32 %v1455, %v1797
          %v1834 = vadd.f32 %v1458, %v1800
          %v1836 = vlaneseq
          %v1837 = vshrl.u32 %v1836, 7
          %v1838 = vsub.s32 0, %v1837
          %v1839 = vrot.slane %v291, %v1838
          %v1841 = vmul.f32 %v1803, %v1839
          %v1842 = vmul.f32 %v1804, %v1839
          %v1843 = vmul.f32 %v1805, %v1839
          %v1844 = vmul.f32 %v1806, %v1839
          %v1845 = vmul.f32 %v1807, %v1839
          %v1846 = vmul.f32 %v1808, %v1839
          %v1847 = vmul.f32 %v1809, %v1839
          %v1848 = vmul.f32 %v1810, %v1839
          %v1849 = vmul.f32 %v1811, %v1839
          %v1850 = vmul.f32 %v1812, %v1839
          %v1851 = vmul.f32 %v1813, %v1839
          %v1852 = vmul.f32 %v1814, %v1839
          %v1853 = vmul.f32 %v1815, %v1839
          %v1854 = vmul.f32 %v1816, %v1839
          %v1855 = vmul.f32 %v1817, %v1839
          %v1856 = vmul.f32 %v1818, %v1839
          %v1857 = vmul.f32 %v1819, %v1839
          %v1858 = vmul.f32 %v1820, %v1839
          %v1859 = vmul.f32 %v1821, %v1839
          %v1860 = vmul.f32 %v1822, %v1839
          %v1861 = vmul.f32 %v1823, %v1839
          %v1862 = vmul.f32 %v1824, %v1839
          %v1863 = vmul.f32 %v1825, %v1839
          %v1864 = vmul.f32 %v1826, %v1839
          %v1865 = vmul.f32 %v1827, %v1839
          %v1866 = vmul.f32 %v1828, %v1839
          %v1867 = vmul.f32 %v1829, %v1839
          %v1868 = vmul.f32 %v1830, %v1839
          %v1869 = vmul.f32 %v1831, %v1839
          %v1870 = vmul.f32 %v1832, %v1839
          %v1871 = vmul.f32 %v1833, %v1839
          %v1872 = vmul.f32 %v1834, %v1839
          %v1874 = vlaneseq
          %v1875 = vshrl.u32 %v1874, 7
          %v1876 = vsub.s32 0, %v1875
          %v1877 = vrot.slane %v292, %v1876
          %v1879 = vadd.f32 %v1841, %v1877
          %v1880 = vadd.f32 %v1842, %v1877
          %v1881 = vadd.f32 %v1843, %v1877
          %v1882 = vadd.f32 %v1844, %v1877
          %v1883 = vadd.f32 %v1845, %v1877
          %v1884 = vadd.f32 %v1846, %v1877
          %v1885 = vadd.f32 %v1847, %v1877
          %v1886 = vadd.f32 %v1848, %v1877
          %v1887 = vadd.f32 %v1849, %v1877
          %v1888 = vadd.f32 %v1850, %v1877
          %v1889 = vadd.f32 %v1851, %v1877
          %v1890 = vadd.f32 %v1852, %v1877
          %v1891 = vadd.f32 %v1853, %v1877
          %v1892 = vadd.f32 %v1854, %v1877
          %v1893 = vadd.f32 %v1855, %v1877
          %v1894 = vadd.f32 %v1856, %v1877
          %v1895 = vadd.f32 %v1857, %v1877
          %v1896 = vadd.f32 %v1858, %v1877
          %v1897 = vadd.f32 %v1859, %v1877
          %v1898 = vadd.f32 %v1860, %v1877
          %v1899 = vadd.f32 %v1861, %v1877
          %v1900 = vadd.f32 %v1862, %v1877
          %v1901 = vadd.f32 %v1863, %v1877
          %v1902 = vadd.f32 %v1864, %v1877
          %v1903 = vadd.f32 %v1865, %v1877
          %v1904 = vadd.f32 %v1866, %v1877
          %v1905 = vadd.f32 %v1867, %v1877
          %v1906 = vadd.f32 %v1868, %v1877
          %v1907 = vadd.f32 %v1869, %v1877
          %v1908 = vadd.f32 %v1870, %v1877
          %v1909 = vadd.f32 %v1871, %v1877
          %v1910 = vadd.f32 %v1872, %v1877
          %v1911 = vmax.f32 %v1879, 0.0
          %v1912 = vmax.f32 %v1880, 0.0
          %v1913 = vmax.f32 %v1881, 0.0
          %v1914 = vmax.f32 %v1882, 0.0
          %v1915 = vmax.f32 %v1883, 0.0
          %v1916 = vmax.f32 %v1884, 0.0
          %v1917 = vmax.f32 %v1885, 0.0
          %v1918 = vmax.f32 %v1886, 0.0
          %v1919 = vmax.f32 %v1887, 0.0
          %v1920 = vmax.f32 %v1888, 0.0
          %v1921 = vmax.f32 %v1889, 0.0
          %v1922 = vmax.f32 %v1890, 0.0
          %v1923 = vmax.f32 %v1891, 0.0
          %v1924 = vmax.f32 %v1892, 0.0
          %v1925 = vmax.f32 %v1893, 0.0
          %v1926 = vmax.f32 %v1894, 0.0
          %v1927 = vmax.f32 %v1895, 0.0
          %v1928 = vmax.f32 %v1896, 0.0
          %v1929 = vmax.f32 %v1897, 0.0
          %v1930 = vmax.f32 %v1898, 0.0
          %v1931 = vmax.f32 %v1899, 0.0
          %v1932 = vmax.f32 %v1900, 0.0
          %v1933 = vmax.f32 %v1901, 0.0
          %v1934 = vmax.f32 %v1902, 0.0
          %v1935 = vmax.f32 %v1903, 0.0
          %v1936 = vmax.f32 %v1904, 0.0
          %v1937 = vmax.f32 %v1905, 0.0
          %v1938 = vmax.f32 %v1906, 0.0
          %v1939 = vmax.f32 %v1907, 0.0
          %v1940 = vmax.f32 %v1908, 0.0
          %v1941 = vmax.f32 %v1909, 0.0
          %v1942 = vmax.f32 %v1910, 0.0
          %v1943 = vpack.c.bf16 %v1912, %v1911
          %v1944 = vpack.c.bf16 %v1914, %v1913
          %v1945 = vpack.c.bf16 %v1916, %v1915
          %v1946 = vpack.c.bf16 %v1918, %v1917
          %v1947 = vpack.c.bf16 %v1920, %v1919
          %v1948 = vpack.c.bf16 %v1922, %v1921
          %v1949 = vpack.c.bf16 %v1924, %v1923
          %v1950 = vpack.c.bf16 %v1926, %v1925
          %v1951 = vpack.c.bf16 %v1928, %v1927
          %v1952 = vpack.c.bf16 %v1930, %v1929
          %v1953 = vpack.c.bf16 %v1932, %v1931
          %v1954 = vpack.c.bf16 %v1934, %v1933
          %v1955 = vpack.c.bf16 %v1936, %v1935
          %v1956 = vpack.c.bf16 %v1938, %v1937
          %v1957 = vpack.c.bf16 %v1940, %v1939
          %v1958 = vpack.c.bf16 %v1942, %v1941
          %v1960 = vshrl.u32 %v1943, 16
          %v1962 = vrot.slane %v1960, 7
          %v1963 = vshll.u32 %v1943, 16
          %v1965 = vor.u32 %v1962, %v1963
          %v1967 = vshrl.u32 %v1944, 16
          %v1969 = vrot.slane %v1967, 7
          %v1970 = vshll.u32 %v1944, 16
          %v1972 = vor.u32 %v1969, %v1970
          %v1974 = vshrl.u32 %v1945, 16
          %v1976 = vrot.slane %v1974, 7
          %v1977 = vshll.u32 %v1945, 16
          %v1979 = vor.u32 %v1976, %v1977
          %v1981 = vshrl.u32 %v1946, 16
          %v1983 = vrot.slane %v1981, 7
          %v1984 = vshll.u32 %v1946, 16
          %v1986 = vor.u32 %v1983, %v1984
          %v1988 = vshrl.u32 %v1947, 16
          %v1990 = vrot.slane %v1988, 7
          %v1991 = vshll.u32 %v1947, 16
          %v1993 = vor.u32 %v1990, %v1991
          %v1995 = vshrl.u32 %v1948, 16
          %v1997 = vrot.slane %v1995, 7
          %v1998 = vshll.u32 %v1948, 16
          %v2000 = vor.u32 %v1997, %v1998
          %v2002 = vshrl.u32 %v1949, 16
          %v2004 = vrot.slane %v2002, 7
          %v2005 = vshll.u32 %v1949, 16
          %v2007 = vor.u32 %v2004, %v2005
          %v2009 = vshrl.u32 %v1950, 16
          %v2011 = vrot.slane %v2009, 7
          %v2012 = vshll.u32 %v1950, 16
          %v2014 = vor.u32 %v2011, %v2012
          %v2016 = vshrl.u32 %v1951, 16
          %v2018 = vrot.slane %v2016, 7
          %v2019 = vshll.u32 %v1951, 16
          %v2021 = vor.u32 %v2018, %v2019
          %v2023 = vshrl.u32 %v1952, 16
          %v2025 = vrot.slane %v2023, 7
          %v2026 = vshll.u32 %v1952, 16
          %v2028 = vor.u32 %v2025, %v2026
          %v2030 = vshrl.u32 %v1953, 16
          %v2032 = vrot.slane %v2030, 7
          %v2033 = vshll.u32 %v1953, 16
          %v2035 = vor.u32 %v2032, %v2033
          %v2037 = vshrl.u32 %v1954, 16
          %v2039 = vrot.slane %v2037, 7
          %v2040 = vshll.u32 %v1954, 16
          %v2042 = vor.u32 %v2039, %v2040
          %v2044 = vshrl.u32 %v1955, 16
          %v2046 = vrot.slane %v2044, 7
          %v2047 = vshll.u32 %v1955, 16
          %v2049 = vor.u32 %v2046, %v2047
          %v2051 = vshrl.u32 %v1956, 16
          %v2053 = vrot.slane %v2051, 7
          %v2054 = vshll.u32 %v1956, 16
          %v2056 = vor.u32 %v2053, %v2054
          %v2058 = vshrl.u32 %v1957, 16
          %v2060 = vrot.slane %v2058, 7
          %v2061 = vshll.u32 %v1957, 16
          %v2063 = vor.u32 %v2060, %v2061
          %v2065 = vshrl.u32 %v1958, 16
          %v2067 = vrot.slane %v2065, 7
          %v2068 = vshll.u32 %v1958, 16
          %v2070 = vor.u32 %v2067, %v2068
          %vm2087 = vcmask 1040384
          %vm2088 = vsmask.f32 256
          %vm2089 = vmand %vm2087, %vm2088
          %v2090 = vsel %vm2089, 0, %v1965
          %v2091 = vsel %vm2089, 0, %v1972
          %v2092 = vsel %vm2089, 0, %v1979
          %v2093 = vsel %vm2089, 0, %v1986
          %v2094 = vsel %vm2089, 0, %v1993
          %v2095 = vsel %vm2089, 0, %v2000
          %v2096 = vsel %vm2089, 0, %v2007
          %v2097 = vsel %vm2089, 0, %v2014
          %v2098 = vsel %vm2089, 0, %v2021
          %v2099 = vsel %vm2089, 0, %v2028
          %v2100 = vsel %vm2089, 0, %v2035
          %v2101 = vsel %vm2089, 0, %v2042
          %v2102 = vsel %vm2089, 0, %v2049
          %v2103 = vsel %vm2089, 0, %v2056
          %v2104 = vsel %vm2089, 0, %v2063
          %v2105 = vsel %vm2089, 0, %v2070
          %v2106 = vrot.slane %v1963, 1
          %v2107 = vor.u32 %v1960, %v2106
          %v2108 = vrot.slane %v1970, 1
          %v2109 = vor.u32 %v1967, %v2108
          %v2110 = vrot.slane %v1977, 1
          %v2111 = vor.u32 %v1974, %v2110
          %v2112 = vrot.slane %v1984, 1
          %v2113 = vor.u32 %v1981, %v2112
          %v2114 = vrot.slane %v1991, 1
          %v2115 = vor.u32 %v1988, %v2114
          %v2116 = vrot.slane %v1998, 1
          %v2117 = vor.u32 %v1995, %v2116
          %v2118 = vrot.slane %v2005, 1
          %v2119 = vor.u32 %v2002, %v2118
          %v2120 = vrot.slane %v2012, 1
          %v2121 = vor.u32 %v2009, %v2120
          %v2122 = vrot.slane %v2019, 1
          %v2123 = vor.u32 %v2016, %v2122
          %v2124 = vrot.slane %v2026, 1
          %v2125 = vor.u32 %v2023, %v2124
          %v2126 = vrot.slane %v2033, 1
          %v2127 = vor.u32 %v2030, %v2126
          %v2128 = vrot.slane %v2040, 1
          %v2129 = vor.u32 %v2037, %v2128
          %v2130 = vrot.slane %v2047, 1
          %v2131 = vor.u32 %v2044, %v2130
          %v2132 = vrot.slane %v2054, 1
          %v2133 = vor.u32 %v2051, %v2132
          %v2134 = vrot.slane %v2061, 1
          %v2135 = vor.u32 %v2058, %v2134
          %v2136 = vrot.slane %v2068, 1
          %v2137 = vor.u32 %v2065, %v2136
          %vm2154 = vcmask 1047552
          %vm2155 = vsmask.f32 7424
          %vm2156 = vmand %vm2154, %vm2155
          %v2157 = vsel %vm2156, %v2107, 0
          %v2158 = vsel %vm2156, %v2109, 0
          %v2159 = vsel %vm2156, %v2111, 0
          %v2160 = vsel %vm2156, %v2113, 0
          %v2161 = vsel %vm2156, %v2115, 0
          %v2162 = vsel %vm2156, %v2117, 0
          %v2163 = vsel %vm2156, %v2119, 0
          %v2164 = vsel %vm2156, %v2121, 0
          %v2165 = vsel %vm2156, %v2123, 0
          %v2166 = vsel %vm2156, %v2125, 0
          %v2167 = vsel %vm2156, %v2127, 0
          %v2168 = vsel %vm2156, %v2129, 0
          %v2169 = vsel %vm2156, %v2131, 0
          %v2170 = vsel %vm2156, %v2133, 0
          %v2171 = vsel %vm2156, %v2135, 0
          %v2172 = vsel %vm2156, %v2137, 0
          %2189 = vrot.lane.b32.xlu0 %v1943, 64
          %v2190 = vpop.permute.xlu0 %2189
          %2191 = vrot.lane.b32.xlu0 %v1944, 64
          %v2192 = vpop.permute.xlu0 %2191
          %2193 = vrot.lane.b32.xlu0 %v1945, 64
          %v2194 = vpop.permute.xlu0 %2193
          %2195 = vrot.lane.b32.xlu0 %v1946, 64
          %v2196 = vpop.permute.xlu0 %2195
          %2197 = vrot.lane.b32.xlu0 %v1947, 64
          %v2198 = vpop.permute.xlu0 %2197
          %2199 = vrot.lane.b32.xlu0 %v1948, 64
          %v2200 = vpop.permute.xlu0 %2199
          %2201 = vrot.lane.b32.xlu0 %v1949, 64
          %v2202 = vpop.permute.xlu0 %2201
          %2203 = vrot.lane.b32.xlu0 %v1950, 64
          %v2204 = vpop.permute.xlu0 %2203
          %2205 = vrot.lane.b32.xlu0 %v1951, 64
          %v2206 = vpop.permute.xlu0 %2205
          %2207 = vrot.lane.b32.xlu0 %v1952, 64
          %v2208 = vpop.permute.xlu0 %2207
          %2209 = vrot.lane.b32.xlu0 %v1953, 64
          %v2210 = vpop.permute.xlu0 %2209
          %2211 = vrot.lane.b32.xlu0 %v1954, 64
          %v2212 = vpop.permute.xlu0 %2211
          %2213 = vrot.lane.b32.xlu0 %v1955, 64
          %v2214 = vpop.permute.xlu0 %2213
          %2215 = vrot.lane.b32.xlu0 %v1956, 64
          %v2216 = vpop.permute.xlu0 %2215
          %2217 = vrot.lane.b32.xlu0 %v1957, 64
          %v2218 = vpop.permute.xlu0 %2217
          %2219 = vrot.lane.b32.xlu0 %v1958, 64
          %v2220 = vpop.permute.xlu0 %2219
          %v2223 = vsel %vm281, %v2090, %v2190
          %v2227 = vsel %vm281, %v2091, %v2192
          %v2231 = vsel %vm281, %v2092, %v2194
          %v2235 = vsel %vm281, %v2093, %v2196
          %v2239 = vsel %vm281, %v2094, %v2198
          %v2243 = vsel %vm281, %v2095, %v2200
          %v2247 = vsel %vm281, %v2096, %v2202
          %v2251 = vsel %vm281, %v2097, %v2204
          %v2255 = vsel %vm281, %v2098, %v2206
          %v2259 = vsel %vm281, %v2099, %v2208
          %v2263 = vsel %vm281, %v2100, %v2210
          %v2267 = vsel %vm281, %v2101, %v2212
          %v2271 = vsel %vm281, %v2102, %v2214
          %v2275 = vsel %vm281, %v2103, %v2216
          %v2279 = vsel %vm281, %v2104, %v2218
          %v2283 = vsel %vm281, %v2105, %v2220
          %s2285 = smul.addr %s839, 8
          %s2286 = scalar_lea.vmem [#allocation3], %s2285
          %2287 = vst [vmem:[%s2286] sm:$0xff] %v2223
          %2288 = vst.msk [vmem:[%s2286 + $0x8] sm:$0xff] %vm281, %v2157
          %2289 = vst [vmem:[%s2286 + $0x10] sm:$0xff] %v2227
          %2290 = vst.msk [vmem:[%s2286 + $0x18] sm:$0xff] %vm281, %v2158
          %2291 = vst [vmem:[%s2286 + $0x20] sm:$0xff] %v2231
          %2292 = vst.msk [vmem:[%s2286 + $0x28] sm:$0xff] %vm281, %v2159
          %2293 = vst [vmem:[%s2286 + $0x30] sm:$0xff] %v2235
          %2294 = vst.msk [vmem:[%s2286 + $0x38] sm:$0xff] %vm281, %v2160
          %2295 = vst [vmem:[%s2286 + $0x40] sm:$0xff] %v2239
          %2296 = vst.msk [vmem:[%s2286 + $0x48] sm:$0xff] %vm281, %v2161
          %2297 = vst [vmem:[%s2286 + $0x50] sm:$0xff] %v2243
          %2298 = vst.msk [vmem:[%s2286 + $0x58] sm:$0xff] %vm281, %v2162
          %2299 = vst [vmem:[%s2286 + $0x60] sm:$0xff] %v2247
          %2300 = vst.msk [vmem:[%s2286 + $0x68] sm:$0xff] %vm281, %v2163
          %2301 = vst [vmem:[%s2286 + $0x70] sm:$0xff] %v2251
          %2302 = vst.msk [vmem:[%s2286 + $0x78] sm:$0xff] %vm281, %v2164
          %2303 = vst [vmem:[%s2286 + $0x80] sm:$0xff] %v2255
          %2304 = vst.msk [vmem:[%s2286 + $0x88] sm:$0xff] %vm281, %v2165
          %2305 = vst [vmem:[%s2286 + $0x90] sm:$0xff] %v2259
          %2306 = vst.msk [vmem:[%s2286 + $0x98] sm:$0xff] %vm281, %v2166
          %2307 = vst [vmem:[%s2286 + $0xa0] sm:$0xff] %v2263
          %2308 = vst.msk [vmem:[%s2286 + $0xa8] sm:$0xff] %vm281, %v2167
          %2309 = vst [vmem:[%s2286 + $0xb0] sm:$0xff] %v2267
          %2310 = vst.msk [vmem:[%s2286 + $0xb8] sm:$0xff] %vm281, %v2168
          %2311 = vst [vmem:[%s2286 + $0xc0] sm:$0xff] %v2271
          %2312 = vst.msk [vmem:[%s2286 + $0xc8] sm:$0xff] %vm281, %v2169
          %2313 = vst [vmem:[%s2286 + $0xd0] sm:$0xff] %v2275
          %2314 = vst.msk [vmem:[%s2286 + $0xd8] sm:$0xff] %vm281, %v2170
          %2315 = vst [vmem:[%s2286 + $0xe0] sm:$0xff] %v2279
          %2316 = vst.msk [vmem:[%s2286 + $0xe8] sm:$0xff] %vm281, %v2171
          %2317 = vst [vmem:[%s2286 + $0xf0] sm:$0xff] %v2283
          %2318 = vst.msk [vmem:[%s2286 + $0xf8] sm:$0xff] %vm281, %v2172
        $region63: #{basic_block_pallas.1} parent=52 // pred_fallthru
          _
        %p2319 = scmp.ge.s32.totalorder %s296, 2
        // Predicated region
        $region64: #{basic_block_pallas.1} parent=52 // pred_check
          %p2320 = pneg %p2319
        $region65: #{basic_block_pallas.1} parent=52 // pred_check_branch
          %2322 = sbr.rel (%p2320) target = $region67
        $region66: #{basic_block_pallas.1} parent=52 // pred_region
          %s2323 = ssub.s32 %s296, 2
          %s2324 = smul.u32 %s2323, 16
          %p2325 = scmp.lt.s32.totalorder %s2324, 0
          %s2326 = scalar_select %p2325, %s2324, 0
          %s2327 = smul.u32 %s2326, 2
          %s2328 = smul.addr %s2327, 8
          %s2329 = scalar_lea.vmem [#allocation3], %s2328
          %v2330 = vld [vmem:[%s2329] sm:$0xff]
          %v2331 = vld [vmem:[%s2329 + $0x8] sm:$0xff]
          %v2332 = vld [vmem:[%s2329 + $0x10] sm:$0xff]
          %v2333 = vld [vmem:[%s2329 + $0x18] sm:$0xff]
          %v2334 = vld [vmem:[%s2329 + $0x20] sm:$0xff]
          %v2335 = vld [vmem:[%s2329 + $0x28] sm:$0xff]
          %v2336 = vld [vmem:[%s2329 + $0x30] sm:$0xff]
          %v2337 = vld [vmem:[%s2329 + $0x38] sm:$0xff]
          %v2338 = vld [vmem:[%s2329 + $0x40] sm:$0xff]
          %v2339 = vld [vmem:[%s2329 + $0x48] sm:$0xff]
          %v2340 = vld [vmem:[%s2329 + $0x50] sm:$0xff]
          %v2341 = vld [vmem:[%s2329 + $0x58] sm:$0xff]
          %v2342 = vld [vmem:[%s2329 + $0x60] sm:$0xff]
          %v2343 = vld [vmem:[%s2329 + $0x68] sm:$0xff]
          %v2344 = vld [vmem:[%s2329 + $0x70] sm:$0xff]
          %v2345 = vld [vmem:[%s2329 + $0x78] sm:$0xff]
          %v2346 = vld [vmem:[%s2329 + $0x80] sm:$0xff]
          %v2347 = vld [vmem:[%s2329 + $0x88] sm:$0xff]
          %v2348 = vld [vmem:[%s2329 + $0x90] sm:$0xff]
          %v2349 = vld [vmem:[%s2329 + $0x98] sm:$0xff]
          %v2350 = vld [vmem:[%s2329 + $0xa0] sm:$0xff]
          %v2351 = vld [vmem:[%s2329 + $0xa8] sm:$0xff]
          %v2352 = vld [vmem:[%s2329 + $0xb0] sm:$0xff]
          %v2353 = vld [vmem:[%s2329 + $0xb8] sm:$0xff]
          %v2354 = vld [vmem:[%s2329 + $0xc0] sm:$0xff]
          %v2355 = vld [vmem:[%s2329 + $0xc8] sm:$0xff]
          %v2356 = vld [vmem:[%s2329 + $0xd0] sm:$0xff]
          %v2357 = vld [vmem:[%s2329 + $0xd8] sm:$0xff]
          %v2358 = vld [vmem:[%s2329 + $0xe0] sm:$0xff]
          %v2359 = vld [vmem:[%s2329 + $0xe8] sm:$0xff]
          %v2360 = vld [vmem:[%s2329 + $0xf0] sm:$0xff]
          %v2361 = vld [vmem:[%s2329 + $0xf8] sm:$0xff]
          %v2362 = vld [vmem:[%s2] sm:$0xf]
          %v2363 = vld [vmem:[%s2 + $0x4] sm:$0xf]
          %v2364 = vld [vmem:[%s2 + $0x8] sm:$0xf]
          %v2365 = vld [vmem:[%s2 + $0xc] sm:$0xf]
          %v2366 = vld [vmem:[%s2 + $0x10] sm:$0xf]
          %v2367 = vld [vmem:[%s2 + $0x14] sm:$0xf]
          %v2368 = vld [vmem:[%s2 + $0x18] sm:$0xf]
          %v2369 = vld [vmem:[%s2 + $0x1c] sm:$0xf]
          %v2370 = vld [vmem:[%s2 + $0x20] sm:$0xf]
          %v2371 = vld [vmem:[%s2 + $0x24] sm:$0xf]
          %v2372 = vld [vmem:[%s2 + $0x28] sm:$0xf]
          %v2373 = vld [vmem:[%s2 + $0x2c] sm:$0xf]
          %v2374 = vld [vmem:[%s2 + $0x30] sm:$0xf]
          %v2375 = vld [vmem:[%s2 + $0x34] sm:$0xf]
          %v2376 = vld [vmem:[%s2 + $0x38] sm:$0xf]
          %v2377 = vld [vmem:[%s2 + $0x3c] sm:$0xf]
          %v2378 = vld [vmem:[%s2 + $0x40] sm:$0xf]
          %v2379 = vld [vmem:[%s2 + $0x44] sm:$0xf]
          %v2380 = vld [vmem:[%s2 + $0x48] sm:$0xf]
          %v2381 = vld [vmem:[%s2 + $0x4c] sm:$0xf]
          %v2382 = vld [vmem:[%s2 + $0x50] sm:$0xf]
          %v2383 = vld [vmem:[%s2 + $0x54] sm:$0xf]
          %v2384 = vld [vmem:[%s2 + $0x58] sm:$0xf]
          %v2385 = vld [vmem:[%s2 + $0x5c] sm:$0xf]
          %s2386 = sadd.s32 %s2326, 1
          %s2387 = smul.u32 %s2386, 2
          %s2388 = smul.addr %s2387, 8
          %s2389 = scalar_lea.vmem [#allocation3], %s2388
          %v2390 = vld [vmem:[%s2389] sm:$0xff]
          %v2391 = vld [vmem:[%s2389 + $0x8] sm:$0xff]
          %v2392 = vld [vmem:[%s2389 + $0x10] sm:$0xff]
          %v2393 = vld [vmem:[%s2389 + $0x18] sm:$0xff]
          %v2394 = vld [vmem:[%s2389 + $0x20] sm:$0xff]
          %v2395 = vld [vmem:[%s2389 + $0x28] sm:$0xff]
          %v2396 = vld [vmem:[%s2389 + $0x30] sm:$0xff]
          %v2397 = vld [vmem:[%s2389 + $0x38] sm:$0xff]
          %v2398 = vld [vmem:[%s2389 + $0x40] sm:$0xff]
          %v2399 = vld [vmem:[%s2389 + $0x48] sm:$0xff]
          %v2400 = vld [vmem:[%s2389 + $0x50] sm:$0xff]
          %v2401 = vld [vmem:[%s2389 + $0x58] sm:$0xff]
          %v2402 = vld [vmem:[%s2389 + $0x60] sm:$0xff]
          %v2403 = vld [vmem:[%s2389 + $0x68] sm:$0xff]
          %v2404 = vld [vmem:[%s2389 + $0x70] sm:$0xff]
          %v2405 = vld [vmem:[%s2389 + $0x78] sm:$0xff]
          %v2406 = vld [vmem:[%s2389 + $0x80] sm:$0xff]
          %v2407 = vld [vmem:[%s2389 + $0x88] sm:$0xff]
          %v2408 = vld [vmem:[%s2389 + $0x90] sm:$0xff]
          %v2409 = vld [vmem:[%s2389 + $0x98] sm:$0xff]
          %v2410 = vld [vmem:[%s2389 + $0xa0] sm:$0xff]
          %v2411 = vld [vmem:[%s2389 + $0xa8] sm:$0xff]
          %v2412 = vld [vmem:[%s2389 + $0xb0] sm:$0xff]
          %v2413 = vld [vmem:[%s2389 + $0xb8] sm:$0xff]
          %v2414 = vld [vmem:[%s2389 + $0xc0] sm:$0xff]
          %v2415 = vld [vmem:[%s2389 + $0xc8] sm:$0xff]
          %v2416 = vld [vmem:[%s2389 + $0xd0] sm:$0xff]
          %v2417 = vld [vmem:[%s2389 + $0xd8] sm:$0xff]
          %v2418 = vld [vmem:[%s2389 + $0xe0] sm:$0xff]
          %v2419 = vld [vmem:[%s2389 + $0xe8] sm:$0xff]
          %v2420 = vld [vmem:[%s2389 + $0xf0] sm:$0xff]
          %v2421 = vld [vmem:[%s2389 + $0xf8] sm:$0xff]
          %s2422 = scalar_lea.vmem %s2, 96
          %v2423 = vld [vmem:[%s2422] sm:$0xf]
          %v2424 = vld [vmem:[%s2422 + $0x4] sm:$0xf]
          %v2425 = vld [vmem:[%s2422 + $0x8] sm:$0xf]
          %v2426 = vld [vmem:[%s2422 + $0xc] sm:$0xf]
          %v2427 = vld [vmem:[%s2422 + $0x10] sm:$0xf]
          %v2428 = vld [vmem:[%s2422 + $0x14] sm:$0xf]
          %v2429 = vld [vmem:[%s2422 + $0x18] sm:$0xf]
          %v2430 = vld [vmem:[%s2422 + $0x1c] sm:$0xf]
          %v2431 = vld [vmem:[%s2422 + $0x20] sm:$0xf]
          %v2432 = vld [vmem:[%s2422 + $0x24] sm:$0xf]
          %v2433 = vld [vmem:[%s2422 + $0x28] sm:$0xf]
          %v2434 = vld [vmem:[%s2422 + $0x2c] sm:$0xf]
          %v2435 = vld [vmem:[%s2422 + $0x30] sm:$0xf]
          %v2436 = vld [vmem:[%s2422 + $0x34] sm:$0xf]
          %v2437 = vld [vmem:[%s2422 + $0x38] sm:$0xf]
          %v2438 = vld [vmem:[%s2422 + $0x3c] sm:$0xf]
          %v2439 = vld [vmem:[%s2422 + $0x40] sm:$0xf]
          %v2440 = vld [vmem:[%s2422 + $0x44] sm:$0xf]
          %v2441 = vld [vmem:[%s2422 + $0x48] sm:$0xf]
          %v2442 = vld [vmem:[%s2422 + $0x4c] sm:$0xf]
          %v2443 = vld [vmem:[%s2422 + $0x50] sm:$0xf]
          %v2444 = vld [vmem:[%s2422 + $0x54] sm:$0xf]
          %v2445 = vld [vmem:[%s2422 + $0x58] sm:$0xf]
          %v2446 = vld [vmem:[%s2422 + $0x5c] sm:$0xf]
          %v2471 = vunpack.c.l.b16 %v2423
          %v2472 = vunpack.c.l.b16 %v2424
          %v2473 = vunpack.c.l.b16 %v2425
          %v2474 = vunpack.c.l.b16 %v2426
          %v2475 = vunpack.c.l.b16 %v2427
          %v2476 = vunpack.c.l.b16 %v2428
          %v2477 = vunpack.c.l.b16 %v2429
          %v2478 = vunpack.c.l.b16 %v2430
          %v2479 = vunpack.c.l.b16 %v2431
          %v2480 = vunpack.c.l.b16 %v2432
          %v2481 = vunpack.c.l.b16 %v2433
          %v2482 = vunpack.c.l.b16 %v2434
          %v2483 = vunpack.c.l.b16 %v2435
          %v2484 = vunpack.c.l.b16 %v2436
          %v2485 = vunpack.c.l.b16 %v2437
          %v2486 = vunpack.c.l.b16 %v2438
          %v2487 = vunpack.c.l.b16 %v2439
          %v2488 = vunpack.c.l.b16 %v2440
          %v2489 = vunpack.c.l.b16 %v2441
          %v2490 = vunpack.c.l.b16 %v2442
          %v2491 = vunpack.c.l.b16 %v2443
          %v2492 = vunpack.c.l.b16 %v2444
          %v2493 = vunpack.c.l.b16 %v2445
          %v2494 = vunpack.c.l.b16 %v2446
          %v2495 = vpack.c.b16 %v2472, %v2471
          %v2496 = vpack.c.b16 %v2474, %v2473
          %v2497 = vpack.c.b16 %v2476, %v2475
          %v2498 = vpack.c.b16 %v2478, %v2477
          %v2499 = vpack.c.b16 %v2480, %v2479
          %v2500 = vpack.c.b16 %v2482, %v2481
          %v2501 = vpack.c.b16 %v2484, %v2483
          %v2502 = vpack.c.b16 %v2486, %v2485
          %v2503 = vpack.c.b16 %v2488, %v2487
          %v2504 = vpack.c.b16 %v2490, %v2489
          %v2505 = vpack.c.b16 %v2492, %v2491
          %v2506 = vpack.c.b16 %v2494, %v2493
          %v2520 = vsel %vm281, %v2391, 0
          %v2523 = vsel %vm281, %v2393, 0
          %v2526 = vsel %vm281, %v2395, 0
          %v2529 = vsel %vm281, %v2397, 0
          %v2532 = vsel %vm281, %v2399, 0
          %v2535 = vsel %vm281, %v2401, 0
          %v2538 = vsel %vm281, %v2403, 0
          %v2541 = vsel %vm281, %v2405, 0
          %v2544 = vsel %vm281, %v2407, 0
          %v2547 = vsel %vm281, %v2409, 0
          %v2550 = vsel %vm281, %v2411, 0
          %v2553 = vsel %vm281, %v2413, 0
          %v2556 = vsel %vm281, %v2415, 0
          %v2559 = vsel %vm281, %v2417, 0
          %v2562 = vsel %vm281, %v2419, 0
          %v2565 = vsel %vm281, %v2421, 0
          %2567 = vmatprep.subr.bf16.mxu0 0
          %2568 = vmatpush1.bf16.msra.mxu0 %v2495
          %2569 = vmatprep.subr.bf16.mxu0 0
          %2570 = vmatpush1.bf16.msra.mxu0 %v2496
          %2571 = vmatprep.subr.bf16.mxu0 0
          %2572 = vmatpush1.bf16.msra.mxu0 %v2497
          %2573 = vmatprep.subr.bf16.mxu0 0
          %2574 = vmatpush1.bf16.msra.mxu0 %v2498
          %2575 = vmatprep.subr.bf16.mxu0 0
          %2576 = vmatpush1.bf16.msra.mxu0 %v2499
          %2577 = vmatprep.subr.bf16.mxu0 0
          %2578 = vmatpush1.bf16.msra.mxu0 %v2500
          %2579 = vmatprep.subr.bf16.mxu0 0
          %2580 = vmatpush1.bf16.msra.mxu0 %v2501
          %2581 = vmatprep.subr.bf16.mxu0 0
          %2582 = vmatpush1.bf16.msra.mxu0 %v2502
          %2583 = vmatprep.subr.bf16.mxu0 0
          %2584 = vmatpush1.bf16.msra.mxu0 %v2503
          %2585 = vmatprep.subr.bf16.mxu0 0
          %2586 = vmatpush1.bf16.msra.mxu0 %v2504
          %2587 = vmatprep.subr.bf16.mxu0 0
          %2588 = vmatpush1.bf16.msra.mxu0 %v2505
          %2589 = vmatprep.subr.bf16.mxu0 0
          %2590 = vmatpush1.bf16.msra.mxu0 %v2506
          %2591 = vmatprep.subr.bf16.mxu0 0
          %2592 = vmatpush1.bf16.msra.mxu0 0
          %2593 = vmatprep.subr.bf16.mxu0 0
          %2594 = vmatpush1.bf16.msra.mxu0 0
          %2595 = vmatprep.subr.bf16.mxu0 0
          %2596 = vmatpush1.bf16.msra.mxu0 0
          %2597 = vmatprep.subr.bf16.mxu0 0
          %2598 = vmatpush1.bf16.msra.mxu0 0
          %2599 = vmatprep.mubr.bf16.mxu0 %v2520
          %2600 = vmatmul.mubr.bf16.gmra.mrb[0].mxu0 %v2390
          %v2601 = vpop.f32.mrb[0].mxu0
          %v2602 = vadd.f32 0.0, %v2601
          %v2603 = vpop.f32.mrb[0].mxu0
          %v2604 = vpop.f32.mrb[0].mxu0
          %v2605 = vadd.f32 0.0, %v2604
          %v2606 = vpop.f32.mrb[0].mxu0
          %2607 = vmatprep.mubr.bf16.mxu0 %v2523
          %2608 = vmatmul.mubr.bf16.gmra.mrb[0].mxu0 %v2392
          %v2609 = vpop.f32.mrb[0].mxu0
          %v2610 = vadd.f32 0.0, %v2609
          %v2611 = vpop.f32.mrb[0].mxu0
          %v2612 = vpop.f32.mrb[0].mxu0
          %v2613 = vadd.f32 0.0, %v2612
          %v2614 = vpop.f32.mrb[0].mxu0
          %2615 = vmatprep.mubr.bf16.mxu0 %v2526
          %2616 = vmatmul.mubr.bf16.gmra.mrb[0].mxu0 %v2394
          %v2617 = vpop.f32.mrb[0].mxu0
          %v2618 = vadd.f32 0.0, %v2617
          %v2619 = vpop.f32.mrb[0].mxu0
          %v2620 = vpop.f32.mrb[0].mxu0
          %v2621 = vadd.f32 0.0, %v2620
          %v2622 = vpop.f32.mrb[0].mxu0
          %2623 = vmatprep.mubr.bf16.mxu0 %v2529
          %2624 = vmatmul.mubr.bf16.gmra.mrb[0].mxu0 %v2396
          %v2625 = vpop.f32.mrb[0].mxu0
          %v2626 = vadd.f32 0.0, %v2625
          %v2627 = vpop.f32.mrb[0].mxu0
          %v2628 = vpop.f32.mrb[0].mxu0
          %v2629 = vadd.f32 0.0, %v2628
          %v2630 = vpop.f32.mrb[0].mxu0
          %2631 = vmatprep.mubr.bf16.mxu0 %v2532
          %2632 = vmatmul.mubr.bf16.gmra.mrb[0].mxu0 %v2398
          %v2633 = vpop.f32.mrb[0].mxu0
          %v2634 = vadd.f32 0.0, %v2633
          %v2635 = vpop.f32.mrb[0].mxu0
          %v2636 = vpop.f32.mrb[0].mxu0
          %v2637 = vadd.f32 0.0, %v2636
          %v2638 = vpop.f32.mrb[0].mxu0
          %2639 = vmatprep.mubr.bf16.mxu0 %v2535
          %2640 = vmatmul.mubr.bf16.gmra.mrb[0].mxu0 %v2400
          %v2641 = vpop.f32.mrb[0].mxu0
          %v2642 = vadd.f32 0.0, %v2641
          %v2643 = vpop.f32.mrb[0].mxu0
          %v2644 = vpop.f32.mrb[0].mxu0
          %v2645 = vadd.f32 0.0, %v2644
          %v2646 = vpop.f32.mrb[0].mxu0
          %2647 = vmatprep.mubr.bf16.mxu0 %v2538
          %2648 = vmatmul.mubr.bf16.gmra.mrb[0].mxu0 %v2402
          %v2649 = vpop.f32.mrb[0].mxu0
          %v2650 = vadd.f32 0.0, %v2649
          %v2651 = vpop.f32.mrb[0].mxu0
          %v2652 = vpop.f32.mrb[0].mxu0
          %v2653 = vadd.f32 0.0, %v2652
          %v2654 = vpop.f32.mrb[0].mxu0
          %2655 = vmatprep.mubr.bf16.mxu0 %v2541
          %2656 = vmatmul.mubr.bf16.gmra.mrb[0].mxu0 %v2404
          %v2657 = vpop.f32.mrb[0].mxu0
          %v2658 = vadd.f32 0.0, %v2657
          %v2659 = vpop.f32.mrb[0].mxu0
          %v2660 = vpop.f32.mrb[0].mxu0
          %v2661 = vadd.f32 0.0, %v2660
          %v2662 = vpop.f32.mrb[0].mxu0
          %2663 = vmatprep.mubr.bf16.mxu0 %v2544
          %2664 = vmatmul.mubr.bf16.gmra.mrb[0].mxu0 %v2406
          %v2665 = vpop.f32.mrb[0].mxu0
          %v2666 = vadd.f32 0.0, %v2665
          %v2667 = vpop.f32.mrb[0].mxu0
          %v2668 = vpop.f32.mrb[0].mxu0
          %v2669 = vadd.f32 0.0, %v2668
          %v2670 = vpop.f32.mrb[0].mxu0
          %2671 = vmatprep.mubr.bf16.mxu0 %v2547
          %2672 = vmatmul.mubr.bf16.gmra.mrb[0].mxu0 %v2408
          %v2673 = vpop.f32.mrb[0].mxu0
          %v2674 = vadd.f32 0.0, %v2673
          %v2675 = vpop.f32.mrb[0].mxu0
          %v2676 = vpop.f32.mrb[0].mxu0
          %v2677 = vadd.f32 0.0, %v2676
          %v2678 = vpop.f32.mrb[0].mxu0
          %2679 = vmatprep.mubr.bf16.mxu0 %v2550
          %2680 = vmatmul.mubr.bf16.gmra.mrb[0].mxu0 %v2410
          %v2681 = vpop.f32.mrb[0].mxu0
          %v2682 = vadd.f32 0.0, %v2681
          %v2683 = vpop.f32.mrb[0].mxu0
          %v2684 = vpop.f32.mrb[0].mxu0
          %v2685 = vadd.f32 0.0, %v2684
          %v2686 = vpop.f32.mrb[0].mxu0
          %2687 = vmatprep.mubr.bf16.mxu0 %v2553
          %2688 = vmatmul.mubr.bf16.gmra.mrb[0].mxu0 %v2412
          %v2689 = vpop.f32.mrb[0].mxu0
          %v2690 = vadd.f32 0.0, %v2689
          %v2691 = vpop.f32.mrb[0].mxu0
          %v2692 = vpop.f32.mrb[0].mxu0
          %v2693 = vadd.f32 0.0, %v2692
          %v2694 = vpop.f32.mrb[0].mxu0
          %2695 = vmatprep.mubr.bf16.mxu0 %v2556
          %2696 = vmatmul.mubr.bf16.gmra.mrb[0].mxu0 %v2414
          %v2697 = vpop.f32.mrb[0].mxu0
          %v2698 = vadd.f32 0.0, %v2697
          %v2699 = vpop.f32.mrb[0].mxu0
          %v2700 = vpop.f32.mrb[0].mxu0
          %v2701 = vadd.f32 0.0, %v2700
          %v2702 = vpop.f32.mrb[0].mxu0
          %2703 = vmatprep.mubr.bf16.mxu0 %v2559
          %2704 = vmatmul.mubr.bf16.gmra.mrb[0].mxu0 %v2416
          %v2705 = vpop.f32.mrb[0].mxu0
          %v2706 = vadd.f32 0.0, %v2705
          %v2707 = vpop.f32.mrb[0].mxu0
          %v2708 = vpop.f32.mrb[0].mxu0
          %v2709 = vadd.f32 0.0, %v2708
          %v2710 = vpop.f32.mrb[0].mxu0
          %2711 = vmatprep.mubr.bf16.mxu0 %v2562
          %2712 = vmatmul.mubr.bf16.gmra.mrb[0].mxu0 %v2418
          %v2713 = vpop.f32.mrb[0].mxu0
          %v2714 = vadd.f32 0.0, %v2713
          %v2715 = vpop.f32.mrb[0].mxu0
          %v2716 = vpop.f32.mrb[0].mxu0
          %v2717 = vadd.f32 0.0, %v2716
          %v2718 = vpop.f32.mrb[0].mxu0
          %2719 = vmatprep.mubr.bf16.mxu0 %v2565
          %2720 = vmatmul.mubr.bf16.gmra.mrb[0].mxu0 %v2420
          %v2721 = vpop.f32.mrb[0].mxu0
          %v2722 = vadd.f32 0.0, %v2721
          %v2723 = vpop.f32.mrb[0].mxu0
          %v2724 = vpop.f32.mrb[0].mxu0
          %v2725 = vadd.f32 0.0, %v2724
          %v2726 = vpop.f32.mrb[0].mxu0
          %2727 = vdwg.mxu0
          %v2752 = vunpack.c.l.b16 %v2362
          %v2753 = vunpack.c.l.b16 %v2363
          %v2754 = vunpack.c.l.b16 %v2364
          %v2755 = vunpack.c.l.b16 %v2365
          %v2756 = vunpack.c.l.b16 %v2366
          %v2757 = vunpack.c.l.b16 %v2367
          %v2758 = vunpack.c.l.b16 %v2368
          %v2759 = vunpack.c.l.b16 %v2369
          %v2760 = vunpack.c.l.b16 %v2370
          %v2761 = vunpack.c.l.b16 %v2371
          %v2762 = vunpack.c.l.b16 %v2372
          %v2763 = vunpack.c.l.b16 %v2373
          %v2764 = vunpack.c.l.b16 %v2374
          %v2765 = vunpack.c.l.b16 %v2375
          %v2766 = vunpack.c.l.b16 %v2376
          %v2767 = vunpack.c.l.b16 %v2377
          %v2768 = vunpack.c.l.b16 %v2378
          %v2769 = vunpack.c.l.b16 %v2379
          %v2770 = vunpack.c.l.b16 %v2380
          %v2771 = vunpack.c.l.b16 %v2381
          %v2772 = vunpack.c.l.b16 %v2382
          %v2773 = vunpack.c.l.b16 %v2383
          %v2774 = vunpack.c.l.b16 %v2384
          %v2775 = vunpack.c.l.b16 %v2385
          %v2776 = vpack.c.b16 %v2753, %v2752
          %v2777 = vpack.c.b16 %v2755, %v2754
          %v2778 = vpack.c.b16 %v2757, %v2756
          %v2779 = vpack.c.b16 %v2759, %v2758
          %v2780 = vpack.c.b16 %v2761, %v2760
          %v2781 = vpack.c.b16 %v2763, %v2762
          %v2782 = vpack.c.b16 %v2765, %v2764
          %v2783 = vpack.c.b16 %v2767, %v2766
          %v2784 = vpack.c.b16 %v2769, %v2768
          %v2785 = vpack.c.b16 %v2771, %v2770
          %v2786 = vpack.c.b16 %v2773, %v2772
          %v2787 = vpack.c.b16 %v2775, %v2774
          %v2801 = vsel %vm281, %v2331, 0
          %v2804 = vsel %vm281, %v2333, 0
          %v2807 = vsel %vm281, %v2335, 0
          %v2810 = vsel %vm281, %v2337, 0
          %v2813 = vsel %vm281, %v2339, 0
          %v2816 = vsel %vm281, %v2341, 0
          %v2819 = vsel %vm281, %v2343, 0
          %v2822 = vsel %vm281, %v2345, 0
          %v2825 = vsel %vm281, %v2347, 0
          %v2828 = vsel %vm281, %v2349, 0
          %v2831 = vsel %vm281, %v2351, 0
          %v2834 = vsel %vm281, %v2353, 0
          %v2837 = vsel %vm281, %v2355, 0
          %v2840 = vsel %vm281, %v2357, 0
          %v2843 = vsel %vm281, %v2359, 0
          %v2846 = vsel %vm281, %v2361, 0
          %2848 = vmatprep.subr.bf16.mxu0 0
          %2849 = vmatpush1.bf16.msra.mxu0 %v2776
          %2850 = vmatprep.subr.bf16.mxu0 0
          %2851 = vmatpush1.bf16.msra.mxu0 %v2777
          %2852 = vmatprep.subr.bf16.mxu0 0
          %2853 = vmatpush1.bf16.msra.mxu0 %v2778
          %2854 = vmatprep.subr.bf16.mxu0 0
          %2855 = vmatpush1.bf16.msra.mxu0 %v2779
          %2856 = vmatprep.subr.bf16.mxu0 0
          %2857 = vmatpush1.bf16.msra.mxu0 %v2780
          %2858 = vmatprep.subr.bf16.mxu0 0
          %2859 = vmatpush1.bf16.msra.mxu0 %v2781
          %2860 = vmatprep.subr.bf16.mxu0 0
          %2861 = vmatpush1.bf16.msra.mxu0 %v2782
          %2862 = vmatprep.subr.bf16.mxu0 0
          %2863 = vmatpush1.bf16.msra.mxu0 %v2783
          %2864 = vmatprep.subr.bf16.mxu0 0
          %2865 = vmatpush1.bf16.msra.mxu0 %v2784
          %2866 = vmatprep.subr.bf16.mxu0 0
          %2867 = vmatpush1.bf16.msra.mxu0 %v2785
          %2868 = vmatprep.subr.bf16.mxu0 0
          %2869 = vmatpush1.bf16.msra.mxu0 %v2786
          %2870 = vmatprep.subr.bf16.mxu0 0
          %2871 = vmatpush1.bf16.msra.mxu0 %v2787
          %2872 = vmatprep.subr.bf16.mxu0 0
          %2873 = vmatpush1.bf16.msra.mxu0 0
          %2874 = vmatprep.subr.bf16.mxu0 0
          %2875 = vmatpush1.bf16.msra.mxu0 0
          %2876 = vmatprep.subr.bf16.mxu0 0
          %2877 = vmatpush1.bf16.msra.mxu0 0
          %2878 = vmatprep.subr.bf16.mxu0 0
          %2879 = vmatpush1.bf16.msra.mxu0 0
          %2880 = vmatprep.mubr.bf16.mxu0 %v2801
          %2881 = vmatmul.mubr.bf16.gmra.mrb[0].mxu0 %v2330
          %v2882 = vpop.f32.mrb[0].mxu0
          %v2883 = vadd.f32 %v2602, %v2882
          %v2884 = vpop.f32.mrb[0].mxu0
          %v2885 = vpop.f32.mrb[0].mxu0
          %v2886 = vadd.f32 %v2605, %v2885
          %v2887 = vpop.f32.mrb[0].mxu0
          %2888 = vmatprep.mubr.bf16.mxu0 %v2804
          %2889 = vmatmul.mubr.bf16.gmra.mrb[0].mxu0 %v2332
          %v2890 = vpop.f32.mrb[0].mxu0
          %v2891 = vadd.f32 %v2610, %v2890
          %v2892 = vpop.f32.mrb[0].mxu0
          %v2893 = vpop.f32.mrb[0].mxu0
          %v2894 = vadd.f32 %v2613, %v2893
          %v2895 = vpop.f32.mrb[0].mxu0
          %2896 = vmatprep.mubr.bf16.mxu0 %v2807
          %2897 = vmatmul.mubr.bf16.gmra.mrb[0].mxu0 %v2334
          %v2898 = vpop.f32.mrb[0].mxu0
          %v2899 = vadd.f32 %v2618, %v2898
          %v2900 = vpop.f32.mrb[0].mxu0
          %v2901 = vpop.f32.mrb[0].mxu0
          %v2902 = vadd.f32 %v2621, %v2901
          %v2903 = vpop.f32.mrb[0].mxu0
          %2904 = vmatprep.mubr.bf16.mxu0 %v2810
          %2905 = vmatmul.mubr.bf16.gmra.mrb[0].mxu0 %v2336
          %v2906 = vpop.f32.mrb[0].mxu0
          %v2907 = vadd.f32 %v2626, %v2906
          %v2908 = vpop.f32.mrb[0].mxu0
          %v2909 = vpop.f32.mrb[0].mxu0
          %v2910 = vadd.f32 %v2629, %v2909
          %v2911 = vpop.f32.mrb[0].mxu0
          %2912 = vmatprep.mubr.bf16.mxu0 %v2813
          %2913 = vmatmul.mubr.bf16.gmra.mrb[0].mxu0 %v2338
          %v2914 = vpop.f32.mrb[0].mxu0
          %v2915 = vadd.f32 %v2634, %v2914
          %v2916 = vpop.f32.mrb[0].mxu0
          %v2917 = vpop.f32.mrb[0].mxu0
          %v2918 = vadd.f32 %v2637, %v2917
          %v2919 = vpop.f32.mrb[0].mxu0
          %2920 = vmatprep.mubr.bf16.mxu0 %v2816
          %2921 = vmatmul.mubr.bf16.gmra.mrb[0].mxu0 %v2340
          %v2922 = vpop.f32.mrb[0].mxu0
          %v2923 = vadd.f32 %v2642, %v2922
          %v2924 = vpop.f32.mrb[0].mxu0
          %v2925 = vpop.f32.mrb[0].mxu0
          %v2926 = vadd.f32 %v2645, %v2925
          %v2927 = vpop.f32.mrb[0].mxu0
          %2928 = vmatprep.mubr.bf16.mxu0 %v2819
          %2929 = vmatmul.mubr.bf16.gmra.mrb[0].mxu0 %v2342
          %v2930 = vpop.f32.mrb[0].mxu0
          %v2931 = vadd.f32 %v2650, %v2930
          %v2932 = vpop.f32.mrb[0].mxu0
          %v2933 = vpop.f32.mrb[0].mxu0
          %v2934 = vadd.f32 %v2653, %v2933
          %v2935 = vpop.f32.mrb[0].mxu0
          %2936 = vmatprep.mubr.bf16.mxu0 %v2822
          %2937 = vmatmul.mubr.bf16.gmra.mrb[0].mxu0 %v2344
          %v2938 = vpop.f32.mrb[0].mxu0
          %v2939 = vadd.f32 %v2658, %v2938
          %v2940 = vpop.f32.mrb[0].mxu0
          %v2941 = vpop.f32.mrb[0].mxu0
          %v2942 = vadd.f32 %v2661, %v2941
          %v2943 = vpop.f32.mrb[0].mxu0
          %2944 = vmatprep.mubr.bf16.mxu0 %v2825
          %2945 = vmatmul.mubr.bf16.gmra.mrb[0].mxu0 %v2346
          %v2946 = vpop.f32.mrb[0].mxu0
          %v2947 = vadd.f32 %v2666, %v2946
          %v2948 = vpop.f32.mrb[0].mxu0
          %v2949 = vpop.f32.mrb[0].mxu0
          %v2950 = vadd.f32 %v2669, %v2949
          %v2951 = vpop.f32.mrb[0].mxu0
          %2952 = vmatprep.mubr.bf16.mxu0 %v2828
          %2953 = vmatmul.mubr.bf16.gmra.mrb[0].mxu0 %v2348
          %v2954 = vpop.f32.mrb[0].mxu0
          %v2955 = vadd.f32 %v2674, %v2954
          %v2956 = vpop.f32.mrb[0].mxu0
          %v2957 = vpop.f32.mrb[0].mxu0
          %v2958 = vadd.f32 %v2677, %v2957
          %v2959 = vpop.f32.mrb[0].mxu0
          %2960 = vmatprep.mubr.bf16.mxu0 %v2831
          %2961 = vmatmul.mubr.bf16.gmra.mrb[0].mxu0 %v2350
          %v2962 = vpop.f32.mrb[0].mxu0
          %v2963 = vadd.f32 %v2682, %v2962
          %v2964 = vpop.f32.mrb[0].mxu0
          %v2965 = vpop.f32.mrb[0].mxu0
          %v2966 = vadd.f32 %v2685, %v2965
          %v2967 = vpop.f32.mrb[0].mxu0
          %2968 = vmatprep.mubr.bf16.mxu0 %v2834
          %2969 = vmatmul.mubr.bf16.gmra.mrb[0].mxu0 %v2352
          %v2970 = vpop.f32.mrb[0].mxu0
          %v2971 = vadd.f32 %v2690, %v2970
          %v2972 = vpop.f32.mrb[0].mxu0
          %v2973 = vpop.f32.mrb[0].mxu0
          %v2974 = vadd.f32 %v2693, %v2973
          %v2975 = vpop.f32.mrb[0].mxu0
          %2976 = vmatprep.mubr.bf16.mxu0 %v2837
          %2977 = vmatmul.mubr.bf16.gmra.mrb[0].mxu0 %v2354
          %v2978 = vpop.f32.mrb[0].mxu0
          %v2979 = vadd.f32 %v2698, %v2978
          %v2980 = vpop.f32.mrb[0].mxu0
          %v2981 = vpop.f32.mrb[0].mxu0
          %v2982 = vadd.f32 %v2701, %v2981
          %v2983 = vpop.f32.mrb[0].mxu0
          %2984 = vmatprep.mubr.bf16.mxu0 %v2840
          %2985 = vmatmul.mubr.bf16.gmra.mrb[0].mxu0 %v2356
          %v2986 = vpop.f32.mrb[0].mxu0
          %v2987 = vadd.f32 %v2706, %v2986
          %v2988 = vpop.f32.mrb[0].mxu0
          %v2989 = vpop.f32.mrb[0].mxu0
          %v2990 = vadd.f32 %v2709, %v2989
          %v2991 = vpop.f32.mrb[0].mxu0
          %2992 = vmatprep.mubr.bf16.mxu0 %v2843
          %2993 = vmatmul.mubr.bf16.gmra.mrb[0].mxu0 %v2358
          %v2994 = vpop.f32.mrb[0].mxu0
          %v2995 = vadd.f32 %v2714, %v2994
          %v2996 = vpop.f32.mrb[0].mxu0
          %v2997 = vpop.f32.mrb[0].mxu0
          %v2998 = vadd.f32 %v2717, %v2997
          %v2999 = vpop.f32.mrb[0].mxu0
          %3000 = vmatprep.mubr.bf16.mxu0 %v2846
          %3001 = vmatmul.mubr.bf16.gmra.mrb[0].mxu0 %v2360
          %v3002 = vpop.f32.mrb[0].mxu0
          %v3003 = vadd.f32 %v2722, %v3002
          %v3004 = vpop.f32.mrb[0].mxu0
          %v3005 = vpop.f32.mrb[0].mxu0
          %v3006 = vadd.f32 %v2725, %v3005
          %v3007 = vpop.f32.mrb[0].mxu0
          %3008 = vdwg.mxu0
          %s3009 = sadd.s32 %s2326, 2
          %s3010 = smul.u32 %s3009, 2
          %s3011 = smul.addr %s3010, 8
          %s3012 = scalar_lea.vmem [#allocation3], %s3011
          %v3013 = vld [vmem:[%s3012] sm:$0xff]
          %v3014 = vld [vmem:[%s3012 + $0x8] sm:$0xff]
          %v3015 = vld [vmem:[%s3012 + $0x10] sm:$0xff]
          %v3016 = vld [vmem:[%s3012 + $0x18] sm:$0xff]
          %v3017 = vld [vmem:[%s3012 + $0x20] sm:$0xff]
          %v3018 = vld [vmem:[%s3012 + $0x28] sm:$0xff]
          %v3019 = vld [vmem:[%s3012 + $0x30] sm:$0xff]
          %v3020 = vld [vmem:[%s3012 + $0x38] sm:$0xff]
          %v3021 = vld [vmem:[%s3012 + $0x40] sm:$0xff]
          %v3022 = vld [vmem:[%s3012 + $0x48] sm:$0xff]
          %v3023 = vld [vmem:[%s3012 + $0x50] sm:$0xff]
          %v3024 = vld [vmem:[%s3012 + $0x58] sm:$0xff]
          %v3025 = vld [vmem:[%s3012 + $0x60] sm:$0xff]
          %v3026 = vld [vmem:[%s3012 + $0x68] sm:$0xff]
          %v3027 = vld [vmem:[%s3012 + $0x70] sm:$0xff]
          %v3028 = vld [vmem:[%s3012 + $0x78] sm:$0xff]
          %v3029 = vld [vmem:[%s3012 + $0x80] sm:$0xff]
          %v3030 = vld [vmem:[%s3012 + $0x88] sm:$0xff]
          %v3031 = vld [vmem:[%s3012 + $0x90] sm:$0xff]
          %v3032 = vld [vmem:[%s3012 + $0x98] sm:$0xff]
          %v3033 = vld [vmem:[%s3012 + $0xa0] sm:$0xff]
          %v3034 = vld [vmem:[%s3012 + $0xa8] sm:$0xff]
          %v3035 = vld [vmem:[%s3012 + $0xb0] sm:$0xff]
          %v3036 = vld [vmem:[%s3012 + $0xb8] sm:$0xff]
          %v3037 = vld [vmem:[%s3012 + $0xc0] sm:$0xff]
          %v3038 = vld [vmem:[%s3012 + $0xc8] sm:$0xff]
          %v3039 = vld [vmem:[%s3012 + $0xd0] sm:$0xff]
          %v3040 = vld [vmem:[%s3012 + $0xd8] sm:$0xff]
          %v3041 = vld [vmem:[%s3012 + $0xe0] sm:$0xff]
          %v3042 = vld [vmem:[%s3012 + $0xe8] sm:$0xff]
          %v3043 = vld [vmem:[%s3012 + $0xf0] sm:$0xff]
          %v3044 = vld [vmem:[%s3012 + $0xf8] sm:$0xff]
          %s3045 = scalar_lea.vmem %s2, 192
          %v3046 = vld [vmem:[%s3045] sm:$0xf]
          %v3047 = vld [vmem:[%s3045 + $0x4] sm:$0xf]
          %v3048 = vld [vmem:[%s3045 + $0x8] sm:$0xf]
          %v3049 = vld [vmem:[%s3045 + $0xc] sm:$0xf]
          %v3050 = vld [vmem:[%s3045 + $0x10] sm:$0xf]
          %v3051 = vld [vmem:[%s3045 + $0x14] sm:$0xf]
          %v3052 = vld [vmem:[%s3045 + $0x18] sm:$0xf]
          %v3053 = vld [vmem:[%s3045 + $0x1c] sm:$0xf]
          %v3054 = vld [vmem:[%s3045 + $0x20] sm:$0xf]
          %v3055 = vld [vmem:[%s3045 + $0x24] sm:$0xf]
          %v3056 = vld [vmem:[%s3045 + $0x28] sm:$0xf]
          %v3057 = vld [vmem:[%s3045 + $0x2c] sm:$0xf]
          %v3058 = vld [vmem:[%s3045 + $0x30] sm:$0xf]
          %v3059 = vld [vmem:[%s3045 + $0x34] sm:$0xf]
          %v3060 = vld [vmem:[%s3045 + $0x38] sm:$0xf]
          %v3061 = vld [vmem:[%s3045 + $0x3c] sm:$0xf]
          %v3062 = vld [vmem:[%s3045 + $0x40] sm:$0xf]
          %v3063 = vld [vmem:[%s3045 + $0x44] sm:$0xf]
          %v3064 = vld [vmem:[%s3045 + $0x48] sm:$0xf]
          %v3065 = vld [vmem:[%s3045 + $0x4c] sm:$0xf]
          %v3066 = vld [vmem:[%s3045 + $0x50] sm:$0xf]
          %v3067 = vld [vmem:[%s3045 + $0x54] sm:$0xf]
          %v3068 = vld [vmem:[%s3045 + $0x58] sm:$0xf]
          %v3069 = vld [vmem:[%s3045 + $0x5c] sm:$0xf]
          %v3094 = vunpack.c.l.b16 %v3046
          %v3095 = vunpack.c.l.b16 %v3047
          %v3096 = vunpack.c.l.b16 %v3048
          %v3097 = vunpack.c.l.b16 %v3049
          %v3098 = vunpack.c.l.b16 %v3050
          %v3099 = vunpack.c.l.b16 %v3051
          %v3100 = vunpack.c.l.b16 %v3052
          %v3101 = vunpack.c.l.b16 %v3053
          %v3102 = vunpack.c.l.b16 %v3054
          %v3103 = vunpack.c.l.b16 %v3055
          %v3104 = vunpack.c.l.b16 %v3056
          %v3105 = vunpack.c.l.b16 %v3057
          %v3106 = vunpack.c.l.b16 %v3058
          %v3107 = vunpack.c.l.b16 %v3059
          %v3108 = vunpack.c.l.b16 %v3060
          %v3109 = vunpack.c.l.b16 %v3061
          %v3110 = vunpack.c.l.b16 %v3062
          %v3111 = vunpack.c.l.b16 %v3063
          %v3112 = vunpack.c.l.b16 %v3064
          %v3113 = vunpack.c.l.b16 %v3065
          %v3114 = vunpack.c.l.b16 %v3066
          %v3115 = vunpack.c.l.b16 %v3067
          %v3116 = vunpack.c.l.b16 %v3068
          %v3117 = vunpack.c.l.b16 %v3069
          %v3118 = vpack.c.b16 %v3095, %v3094
          %v3119 = vpack.c.b16 %v3097, %v3096
          %v3120 = vpack.c.b16 %v3099, %v3098
          %v3121 = vpack.c.b16 %v3101, %v3100
          %v3122 = vpack.c.b16 %v3103, %v3102
          %v3123 = vpack.c.b16 %v3105, %v3104
          %v3124 = vpack.c.b16 %v3107, %v3106
          %v3125 = vpack.c.b16 %v3109, %v3108
          %v3126 = vpack.c.b16 %v3111, %v3110
          %v3127 = vpack.c.b16 %v3113, %v3112
          %v3128 = vpack.c.b16 %v3115, %v3114
          %v3129 = vpack.c.b16 %v3117, %v3116
          %v3143 = vsel %vm281, %v3014, 0
          %v3146 = vsel %vm281, %v3016, 0
          %v3149 = vsel %vm281, %v3018, 0
          %v3152 = vsel %vm281, %v3020, 0
          %v3155 = vsel %vm281, %v3022, 0
          %v3158 = vsel %vm281, %v3024, 0
          %v3161 = vsel %vm281, %v3026, 0
          %v3164 = vsel %vm281, %v3028, 0
          %v3167 = vsel %vm281, %v3030, 0
          %v3170 = vsel %vm281, %v3032, 0
          %v3173 = vsel %vm281, %v3034, 0
          %v3176 = vsel %vm281, %v3036, 0
          %v3179 = vsel %vm281, %v3038, 0
          %v3182 = vsel %vm281, %v3040, 0
          %v3185 = vsel %vm281, %v3042, 0
          %v3188 = vsel %vm281, %v3044, 0
          %3190 = vmatprep.subr.bf16.mxu0 0
          %3191 = vmatpush1.bf16.msra.mxu0 %v3118
          %3192 = vmatprep.subr.bf16.mxu0 0
          %3193 = vmatpush1.bf16.msra.mxu0 %v3119
          %3194 = vmatprep.subr.bf16.mxu0 0
          %3195 = vmatpush1.bf16.msra.mxu0 %v3120
          %3196 = vmatprep.subr.bf16.mxu0 0
          %3197 = vmatpush1.bf16.msra.mxu0 %v3121
          %3198 = vmatprep.subr.bf16.mxu0 0
          %3199 = vmatpush1.bf16.msra.mxu0 %v3122
          %3200 = vmatprep.subr.bf16.mxu0 0
          %3201 = vmatpush1.bf16.msra.mxu0 %v3123
          %3202 = vmatprep.subr.bf16.mxu0 0
          %3203 = vmatpush1.bf16.msra.mxu0 %v3124
          %3204 = vmatprep.subr.bf16.mxu0 0
          %3205 = vmatpush1.bf16.msra.mxu0 %v3125
          %3206 = vmatprep.subr.bf16.mxu0 0
          %3207 = vmatpush1.bf16.msra.mxu0 %v3126
          %3208 = vmatprep.subr.bf16.mxu0 0
          %3209 = vmatpush1.bf16.msra.mxu0 %v3127
          %3210 = vmatprep.subr.bf16.mxu0 0
          %3211 = vmatpush1.bf16.msra.mxu0 %v3128
          %3212 = vmatprep.subr.bf16.mxu0 0
          %3213 = vmatpush1.bf16.msra.mxu0 %v3129
          %3214 = vmatprep.subr.bf16.mxu0 0
          %3215 = vmatpush1.bf16.msra.mxu0 0
          %3216 = vmatprep.subr.bf16.mxu0 0
          %3217 = vmatpush1.bf16.msra.mxu0 0
          %3218 = vmatprep.subr.bf16.mxu0 0
          %3219 = vmatpush1.bf16.msra.mxu0 0
          %3220 = vmatprep.subr.bf16.mxu0 0
          %3221 = vmatpush1.bf16.msra.mxu0 0
          %3222 = vmatprep.mubr.bf16.mxu0 %v3143
          %3223 = vmatmul.mubr.bf16.gmra.mrb[0].mxu0 %v3013
          %v3224 = vpop.f32.mrb[0].mxu0
          %v3225 = vadd.f32 0.0, %v3224
          %v3226 = vpop.f32.mrb[0].mxu0
          %v3227 = vpop.f32.mrb[0].mxu0
          %v3228 = vadd.f32 0.0, %v3227
          %v3229 = vpop.f32.mrb[0].mxu0
          %3230 = vmatprep.mubr.bf16.mxu0 %v3146
          %3231 = vmatmul.mubr.bf16.gmra.mrb[0].mxu0 %v3015
          %v3232 = vpop.f32.mrb[0].mxu0
          %v3233 = vadd.f32 0.0, %v3232
          %v3234 = vpop.f32.mrb[0].mxu0
          %v3235 = vpop.f32.mrb[0].mxu0
          %v3236 = vadd.f32 0.0, %v3235
          %v3237 = vpop.f32.mrb[0].mxu0
          %3238 = vmatprep.mubr.bf16.mxu0 %v3149
          %3239 = vmatmul.mubr.bf16.gmra.mrb[0].mxu0 %v3017
          %v3240 = vpop.f32.mrb[0].mxu0
          %v3241 = vadd.f32 0.0, %v3240
          %v3242 = vpop.f32.mrb[0].mxu0
          %v3243 = vpop.f32.mrb[0].mxu0
          %v3244 = vadd.f32 0.0, %v3243
          %v3245 = vpop.f32.mrb[0].mxu0
          %3246 = vmatprep.mubr.bf16.mxu0 %v3152
          %3247 = vmatmul.mubr.bf16.gmra.mrb[0].mxu0 %v3019
          %v3248 = vpop.f32.mrb[0].mxu0
          %v3249 = vadd.f32 0.0, %v3248
          %v3250 = vpop.f32.mrb[0].mxu0
          %v3251 = vpop.f32.mrb[0].mxu0
          %v3252 = vadd.f32 0.0, %v3251
          %v3253 = vpop.f32.mrb[0].mxu0
          %3254 = vmatprep.mubr.bf16.mxu0 %v3155
          %3255 = vmatmul.mubr.bf16.gmra.mrb[0].mxu0 %v3021
          %v3256 = vpop.f32.mrb[0].mxu0
          %v3257 = vadd.f32 0.0, %v3256
          %v3258 = vpop.f32.mrb[0].mxu0
          %v3259 = vpop.f32.mrb[0].mxu0
          %v3260 = vadd.f32 0.0, %v3259
          %v3261 = vpop.f32.mrb[0].mxu0
          %3262 = vmatprep.mubr.bf16.mxu0 %v3158
          %3263 = vmatmul.mubr.bf16.gmra.mrb[0].mxu0 %v3023
          %v3264 = vpop.f32.mrb[0].mxu0
          %v3265 = vadd.f32 0.0, %v3264
          %v3266 = vpop.f32.mrb[0].mxu0
          %v3267 = vpop.f32.mrb[0].mxu0
          %v3268 = vadd.f32 0.0, %v3267
          %v3269 = vpop.f32.mrb[0].mxu0
          %3270 = vmatprep.mubr.bf16.mxu0 %v3161
          %3271 = vmatmul.mubr.bf16.gmra.mrb[0].mxu0 %v3025
          %v3272 = vpop.f32.mrb[0].mxu0
          %v3273 = vadd.f32 0.0, %v3272
          %v3274 = vpop.f32.mrb[0].mxu0
          %v3275 = vpop.f32.mrb[0].mxu0
          %v3276 = vadd.f32 0.0, %v3275
          %v3277 = vpop.f32.mrb[0].mxu0
          %3278 = vmatprep.mubr.bf16.mxu0 %v3164
          %3279 = vmatmul.mubr.bf16.gmra.mrb[0].mxu0 %v3027
          %v3280 = vpop.f32.mrb[0].mxu0
          %v3281 = vadd.f32 0.0, %v3280
          %v3282 = vpop.f32.mrb[0].mxu0
          %v3283 = vpop.f32.mrb[0].mxu0
          %v3284 = vadd.f32 0.0, %v3283
          %v3285 = vpop.f32.mrb[0].mxu0
          %3286 = vmatprep.mubr.bf16.mxu0 %v3167
          %3287 = vmatmul.mubr.bf16.gmra.mrb[0].mxu0 %v3029
          %v3288 = vpop.f32.mrb[0].mxu0
          %v3289 = vadd.f32 0.0, %v3288
          %v3290 = vpop.f32.mrb[0].mxu0
          %v3291 = vpop.f32.mrb[0].mxu0
          %v3292 = vadd.f32 0.0, %v3291
          %v3293 = vpop.f32.mrb[0].mxu0
          %3294 = vmatprep.mubr.bf16.mxu0 %v3170
          %3295 = vmatmul.mubr.bf16.gmra.mrb[0].mxu0 %v3031
          %v3296 = vpop.f32.mrb[0].mxu0
          %v3297 = vadd.f32 0.0, %v3296
          %v3298 = vpop.f32.mrb[0].mxu0
          %v3299 = vpop.f32.mrb[0].mxu0
          %v3300 = vadd.f32 0.0, %v3299
          %v3301 = vpop.f32.mrb[0].mxu0
          %3302 = vmatprep.mubr.bf16.mxu0 %v3173
          %3303 = vmatmul.mubr.bf16.gmra.mrb[0].mxu0 %v3033
          %v3304 = vpop.f32.mrb[0].mxu0
          %v3305 = vadd.f32 0.0, %v3304
          %v3306 = vpop.f32.mrb[0].mxu0
          %v3307 = vpop.f32.mrb[0].mxu0
          %v3308 = vadd.f32 0.0, %v3307
          %v3309 = vpop.f32.mrb[0].mxu0
          %3310 = vmatprep.mubr.bf16.mxu0 %v3176
          %3311 = vmatmul.mubr.bf16.gmra.mrb[0].mxu0 %v3035
          %v3312 = vpop.f32.mrb[0].mxu0
          %v3313 = vadd.f32 0.0, %v3312
          %v3314 = vpop.f32.mrb[0].mxu0
          %v3315 = vpop.f32.mrb[0].mxu0
          %v3316 = vadd.f32 0.0, %v3315
          %v3317 = vpop.f32.mrb[0].mxu0
          %3318 = vmatprep.mubr.bf16.mxu0 %v3179
          %3319 = vmatmul.mubr.bf16.gmra.mrb[0].mxu0 %v3037
          %v3320 = vpop.f32.mrb[0].mxu0
          %v3321 = vadd.f32 0.0, %v3320
          %v3322 = vpop.f32.mrb[0].mxu0
          %v3323 = vpop.f32.mrb[0].mxu0
          %v3324 = vadd.f32 0.0, %v3323
          %v3325 = vpop.f32.mrb[0].mxu0
          %3326 = vmatprep.mubr.bf16.mxu0 %v3182
          %3327 = vmatmul.mubr.bf16.gmra.mrb[0].mxu0 %v3039
          %v3328 = vpop.f32.mrb[0].mxu0
          %v3329 = vadd.f32 0.0, %v3328
          %v3330 = vpop.f32.mrb[0].mxu0
          %v3331 = vpop.f32.mrb[0].mxu0
          %v3332 = vadd.f32 0.0, %v3331
          %v3333 = vpop.f32.mrb[0].mxu0
          %3334 = vmatprep.mubr.bf16.mxu0 %v3185
          %3335 = vmatmul.mubr.bf16.gmra.mrb[0].mxu0 %v3041
          %v3336 = vpop.f32.mrb[0].mxu0
          %v3337 = vadd.f32 0.0, %v3336
          %v3338 = vpop.f32.mrb[0].mxu0
          %v3339 = vpop.f32.mrb[0].mxu0
          %v3340 = vadd.f32 0.0, %v3339
          %v3341 = vpop.f32.mrb[0].mxu0
          %3342 = vmatprep.mubr.bf16.mxu0 %v3188
          %3343 = vmatmul.mubr.bf16.gmra.mrb[0].mxu0 %v3043
          %v3344 = vpop.f32.mrb[0].mxu0
          %v3345 = vadd.f32 0.0, %v3344
          %v3346 = vpop.f32.mrb[0].mxu0
          %v3347 = vpop.f32.mrb[0].mxu0
          %v3348 = vadd.f32 0.0, %v3347
          %v3349 = vpop.f32.mrb[0].mxu0
          %3350 = vdwg.mxu0
          %v3351 = vadd.f32 %v2883, %v3225
          %v3352 = vadd.f32 %v2886, %v3228
          %v3353 = vadd.f32 %v2891, %v3233
          %v3354 = vadd.f32 %v2894, %v3236
          %v3355 = vadd.f32 %v2899, %v3241
          %v3356 = vadd.f32 %v2902, %v3244
          %v3357 = vadd.f32 %v2907, %v3249
          %v3358 = vadd.f32 %v2910, %v3252
          %v3359 = vadd.f32 %v2915, %v3257
          %v3360 = vadd.f32 %v2918, %v3260
          %v3361 = vadd.f32 %v2923, %v3265
          %v3362 = vadd.f32 %v2926, %v3268
          %v3363 = vadd.f32 %v2931, %v3273
          %v3364 = vadd.f32 %v2934, %v3276
          %v3365 = vadd.f32 %v2939, %v3281
          %v3366 = vadd.f32 %v2942, %v3284
          %v3367 = vadd.f32 %v2947, %v3289
          %v3368 = vadd.f32 %v2950, %v3292
          %v3369 = vadd.f32 %v2955, %v3297
          %v3370 = vadd.f32 %v2958, %v3300
          %v3371 = vadd.f32 %v2963, %v3305
          %v3372 = vadd.f32 %v2966, %v3308
          %v3373 = vadd.f32 %v2971, %v3313
          %v3374 = vadd.f32 %v2974, %v3316
          %v3375 = vadd.f32 %v2979, %v3321
          %v3376 = vadd.f32 %v2982, %v3324
          %v3377 = vadd.f32 %v2987, %v3329
          %v3378 = vadd.f32 %v2990, %v3332
          %v3379 = vadd.f32 %v2995, %v3337
          %v3380 = vadd.f32 %v2998, %v3340
          %v3381 = vadd.f32 %v3003, %v3345
          %v3382 = vadd.f32 %v3006, %v3348
          %s3383 = smul.addr %s2327, 4
          %s3384 = scalar_lea.vmem %s273, %s3383
          %v3385 = vld [vmem:[%s3384] sm:$0xf]
          %v3386 = vld [vmem:[%s3384 + $0x4] sm:$0xf]
          %v3387 = vld [vmem:[%s3384 + $0x8] sm:$0xf]
          %v3388 = vld [vmem:[%s3384 + $0xc] sm:$0xf]
          %v3389 = vld [vmem:[%s3384 + $0x10] sm:$0xf]
          %v3390 = vld [vmem:[%s3384 + $0x14] sm:$0xf]
          %v3391 = vld [vmem:[%s3384 + $0x18] sm:$0xf]
          %v3392 = vld [vmem:[%s3384 + $0x1c] sm:$0xf]
          %v3393 = vld [vmem:[%s3384 + $0x20] sm:$0xf]
          %v3394 = vld [vmem:[%s3384 + $0x24] sm:$0xf]
          %v3395 = vld [vmem:[%s3384 + $0x28] sm:$0xf]
          %v3396 = vld [vmem:[%s3384 + $0x2c] sm:$0xf]
          %v3397 = vld [vmem:[%s3384 + $0x30] sm:$0xf]
          %v3398 = vld [vmem:[%s3384 + $0x34] sm:$0xf]
          %v3399 = vld [vmem:[%s3384 + $0x38] sm:$0xf]
          %v3400 = vld [vmem:[%s3384 + $0x3c] sm:$0xf]
          %v3401 = vld [vmem:[%s3384 + $0x40] sm:$0xf]
          %v3402 = vld [vmem:[%s3384 + $0x44] sm:$0xf]
          %v3403 = vld [vmem:[%s3384 + $0x48] sm:$0xf]
          %v3404 = vld [vmem:[%s3384 + $0x4c] sm:$0xf]
          %v3405 = vld [vmem:[%s3384 + $0x50] sm:$0xf]
          %v3406 = vld [vmem:[%s3384 + $0x54] sm:$0xf]
          %v3407 = vld [vmem:[%s3384 + $0x58] sm:$0xf]
          %v3408 = vld [vmem:[%s3384 + $0x5c] sm:$0xf]
          %v3409 = vld [vmem:[%s3384 + $0x60] sm:$0xf]
          %v3410 = vld [vmem:[%s3384 + $0x64] sm:$0xf]
          %v3411 = vld [vmem:[%s3384 + $0x68] sm:$0xf]
          %v3412 = vld [vmem:[%s3384 + $0x6c] sm:$0xf]
          %v3413 = vld [vmem:[%s3384 + $0x70] sm:$0xf]
          %v3414 = vld [vmem:[%s3384 + $0x74] sm:$0xf]
          %v3415 = vld [vmem:[%s3384 + $0x78] sm:$0xf]
          %v3416 = vld [vmem:[%s3384 + $0x7c] sm:$0xf]
          %v3417 = vunpack.c.l.bf16 %v3385
          %v3418 = vunpack.c.l.bf16 %v3386
          %v3419 = vunpack.c.l.bf16 %v3387
          %v3420 = vunpack.c.l.bf16 %v3388
          %v3421 = vunpack.c.l.bf16 %v3389
          %v3422 = vunpack.c.l.bf16 %v3390
          %v3423 = vunpack.c.l.bf16 %v3391
          %v3424 = vunpack.c.l.bf16 %v3392
          %v3425 = vunpack.c.l.bf16 %v3393
          %v3426 = vunpack.c.l.bf16 %v3394
          %v3427 = vunpack.c.l.bf16 %v3395
          %v3428 = vunpack.c.l.bf16 %v3396
          %v3429 = vunpack.c.l.bf16 %v3397
          %v3430 = vunpack.c.l.bf16 %v3398
          %v3431 = vunpack.c.l.bf16 %v3399
          %v3432 = vunpack.c.l.bf16 %v3400
          %v3433 = vunpack.c.l.bf16 %v3401
          %v3434 = vunpack.c.l.bf16 %v3402
          %v3435 = vunpack.c.l.bf16 %v3403
          %v3436 = vunpack.c.l.bf16 %v3404
          %v3437 = vunpack.c.l.bf16 %v3405
          %v3438 = vunpack.c.l.bf16 %v3406
          %v3439 = vunpack.c.l.bf16 %v3407
          %v3440 = vunpack.c.l.bf16 %v3408
          %v3441 = vunpack.c.l.bf16 %v3409
          %v3442 = vunpack.c.l.bf16 %v3410
          %v3443 = vunpack.c.l.bf16 %v3411
          %v3444 = vunpack.c.l.bf16 %v3412
          %v3445 = vunpack.c.l.bf16 %v3413
          %v3446 = vunpack.c.l.bf16 %v3414
          %v3447 = vunpack.c.l.bf16 %v3415
          %v3448 = vunpack.c.l.bf16 %v3416
          %v3450 = vlaneseq
          %v3451 = vshrl.u32 %v3450, 7
          %v3452 = vsub.s32 0, %v3451
          %v3453 = vrot.slane %v293, %v3452
          %v3455 = vmul.f32 %v3351, %v3453
          %v3456 = vmul.f32 %v3352, %v3453
          %v3457 = vmul.f32 %v3353, %v3453
          %v3458 = vmul.f32 %v3354, %v3453
          %v3459 = vmul.f32 %v3355, %v3453
          %v3460 = vmul.f32 %v3356, %v3453
          %v3461 = vmul.f32 %v3357, %v3453
          %v3462 = vmul.f32 %v3358, %v3453
          %v3463 = vmul.f32 %v3359, %v3453
          %v3464 = vmul.f32 %v3360, %v3453
          %v3465 = vmul.f32 %v3361, %v3453
          %v3466 = vmul.f32 %v3362, %v3453
          %v3467 = vmul.f32 %v3363, %v3453
          %v3468 = vmul.f32 %v3364, %v3453
          %v3469 = vmul.f32 %v3365, %v3453
          %v3470 = vmul.f32 %v3366, %v3453
          %v3471 = vmul.f32 %v3367, %v3453
          %v3472 = vmul.f32 %v3368, %v3453
          %v3473 = vmul.f32 %v3369, %v3453
          %v3474 = vmul.f32 %v3370, %v3453
          %v3475 = vmul.f32 %v3371, %v3453
          %v3476 = vmul.f32 %v3372, %v3453
          %v3477 = vmul.f32 %v3373, %v3453
          %v3478 = vmul.f32 %v3374, %v3453
          %v3479 = vmul.f32 %v3375, %v3453
          %v3480 = vmul.f32 %v3376, %v3453
          %v3481 = vmul.f32 %v3377, %v3453
          %v3482 = vmul.f32 %v3378, %v3453
          %v3483 = vmul.f32 %v3379, %v3453
          %v3484 = vmul.f32 %v3380, %v3453
          %v3485 = vmul.f32 %v3381, %v3453
          %v3486 = vmul.f32 %v3382, %v3453
          %v3488 = vlaneseq
          %v3489 = vshrl.u32 %v3488, 7
          %v3490 = vsub.s32 0, %v3489
          %v3491 = vrot.slane %v294, %v3490
          %v3493 = vadd.f32 %v3455, %v3491
          %v3494 = vadd.f32 %v3456, %v3491
          %v3495 = vadd.f32 %v3457, %v3491
          %v3496 = vadd.f32 %v3458, %v3491
          %v3497 = vadd.f32 %v3459, %v3491
          %v3498 = vadd.f32 %v3460, %v3491
          %v3499 = vadd.f32 %v3461, %v3491
          %v3500 = vadd.f32 %v3462, %v3491
          %v3501 = vadd.f32 %v3463, %v3491
          %v3502 = vadd.f32 %v3464, %v3491
          %v3503 = vadd.f32 %v3465, %v3491
          %v3504 = vadd.f32 %v3466, %v3491
          %v3505 = vadd.f32 %v3467, %v3491
          %v3506 = vadd.f32 %v3468, %v3491
          %v3507 = vadd.f32 %v3469, %v3491
          %v3508 = vadd.f32 %v3470, %v3491
          %v3509 = vadd.f32 %v3471, %v3491
          %v3510 = vadd.f32 %v3472, %v3491
          %v3511 = vadd.f32 %v3473, %v3491
          %v3512 = vadd.f32 %v3474, %v3491
          %v3513 = vadd.f32 %v3475, %v3491
          %v3514 = vadd.f32 %v3476, %v3491
          %v3515 = vadd.f32 %v3477, %v3491
          %v3516 = vadd.f32 %v3478, %v3491
          %v3517 = vadd.f32 %v3479, %v3491
          %v3518 = vadd.f32 %v3480, %v3491
          %v3519 = vadd.f32 %v3481, %v3491
          %v3520 = vadd.f32 %v3482, %v3491
          %v3521 = vadd.f32 %v3483, %v3491
          %v3522 = vadd.f32 %v3484, %v3491
          %v3523 = vadd.f32 %v3485, %v3491
          %v3524 = vadd.f32 %v3486, %v3491
          %v3525 = vadd.f32 %v3493, %v3417
          %v3526 = vadd.f32 %v3494, %v3418
          %v3527 = vadd.f32 %v3495, %v3419
          %v3528 = vadd.f32 %v3496, %v3420
          %v3529 = vadd.f32 %v3497, %v3421
          %v3530 = vadd.f32 %v3498, %v3422
          %v3531 = vadd.f32 %v3499, %v3423
          %v3532 = vadd.f32 %v3500, %v3424
          %v3533 = vadd.f32 %v3501, %v3425
          %v3534 = vadd.f32 %v3502, %v3426
          %v3535 = vadd.f32 %v3503, %v3427
          %v3536 = vadd.f32 %v3504, %v3428
          %v3537 = vadd.f32 %v3505, %v3429
          %v3538 = vadd.f32 %v3506, %v3430
          %v3539 = vadd.f32 %v3507, %v3431
          %v3540 = vadd.f32 %v3508, %v3432
          %v3541 = vadd.f32 %v3509, %v3433
          %v3542 = vadd.f32 %v3510, %v3434
          %v3543 = vadd.f32 %v3511, %v3435
          %v3544 = vadd.f32 %v3512, %v3436
          %v3545 = vadd.f32 %v3513, %v3437
          %v3546 = vadd.f32 %v3514, %v3438
          %v3547 = vadd.f32 %v3515, %v3439
          %v3548 = vadd.f32 %v3516, %v3440
          %v3549 = vadd.f32 %v3517, %v3441
          %v3550 = vadd.f32 %v3518, %v3442
          %v3551 = vadd.f32 %v3519, %v3443
          %v3552 = vadd.f32 %v3520, %v3444
          %v3553 = vadd.f32 %v3521, %v3445
          %v3554 = vadd.f32 %v3522, %v3446
          %v3555 = vadd.f32 %v3523, %v3447
          %v3556 = vadd.f32 %v3524, %v3448
          %v3557 = vmax.f32 %v3525, 0.0
          %v3558 = vmax.f32 %v3526, 0.0
          %v3559 = vmax.f32 %v3527, 0.0
          %v3560 = vmax.f32 %v3528, 0.0
          %v3561 = vmax.f32 %v3529, 0.0
          %v3562 = vmax.f32 %v3530, 0.0
          %v3563 = vmax.f32 %v3531, 0.0
          %v3564 = vmax.f32 %v3532, 0.0
          %v3565 = vmax.f32 %v3533, 0.0
          %v3566 = vmax.f32 %v3534, 0.0
          %v3567 = vmax.f32 %v3535, 0.0
          %v3568 = vmax.f32 %v3536, 0.0
          %v3569 = vmax.f32 %v3537, 0.0
          %v3570 = vmax.f32 %v3538, 0.0
          %v3571 = vmax.f32 %v3539, 0.0
          %v3572 = vmax.f32 %v3540, 0.0
          %v3573 = vmax.f32 %v3541, 0.0
          %v3574 = vmax.f32 %v3542, 0.0
          %v3575 = vmax.f32 %v3543, 0.0
          %v3576 = vmax.f32 %v3544, 0.0
          %v3577 = vmax.f32 %v3545, 0.0
          %v3578 = vmax.f32 %v3546, 0.0
          %v3579 = vmax.f32 %v3547, 0.0
          %v3580 = vmax.f32 %v3548, 0.0
          %v3581 = vmax.f32 %v3549, 0.0
          %v3582 = vmax.f32 %v3550, 0.0
          %v3583 = vmax.f32 %v3551, 0.0
          %v3584 = vmax.f32 %v3552, 0.0
          %v3585 = vmax.f32 %v3553, 0.0
          %v3586 = vmax.f32 %v3554, 0.0
          %v3587 = vmax.f32 %v3555, 0.0
          %v3588 = vmax.f32 %v3556, 0.0
          %v3589 = vpack.c.bf16 %v3558, %v3557
          %v3590 = vpack.c.bf16 %v3560, %v3559
          %v3591 = vpack.c.bf16 %v3562, %v3561
          %v3592 = vpack.c.bf16 %v3564, %v3563
          %v3593 = vpack.c.bf16 %v3566, %v3565
          %v3594 = vpack.c.bf16 %v3568, %v3567
          %v3595 = vpack.c.bf16 %v3570, %v3569
          %v3596 = vpack.c.bf16 %v3572, %v3571
          %v3597 = vpack.c.bf16 %v3574, %v3573
          %v3598 = vpack.c.bf16 %v3576, %v3575
          %v3599 = vpack.c.bf16 %v3578, %v3577
          %v3600 = vpack.c.bf16 %v3580, %v3579
          %v3601 = vpack.c.bf16 %v3582, %v3581
          %v3602 = vpack.c.bf16 %v3584, %v3583
          %v3603 = vpack.c.bf16 %v3586, %v3585
          %v3604 = vpack.c.bf16 %v3588, %v3587
          %v3621 = vunpack.c.l.b16 %v3589
          %v3622 = vunpack.c.h.b16 %v3589
          %v3623 = vunpack.c.l.b16 %v3590
          %v3624 = vunpack.c.h.b16 %v3590
          %v3625 = vunpack.c.l.b16 %v3591
          %v3626 = vunpack.c.h.b16 %v3591
          %v3627 = vunpack.c.l.b16 %v3592
          %v3628 = vunpack.c.h.b16 %v3592
          %v3629 = vunpack.c.l.b16 %v3593
          %v3630 = vunpack.c.h.b16 %v3593
          %v3631 = vunpack.c.l.b16 %v3594
          %v3632 = vunpack.c.h.b16 %v3594
          %v3633 = vunpack.c.l.b16 %v3595
          %v3634 = vunpack.c.h.b16 %v3595
          %v3635 = vunpack.c.l.b16 %v3596
          %v3636 = vunpack.c.h.b16 %v3596
          %v3637 = vunpack.c.l.b16 %v3597
          %v3638 = vunpack.c.h.b16 %v3597
          %v3639 = vunpack.c.l.b16 %v3598
          %v3640 = vunpack.c.h.b16 %v3598
          %v3641 = vunpack.c.l.b16 %v3599
          %v3642 = vunpack.c.h.b16 %v3599
          %v3643 = vunpack.c.l.b16 %v3600
          %v3644 = vunpack.c.h.b16 %v3600
          %v3645 = vunpack.c.l.b16 %v3601
          %v3646 = vunpack.c.h.b16 %v3601
          %v3647 = vunpack.c.l.b16 %v3602
          %v3648 = vunpack.c.h.b16 %v3602
          %v3649 = vunpack.c.l.b16 %v3603
          %v3650 = vunpack.c.h.b16 %v3603
          %v3651 = vunpack.c.l.b16 %v3604
          %v3652 = vunpack.c.h.b16 %v3604
          %v3653 = vpack.c.b16 %v3621, %v3621
          %v3654 = vpack.c.b16 %v3622, %v3622
          %v3655 = vpack.c.b16 %v3623, %v3623
          %v3656 = vpack.c.b16 %v3624, %v3624
          %v3657 = vpack.c.b16 %v3625, %v3625
          %v3658 = vpack.c.b16 %v3626, %v3626
          %v3659 = vpack.c.b16 %v3627, %v3627
          %v3660 = vpack.c.b16 %v3628, %v3628
          %v3661 = vpack.c.b16 %v3629, %v3629
          %v3662 = vpack.c.b16 %v3630, %v3630
          %v3663 = vpack.c.b16 %v3631, %v3631
          %v3664 = vpack.c.b16 %v3632, %v3632
          %v3665 = vpack.c.b16 %v3633, %v3633
          %v3666 = vpack.c.b16 %v3634, %v3634
          %v3667 = vpack.c.b16 %v3635, %v3635
          %v3668 = vpack.c.b16 %v3636, %v3636
          %v3669 = vpack.c.b16 %v3637, %v3637
          %v3670 = vpack.c.b16 %v3638, %v3638
          %v3671 = vpack.c.b16 %v3639, %v3639
          %v3672 = vpack.c.b16 %v3640, %v3640
          %v3673 = vpack.c.b16 %v3641, %v3641
          %v3674 = vpack.c.b16 %v3642, %v3642
          %v3675 = vpack.c.b16 %v3643, %v3643
          %v3676 = vpack.c.b16 %v3644, %v3644
          %v3677 = vpack.c.b16 %v3645, %v3645
          %v3678 = vpack.c.b16 %v3646, %v3646
          %v3679 = vpack.c.b16 %v3647, %v3647
          %v3680 = vpack.c.b16 %v3648, %v3648
          %v3681 = vpack.c.b16 %v3649, %v3649
          %v3682 = vpack.c.b16 %v3650, %v3650
          %v3683 = vpack.c.b16 %v3651, %v3651
          %v3684 = vpack.c.b16 %v3652, %v3652
          %s3717 = smul.addr %s2327, 4
          %s3718 = scalar_lea.vmem %s278, %s3717
          %vm3719 = vcmask 519168
          %3720 = vst.msk [vmem:[%s3718] sm:$0xf] %vm3719, %v3653
          %3721 = vst.msk [vmem:[%s3718 + $0x4] sm:$0xf] %vm3719, %v3654
          %3722 = vst.msk [vmem:[%s3718 + $0x8] sm:$0xf] %vm3719, %v3655
          %3723 = vst.msk [vmem:[%s3718 + $0xc] sm:$0xf] %vm3719, %v3656
          %3724 = vst.msk [vmem:[%s3718 + $0x10] sm:$0xf] %vm3719, %v3657
          %3725 = vst.msk [vmem:[%s3718 + $0x14] sm:$0xf] %vm3719, %v3658
          %3726 = vst.msk [vmem:[%s3718 + $0x18] sm:$0xf] %vm3719, %v3659
          %3727 = vst.msk [vmem:[%s3718 + $0x1c] sm:$0xf] %vm3719, %v3660
          %3728 = vst.msk [vmem:[%s3718 + $0x20] sm:$0xf] %vm3719, %v3661
          %3729 = vst.msk [vmem:[%s3718 + $0x24] sm:$0xf] %vm3719, %v3662
          %3730 = vst.msk [vmem:[%s3718 + $0x28] sm:$0xf] %vm3719, %v3663
          %3731 = vst.msk [vmem:[%s3718 + $0x2c] sm:$0xf] %vm3719, %v3664
          %3732 = vst.msk [vmem:[%s3718 + $0x30] sm:$0xf] %vm3719, %v3665
          %3733 = vst.msk [vmem:[%s3718 + $0x34] sm:$0xf] %vm3719, %v3666
          %3734 = vst.msk [vmem:[%s3718 + $0x38] sm:$0xf] %vm3719, %v3667
          %3735 = vst.msk [vmem:[%s3718 + $0x3c] sm:$0xf] %vm3719, %v3668
          %3736 = vst.msk [vmem:[%s3718 + $0x40] sm:$0xf] %vm3719, %v3669
          %3737 = vst.msk [vmem:[%s3718 + $0x44] sm:$0xf] %vm3719, %v3670
          %3738 = vst.msk [vmem:[%s3718 + $0x48] sm:$0xf] %vm3719, %v3671
          %3739 = vst.msk [vmem:[%s3718 + $0x4c] sm:$0xf] %vm3719, %v3672
          %3740 = vst.msk [vmem:[%s3718 + $0x50] sm:$0xf] %vm3719, %v3673
          %3741 = vst.msk [vmem:[%s3718 + $0x54] sm:$0xf] %vm3719, %v3674
          %3742 = vst.msk [vmem:[%s3718 + $0x58] sm:$0xf] %vm3719, %v3675
          %3743 = vst.msk [vmem:[%s3718 + $0x5c] sm:$0xf] %vm3719, %v3676
          %3744 = vst.msk [vmem:[%s3718 + $0x60] sm:$0xf] %vm3719, %v3677
          %3745 = vst.msk [vmem:[%s3718 + $0x64] sm:$0xf] %vm3719, %v3678
          %3746 = vst.msk [vmem:[%s3718 + $0x68] sm:$0xf] %vm3719, %v3679
          %3747 = vst.msk [vmem:[%s3718 + $0x6c] sm:$0xf] %vm3719, %v3680
          %3748 = vst.msk [vmem:[%s3718 + $0x70] sm:$0xf] %vm3719, %v3681
          %3749 = vst.msk [vmem:[%s3718 + $0x74] sm:$0xf] %vm3719, %v3682
          %3750 = vst.msk [vmem:[%s3718 + $0x78] sm:$0xf] %vm3719, %v3683
          %3751 = vst.msk [vmem:[%s3718 + $0x7c] sm:$0xf] %vm3719, %v3684
        $region67: #{basic_block_pallas.1} parent=52 // pred_fallthru
          _
      $region53: #{basic_block_pallas.1} parent=47 // loop_footer
        %s300 = sadd.s32 1, %s296
      $region54: #{basic_block_pallas.1} parent=47 // loop_footer_branch
        %295 = sbr.rel target = $region50
      $region55: #{basic_block_pallas.1} parent=47 // loop_exit
        _
      %p3752 = scmp.lt.s32.totalorder %s18, 1
      %s3753 = scalar_select %p3752, %s18, 1
      %s3754 = smul.addr %s3753, 32
      %s3755 = smul.addr %s3754, 4
      %s3756 = scalar_lea.vmem %s7, %s3755
      // Predicated region
      $region68: #{basic_block_pallas.1} parent=47 // pred_check
        %p3757 = pneg %p188
      $region69: #{basic_block_pallas.1} parent=47 // pred_check_branch
        %3759 = sbr.rel (%p3757) target = $region71
      $region70: #{basic_block_pallas.1} parent=47 // pred_region
        _
      $region71: #{basic_block_pallas.1} parent=47 // pred_fallthru
        _
    $region48: #{basic_block_pallas.1} parent=5 // pred_fallthru
      _
    %p3760 = scmp.le.s32.totalorder 2, %s13
    // Predicated region
    $region72: #{basic_block_pallas.1} parent=5 // pred_check
      %p3761 = pneg %p3760
    $region73: #{basic_block_pallas.1} parent=5 // pred_check_branch
      %3763 = sbr.rel (%p3761) target = $region75
    $region74: #{basic_block_pallas.1} parent=5 // pred_region
      %s3764 = ssub.s32 %s13, 2
      // Predicated region
      $region76: #{basic_block_pallas.1} parent=74 // pred_check
        %p3765 = pneg %p194
      $region77: #{basic_block_pallas.1} parent=74 // pred_check_branch
        %3767 = sbr.rel (%p3765) target = $region79
      $region78: #{basic_block_pallas.1} parent=74 // pred_region
        %p3768 = scmp.lt.s32.totalorder %s19, 1
        %s3769 = scalar_select %p3768, %s19, 1
        %s3770 = smul.addr %s3769, 32
        %s3771 = smul.addr %s3770, 4
        %s3772 = scalar_lea.vmem %s7, %s3771
      $region79: #{basic_block_pallas.1} parent=74 // pred_fallthru
        _
    $region75: #{basic_block_pallas.1} parent=5 // pred_fallthru
      _
  $region6: #{basic_block_pallas.1} parent=0 // loop_footer
    %s17 = sadd.s32 1, %s13
  $region7: #{basic_block_pallas.1} parent=0 // loop_footer_branch
    %12 = sbr.rel target = $region3
  $region8: #{basic_block_pallas.1} parent=0 // loop_exit
    _

</llo_original>
